<compile_context>
chip_gen: v7x
topology: tpu7x:2x2x1
jax: 0.10.0
libtpu: 0.0.40
codegen_flags: <defaults>
</compile_context>

<pallas_src>
import functools
import math

import jax
import jax.numpy as jnp
from jax import lax
from jax.experimental import pallas as pl
from jax.experimental.pallas import tpu as pltpu


def _gelu_tanh(x):
    # tanh-form GELU (EUP tanh instead of a long VALU erf polynomial).
    # TODO(synk): torch nn.GELU() is exact-erf; tanh form deviates by <~1e-3.
    c = math.sqrt(2.0 / math.pi)
    return 0.5 * x * (1.0 + jnp.tanh(c * (x + 0.044715 * (x * x * x))))


# ------------------------------- Pallas kernel --------------------------------

def _ctmsa_kernel(x_ref, pos_ref, wa_ref, wb_ref, bproj_ref, ln_g_ref,
                  ln_b_ref, w1_ref, b1_ref, w2_ref, b2_ref, o_ref,
                  *, depth, heads, window, seq_len):
    mb, c = x_ref.shape                 # block rows (= k_seq * seq_len), dim
    wb = mb // window                   # windows in this block
    nseq = mb // seq_len                # whole sequences in this block
    f32 = jnp.float32
    bf16 = jnp.bfloat16

    # Positional embedding: pos is (seq_len, C); block holds whole sequences,
    # so it broadcasts along the leading (sequence) axis. Hoisted out of loop.
    pos_blk = jnp.broadcast_to(pos_ref[...][None, :, :],
                               (nseq, seq_len, c)).reshape(mb, c)
    x = x_ref[...] + pos_blk                                     # f32 (mb, C)

    qi = lax.broadcasted_iota(jnp.int32, (window, window), 0)
    ki = lax.broadcasted_iota(jnp.int32, (window, window), 1)
    causal = (qi >= ki)[None, :, :]                              # (1, W, W)
    neg = f32(-1e30)                                             # finite: no inf-inf

    def layer(d, x):
        base = d * heads
        bproj_d = bproj_ref[d]          # (1, C) f32
        ln_g_d = ln_g_ref[d]
        ln_b_d = ln_b_ref[d]
        w1_d = w1_ref[d]                # (C, M) bf16
        b1_d = b1_ref[d]                # (1, M) f32
        w2_d = w2_ref[d]                # (M, C) bf16
        b2_d = b2_ref[d]                # (1, C) f32

        # ---------------- TemporalAttention (causal, per window) -------------
        xb = x.astype(bf16)                                      # (mb, C)
        x3b = xb.reshape(wb, window, c)                          # local 3D view
        attn = jnp.zeros((wb, window, c), f32)
        for h in range(heads):                                   # small, static
            a_dh = wa_ref[base + h]                              # (C, C) bf16
            b_dh = wb_ref[base + h]                              # (C, C) bf16
            # logits: (x @ A_h) @ x^T per window == scale*(x Wq_h)(x Wk_h)^T
            th = jnp.dot(xb, a_dh, preferred_element_type=f32)   # (mb, C)
            t3 = th.reshape(wb, window, c).astype(bf16)
            s = jnp.einsum('bqc,bkc->bqk', t3, x3b,
                           preferred_element_type=f32)           # (wb, W, W)
            s = jnp.where(causal, s, neg)
            s = s - jnp.max(s, axis=-1, keepdims=True)
            e = jnp.exp(s)
            p = e * pl.reciprocal(jnp.sum(e, axis=-1, keepdims=True),
                                  approx=True)
            # context fused with output projection: softmax @ (x @ Wv_h Wproj_h)
            uh = jnp.dot(xb, b_dh, preferred_element_type=f32)   # (mb, C)
            u3 = uh.reshape(wb, window, c).astype(bf16)
            attn = attn + jnp.einsum('bqk,bkc->bqc', p.astype(bf16), u3,
                                     preferred_element_type=f32)
        x = x + attn.reshape(mb, c) + bproj_d                    # residual 1

        # -------------------- PreNorm(LayerNorm) + FeedForward ---------------
        mean = jnp.mean(x, axis=-1, keepdims=True)
        var = jnp.mean(jnp.square(x - mean), axis=-1, keepdims=True)
        xn = (x - mean) * lax.rsqrt(var + 1e-5)
        xn = xn * ln_g_d + ln_b_d
        h1 = jnp.dot(xn.astype(bf16), w1_d,
                     preferred_element_type=f32) + b1_d
        h1 = _gelu_tanh(h1)
        ff = jnp.dot(h1.astype(bf16), w2_d,
                     preferred_element_type=f32) + b2_d
        return x + ff                                            # residual 2

    if depth <= 4:
        for d in range(depth):          # small depth: static unroll is cheapest
            x = layer(d, x)
    else:
        # deep configs: one compact loop body bounds vreg live ranges / compile
        x = lax.fori_loop(0, depth, layer, x)

    o_ref[...] = x.astype(o_ref.dtype)


# ------------------------------ JAX glue / wrapper -----------------------------

def _fold_layer_weights(p, c, heads, scale):
    d_h = c // heads
    wqkv = p['wqkv']                         # (C, 3C): [q | k | v] column blocks
    wproj = p['wproj']                       # (C, C)
    wq, wk, wv = wqkv[:, :c], wqkv[:, c:2 * c], wqkv[:, 2 * c:]
    a_list, b_list = [], []
    for h in range(heads):
        sl = slice(h * d_h, (h + 1) * d_h)
        a_list.append(scale * (wq[:, sl] @ wk[:, sl].T))         # (C, C)
        b_list.append(wv[:, sl] @ wproj[sl, :])                  # (C, C)
    return jnp.stack(a_list), jnp.stack(b_list)


def _choose_seqs_per_block(bn, t, c, mlp_dim, vmem_cap):
    """Whole sequences per block: ~4 MiB raw activations, grid >= 4, 8-row align."""
    seq_bytes = t * c * 4                                  # one f32 sequence
    # rough live-set multiple: x f32 + bf16 copy + attn/proj temps + h1 + 2x2 I/O
    live_mult = 6.0 + mlp_dim / max(c, 1) + 4.0
    budget = int(0.45 * vmem_cap)
    cap = max(1, min((4 << 20) // seq_bytes,
                     int(budget / (seq_bytes * live_mult))))
    divs = [k for k in range(1, bn + 1) if bn % k == 0]
    ok = [k for k in divs if k <= cap and (k * t) % 8 == 0]
    for min_grid in (4, 2, 1):        # >=4 keeps both v7x TCs software-pipelined
        pick = [k for k in ok if bn // k >= min_grid]
        if pick:
            return max(pick)
    fallback = [k for k in divs if (k * t) % 8 == 0]
    return min(fallback) if fallback else bn


def ct_msa_forward(x, params, *, heads, window):
    b, c, n, t = x.shape
    assert t % window == 0, "num_time must be a multiple of window_size"
    assert c % heads == 0
    pos = params['pos']
    assert pos.shape == (1, t, c), "pos embedding must match (1, t, c)"
    depth = len(params['layers'])
    scale = (c // heads) ** (-0.5)

    bn = b * n
    nt = bn * t

    # (b, c, n, t) -> (b*n*t, c); sequences are consecutive t-row groups,
    # causal windows consecutive `window`-row groups inside them.
    x2d = jnp.transpose(x, (0, 2, 3, 1)).reshape(nt, c)

    try:
        vmem_cap = pltpu.get_tpu_info().vmem_capacity_bytes
    except Exception:
        vmem_cap = 64 << 20                        # conservative (v7x per-TC)
    mlp_dim = params['layers'][0]['w1'].shape[-1]
    k_seq = _choose_seqs_per_block(bn, t, c, mlp_dim, vmem_cap)
    mb = k_seq * t                                 # block rows

    # Fold per-head attention weights (exact: qkv has no bias).
    lp = params['layers']
    folded = [_fold_layer_weights(p, c, heads, scale) for p in lp]
    wa = jnp.concatenate([f[0] for f in folded], 0).astype(jnp.bfloat16)  # (depth*H,C,C)
    wbm = jnp.concatenate([f[1] for f in folded], 0).astype(jnp.bfloat16)  # (depth*H,C,C)
    bproj = jnp.stack([p['bproj'] for p in lp])                           # (depth,1,C)
    ln_g = jnp.stack([p['ln_g'] for p in lp])
    ln_b = jnp.stack([p['ln_b'] for p in lp])
    w1 = jnp.stack([p['w1'] for p in lp]).astype(jnp.bfloat16)            # (depth,C,M)
    b1 = jnp.stack([p['b1'] for p in lp])
    w2 = jnp.stack([p['w2'] for p in lp]).astype(jnp.bfloat16)            # (depth,M,C)
    b2 = jnp.stack([p['b2'] for p in lp])
    m = w1.shape[-1]
    pos2d = pos.reshape(t, c)

    def full(shape):
        nd = len(shape)
        return pl.BlockSpec(shape, lambda i, nd=nd: (0,) * nd)

    kernel = functools.partial(_ctmsa_kernel, depth=depth, heads=heads,
                               window=window, seq_len=t)
    vmem_limit = max(32 << 20, min(int(0.8 * vmem_cap), 100 << 20))

    out2d = pl.pallas_call(
        kernel,
        out_shape=jax.ShapeDtypeStruct((nt, c), x2d.dtype),
        grid=(nt // mb,),
        in_specs=[
            pl.BlockSpec((mb, c), lambda i: (i, 0)),   # activation rows
            full((t, c)),                              # pos (untiled)
            full((depth * heads, c, c)),               # A = scale*Wq_h@Wk_h^T
            full((depth * heads, c, c)),               # B = Wv_h@Wproj_h
            full((depth, 1, c)),                       # proj bias
            full((depth, 1, c)),                       # LN gamma
            full((depth, 1, c)),                       # LN beta
            full((depth, c, m)),                       # ff w1
            full((depth, 1, m)),                       # ff b1
            full((depth, m, c)),                       # ff w2
            full((depth, 1, c)),                       # ff b2
        ],
        out_specs=pl.BlockSpec((mb, c), lambda i: (i, 0)),
        compiler_params=pltpu.CompilerParams(
            dimension_semantics=("parallel",),
            vmem_limit_bytes=vmem_limit),
    )(x2d, pos2d, wa, wbm, bproj, ln_g, ln_b, w1, b1, w2, b2)

    out = out2d.reshape(b, n, t, c)
    return jnp.transpose(out, (0, 3, 1, 2))            # back to (b, c, n, t)


def init_params(key, dim, depth, heads, window, mlp_dim, num_time):
    keys = jax.random.split(key, 1 + depth)
    pos = jax.random.normal(keys[0], (1, num_time, dim), jnp.float32)
    layers = []
    s = 0.02
    for i in range(depth):
        ks = jax.random.split(keys[1 + i], 7)
        layers.append(dict(
            wqkv=jax.random.normal(ks[0], (dim, 3 * dim), jnp.float32) * s,
            wproj=jax.random.normal(ks[1], (dim, dim), jnp.float32) * s,
            bproj=jax.random.normal(ks[2], (1, dim), jnp.float32) * s,
            ln_g=jnp.ones((1, dim), jnp.float32),
            ln_b=jnp.zeros((1, dim), jnp.float32),
            w1=jax.random.normal(ks[3], (dim, mlp_dim), jnp.float32) * s,
            b1=jax.random.normal(ks[4], (1, mlp_dim), jnp.float32) * s,
            w2=jax.random.normal(ks[5], (mlp_dim, dim), jnp.float32) * s,
            b2=jax.random.normal(ks[6], (1, dim), jnp.float32) * s,
        ))
    return dict(pos=pos, layers=layers)


if __name__ == "__main__":
    # CT_MSA(dim=32, depth=2, heads=2, window_size=4, mlp_dim=64, num_time=8)
    dim, depth, heads, window, mlp_dim, num_time = 32, 2, 2, 4, 64, 8
    b, n = 2, 4                                       # batch, num stations

    key = jax.random.PRNGKey(0)
    kx, kp = jax.random.split(key)
    x = jax.random.normal(kx, (b, dim, n, num_time), jnp.float32)  # (b, c, n, t)
    params = init_params(kp, dim, depth, heads, window, mlp_dim, num_time)

    out = ct_msa_forward(x, params, heads=heads, window=window)
    out = jax.block_until_ready(out)
    assert out.shape == (b, dim, n, num_time) and out.dtype == jnp.float32
    assert bool(jnp.isfinite(out).all())
    print("KERNEL_OK")
</pallas_src>

<mosaic_0001>
module attributes {stable_mosaic.version = 11 : i64} {
  func.func @_ctmsa_kernel(%arg0: i32, %arg1: memref<16x32xf32, #tpu.memory_space<vmem>>, %arg2: memref<8x32xf32, #tpu.memory_space<vmem>>, %arg3: memref<4x32x32xbf16, #tpu.memory_space<vmem>>, %arg4: memref<4x32x32xbf16, #tpu.memory_space<vmem>>, %arg5: memref<2x1x32xf32, #tpu.memory_space<vmem>>, %arg6: memref<2x1x32xf32, #tpu.memory_space<vmem>>, %arg7: memref<2x1x32xf32, #tpu.memory_space<vmem>>, %arg8: memref<2x32x64xbf16, #tpu.memory_space<vmem>>, %arg9: memref<2x1x64xf32, #tpu.memory_space<vmem>>, %arg10: memref<2x64x32xbf16, #tpu.memory_space<vmem>>, %arg11: memref<2x1x32xf32, #tpu.memory_space<vmem>>, %arg12: memref<16x32xf32, #tpu.memory_space<vmem>>) attributes {dimension_semantics = [#tpu.dimension_semantics<parallel>], iteration_bounds = array<i64: 4>, scalar_prefetch = 0 : i64, scratch_operands = 0 : i64, tpu.core_type = #tpu.core_type<tc>, window_params = [{transform_indices = @transform_0, window_bounds = array<i64: 16, 32>}, {pipeline_mode = #tpu.pipeline_mode<synchronous>, transform_indices = @transform_1, window_bounds = array<i64: 8, 32>}, {pipeline_mode = #tpu.pipeline_mode<synchronous>, transform_indices = @transform_2, window_bounds = array<i64: 4, 32, 32>}, {pipeline_mode = #tpu.pipeline_mode<synchronous>, transform_indices = @transform_3, window_bounds = array<i64: 4, 32, 32>}, {pipeline_mode = #tpu.pipeline_mode<synchronous>, transform_indices = @transform_4, window_bounds = array<i64: 2, 1, 32>}, {pipeline_mode = #tpu.pipeline_mode<synchronous>, transform_indices = @transform_5, window_bounds = array<i64: 2, 1, 32>}, {pipeline_mode = #tpu.pipeline_mode<synchronous>, transform_indices = @transform_6, window_bounds = array<i64: 2, 1, 32>}, {pipeline_mode = #tpu.pipeline_mode<synchronous>, transform_indices = @transform_7, window_bounds = array<i64: 2, 32, 64>}, {pipeline_mode = #tpu.pipeline_mode<synchronous>, transform_indices = @transform_8, window_bounds = array<i64: 2, 1, 64>}, {pipeline_mode = #tpu.pipeline_mode<synchronous>, transform_indices = @transform_9, window_bounds = array<i64: 2, 64, 32>}, {pipeline_mode = #tpu.pipeline_mode<synchronous>, transform_indices = @transform_10, window_bounds = array<i64: 2, 1, 32>}, {transform_indices = @transform_11, window_bounds = array<i64: 16, 32>}]} {
    %c0 = arith.constant 0 : index
    %c0_0 = arith.constant 0 : index
    %0 = vector.load %arg2[%c0, %c0_0] : memref<8x32xf32, #tpu.memory_space<vmem>>, vector<8x32xf32>
    %1 = vector.shape_cast %0 : vector<8x32xf32> to vector<1x8x32xf32>
    %2 = vector.shape_cast %1 : vector<1x8x32xf32> to vector<1x8x32xf32>
    %3 = vector.broadcast %2 : vector<1x8x32xf32> to vector<2x8x32xf32>
    %4 = vector.shape_cast %3 : vector<2x8x32xf32> to vector<16x32xf32>
    %c0_1 = arith.constant 0 : index
    %c0_2 = arith.constant 0 : index
    %5 = vector.load %arg1[%c0_1, %c0_2] : memref<16x32xf32, #tpu.memory_space<vmem>>, vector<16x32xf32>
    %6 = arith.addf %5, %4 : vector<16x32xf32>
    %7 = tpu.iota {dimensions = array<i32: 0>} : vector<4x4xi32>
    %8 = tpu.iota {dimensions = array<i32: 1>} : vector<4x4xi32>
    %9 = arith.cmpi sge, %7, %8 : vector<4x4xi32>
    %10 = vector.shape_cast %9 : vector<4x4xi1> to vector<1x4x4xi1>
    %c0_3 = arith.constant 0 : index
    %c0_4 = arith.constant 0 : index
    %c0_5 = arith.constant 0 : index
    %11 = vector.load %arg5[%c0_3, %c0_4, %c0_5] : memref<2x1x32xf32, #tpu.memory_space<vmem>>, vector<1x1x32xf32>
    %12 = vector.shape_cast %11 : vector<1x1x32xf32> to vector<1x32xf32>
    %c0_6 = arith.constant 0 : index
    %c0_7 = arith.constant 0 : index
    %c0_8 = arith.constant 0 : index
    %13 = vector.load %arg6[%c0_6, %c0_7, %c0_8] : memref<2x1x32xf32, #tpu.memory_space<vmem>>, vector<1x1x32xf32>
    %14 = vector.shape_cast %13 : vector<1x1x32xf32> to vector<1x32xf32>
    %c0_9 = arith.constant 0 : index
    %c0_10 = arith.constant 0 : index
    %c0_11 = arith.constant 0 : index
    %15 = vector.load %arg7[%c0_9, %c0_10, %c0_11] : memref<2x1x32xf32, #tpu.memory_space<vmem>>, vector<1x1x32xf32>
    %16 = vector.shape_cast %15 : vector<1x1x32xf32> to vector<1x32xf32>
    %c0_12 = arith.constant 0 : index
    %c0_13 = arith.constant 0 : index
    %c0_14 = arith.constant 0 : index
    %17 = vector.load %arg8[%c0_12, %c0_13, %c0_14] : memref<2x32x64xbf16, #tpu.memory_space<vmem>>, vector<1x32x64xbf16>
    %18 = vector.shape_cast %17 : vector<1x32x64xbf16> to vector<32x64xbf16>
    %c0_15 = arith.constant 0 : index
    %c0_16 = arith.constant 0 : index
    %c0_17 = arith.constant 0 : index
    %19 = vector.load %arg9[%c0_15, %c0_16, %c0_17] : memref<2x1x64xf32, #tpu.memory_space<vmem>>, vector<1x1x64xf32>
    %20 = vector.shape_cast %19 : vector<1x1x64xf32> to vector<1x64xf32>
    %c0_18 = arith.constant 0 : index
    %c0_19 = arith.constant 0 : index
    %c0_20 = arith.constant 0 : index
    %21 = vector.load %arg10[%c0_18, %c0_19, %c0_20] : memref<2x64x32xbf16, #tpu.memory_space<vmem>>, vector<1x64x32xbf16>
    %22 = vector.shape_cast %21 : vector<1x64x32xbf16> to vector<64x32xbf16>
    %c0_21 = arith.constant 0 : index
    %c0_22 = arith.constant 0 : index
    %c0_23 = arith.constant 0 : index
    %23 = vector.load %arg11[%c0_21, %c0_22, %c0_23] : memref<2x1x32xf32, #tpu.memory_space<vmem>>, vector<1x1x32xf32>
    %24 = vector.shape_cast %23 : vector<1x1x32xf32> to vector<1x32xf32>
    %25 = arith.truncf %6 : vector<16x32xf32> to vector<16x32xbf16>
    %26 = vector.shape_cast %25 : vector<16x32xbf16> to vector<4x4x32xbf16>
    %cst = arith.constant 0.000000e+00 : f32
    %27 = vector.broadcast %cst : f32 to vector<4x4x32xf32>
    %c0_24 = arith.constant 0 : index
    %c0_25 = arith.constant 0 : index
    %c0_26 = arith.constant 0 : index
    %28 = vector.load %arg3[%c0_24, %c0_25, %c0_26] : memref<4x32x32xbf16, #tpu.memory_space<vmem>>, vector<1x32x32xbf16>
    %29 = vector.shape_cast %28 : vector<1x32x32xbf16> to vector<32x32xbf16>
    %c0_27 = arith.constant 0 : index
    %c0_28 = arith.constant 0 : index
    %c0_29 = arith.constant 0 : index
    %30 = vector.load %arg4[%c0_27, %c0_28, %c0_29] : memref<4x32x32xbf16, #tpu.memory_space<vmem>>, vector<1x32x32xbf16>
    %31 = vector.shape_cast %30 : vector<1x32x32xbf16> to vector<32x32xbf16>
    %cst_30 = arith.constant dense<0.000000e+00> : vector<16x32xf32>
    %32 = tpu.matmul %25, %29, %cst_30 {dimension_numbers = #tpu.dot_dimension_numbers<[1], [0], [0], [1], [0, 0, 1, 1], [], []>} : vector<16x32xbf16>, vector<32x32xbf16>, vector<16x32xf32> -> vector<16x32xf32>
    %33 = vector.shape_cast %32 : vector<16x32xf32> to vector<4x4x32xf32>
    %34 = arith.truncf %33 : vector<4x4x32xf32> to vector<4x4x32xbf16>
    "tpu.trace_start"() <{level = 10 : i32, message = "bqc,bkc->bqk"}> : () -> ()
    %cst_31 = arith.constant dense<0.000000e+00> : vector<4x4x4xf32>
    %35 = tpu.matmul %34, %26, %cst_31 {dimension_numbers = #tpu.dot_dimension_numbers<[2], [2], [1], [1], [0, 0, 0, 1, 1, 1], [0], [0]>} : vector<4x4x32xbf16>, vector<4x4x32xbf16>, vector<4x4x4xf32> -> vector<4x4x4xf32>
    %cst_32 = arith.constant -1.000000e+30 : f32
    "tpu.trace_stop"() : () -> ()
    %36 = vector.shape_cast %10 : vector<1x4x4xi1> to vector<1x4x4xi1>
    %37 = vector.broadcast %36 : vector<1x4x4xi1> to vector<4x4x4xi1>
    %38 = vector.broadcast %cst_32 : f32 to vector<4x4x4xf32>
    %39 = arith.select %37, %35, %38 : vector<4x4x4xi1>, vector<4x4x4xf32>
    %cst_33 = arith.constant dense<0xFF800000> : vector<4x4xf32>
    %40 = vector.multi_reduction <maximumf>, %39, %cst_33 [2] : vector<4x4x4xf32> to vector<4x4xf32>
    %41 = vector.shape_cast %40 : vector<4x4xf32> to vector<4x4x1xf32>
    %42 = vector.broadcast %41 : vector<4x4x1xf32> to vector<4x4x4xf32>
    %43 = arith.subf %39, %42 : vector<4x4x4xf32>
    %44 = math.exp %43 : vector<4x4x4xf32>
    %cst_34 = arith.constant dense<0.000000e+00> : vector<4x4xf32>
    %45 = vector.multi_reduction <add>, %44, %cst_34 [2] : vector<4x4x4xf32> to vector<4x4xf32>
    %46 = vector.shape_cast %45 : vector<4x4xf32> to vector<4x4x1xf32>
    %47 = tpu.reciprocal %46 {approx = true} : vector<4x4x1xf32> -> vector<4x4x1xf32>
    %48 = vector.broadcast %47 : vector<4x4x1xf32> to vector<4x4x4xf32>
    %49 = arith.mulf %44, %48 : vector<4x4x4xf32>
    %cst_35 = arith.constant dense<0.000000e+00> : vector<16x32xf32>
    %50 = tpu.matmul %25, %31, %cst_35 {dimension_numbers = #tpu.dot_dimension_numbers<[1], [0], [0], [1], [0, 0, 1, 1], [], []>} : vector<16x32xbf16>, vector<32x32xbf16>, vector<16x32xf32> -> vector<16x32xf32>
    %51 = vector.shape_cast %50 : vector<16x32xf32> to vector<4x4x32xf32>
    %52 = arith.truncf %51 : vector<4x4x32xf32> to vector<4x4x32xbf16>
    %53 = arith.truncf %49 : vector<4x4x4xf32> to vector<4x4x4xbf16>
    "tpu.trace_start"() <{level = 10 : i32, message = "bqk,bkc->bqc"}> : () -> ()
    %cst_36 = arith.constant dense<0.000000e+00> : vector<4x4x32xf32>
    %54 = tpu.matmul %53, %52, %cst_36 {dimension_numbers = #tpu.dot_dimension_numbers<[2], [1], [1], [2], [0, 0, 0, 1, 1, 2], [0], [0]>} : vector<4x4x4xbf16>, vector<4x4x32xbf16>, vector<4x4x32xf32> -> vector<4x4x32xf32>
    "tpu.trace_stop"() : () -> ()
    %55 = arith.addf %27, %54 : vector<4x4x32xf32>
    %c1 = arith.constant 1 : index
    %c0_37 = arith.constant 0 : index
    %c0_38 = arith.constant 0 : index
    %56 = vector.load %arg3[%c1, %c0_37, %c0_38] : memref<4x32x32xbf16, #tpu.memory_space<vmem>>, vector<1x32x32xbf16>
    %57 = vector.shape_cast %56 : vector<1x32x32xbf16> to vector<32x32xbf16>
    %c1_39 = arith.constant 1 : index
    %c0_40 = arith.constant 0 : index
    %c0_41 = arith.constant 0 : index
    %58 = vector.load %arg4[%c1_39, %c0_40, %c0_41] : memref<4x32x32xbf16, #tpu.memory_space<vmem>>, vector<1x32x32xbf16>
    %59 = vector.shape_cast %58 : vector<1x32x32xbf16> to vector<32x32xbf16>
    %cst_42 = arith.constant dense<0.000000e+00> : vector<16x32xf32>
    %60 = tpu.matmul %25, %57, %cst_42 {dimension_numbers = #tpu.dot_dimension_numbers<[1], [0], [0], [1], [0, 0, 1, 1], [], []>} : vector<16x32xbf16>, vector<32x32xbf16>, vector<16x32xf32> -> vector<16x32xf32>
    %61 = vector.shape_cast %60 : vector<16x32xf32> to vector<4x4x32xf32>
    %62 = arith.truncf %61 : vector<4x4x32xf32> to vector<4x4x32xbf16>
    "tpu.trace_start"() <{level = 10 : i32, message = "bqc,bkc->bqk"}> : () -> ()
    %cst_43 = arith.constant dense<0.000000e+00> : vector<4x4x4xf32>
    %63 = tpu.matmul %62, %26, %cst_43 {dimension_numbers = #tpu.dot_dimension_numbers<[2], [2], [1], [1], [0, 0, 0, 1, 1, 1], [0], [0]>} : vector<4x4x32xbf16>, vector<4x4x32xbf16>, vector<4x4x4xf32> -> vector<4x4x4xf32>
    %cst_44 = arith.constant -1.000000e+30 : f32
    "tpu.trace_stop"() : () -> ()
    %64 = vector.shape_cast %10 : vector<1x4x4xi1> to vector<1x4x4xi1>
    %65 = vector.broadcast %64 : vector<1x4x4xi1> to vector<4x4x4xi1>
    %66 = vector.broadcast %cst_44 : f32 to vector<4x4x4xf32>
    %67 = arith.select %65, %63, %66 : vector<4x4x4xi1>, vector<4x4x4xf32>
    %cst_45 = arith.constant dense<0xFF800000> : vector<4x4xf32>
    %68 = vector.multi_reduction <maximumf>, %67, %cst_45 [2] : vector<4x4x4xf32> to vector<4x4xf32>
    %69 = vector.shape_cast %68 : vector<4x4xf32> to vector<4x4x1xf32>
    %70 = vector.broadcast %69 : vector<4x4x1xf32> to vector<4x4x4xf32>
    %71 = arith.subf %67, %70 : vector<4x4x4xf32>
    %72 = math.exp %71 : vector<4x4x4xf32>
    %cst_46 = arith.constant dense<0.000000e+00> : vector<4x4xf32>
    %73 = vector.multi_reduction <add>, %72, %cst_46 [2] : vector<4x4x4xf32> to vector<4x4xf32>
    %74 = vector.shape_cast %73 : vector<4x4xf32> to vector<4x4x1xf32>
    %75 = tpu.reciprocal %74 {approx = true} : vector<4x4x1xf32> -> vector<4x4x1xf32>
    %76 = vector.broadcast %75 : vector<4x4x1xf32> to vector<4x4x4xf32>
    %77 = arith.mulf %72, %76 : vector<4x4x4xf32>
    %cst_47 = arith.constant dense<0.000000e+00> : vector<16x32xf32>
    %78 = tpu.matmul %25, %59, %cst_47 {dimension_numbers = #tpu.dot_dimension_numbers<[1], [0], [0], [1], [0, 0, 1, 1], [], []>} : vector<16x32xbf16>, vector<32x32xbf16>, vector<16x32xf32> -> vector<16x32xf32>
    %79 = vector.shape_cast %78 : vector<16x32xf32> to vector<4x4x32xf32>
    %80 = arith.truncf %79 : vector<4x4x32xf32> to vector<4x4x32xbf16>
    %81 = arith.truncf %77 : vector<4x4x4xf32> to vector<4x4x4xbf16>
    "tpu.trace_start"() <{level = 10 : i32, message = "bqk,bkc->bqc"}> : () -> ()
    %cst_48 = arith.constant dense<0.000000e+00> : vector<4x4x32xf32>
    %82 = tpu.matmul %81, %80, %cst_48 {dimension_numbers = #tpu.dot_dimension_numbers<[2], [1], [1], [2], [0, 0, 0, 1, 1, 2], [0], [0]>} : vector<4x4x4xbf16>, vector<4x4x32xbf16>, vector<4x4x32xf32> -> vector<4x4x32xf32>
    "tpu.trace_stop"() : () -> ()
    %83 = arith.addf %55, %82 : vector<4x4x32xf32>
    %84 = vector.shape_cast %83 : vector<4x4x32xf32> to vector<16x32xf32>
    %85 = arith.addf %6, %84 : vector<16x32xf32>
    %86 = vector.broadcast %12 : vector<1x32xf32> to vector<16x32xf32>
    %87 = arith.addf %85, %86 : vector<16x32xf32>
    %cst_49 = arith.constant dense<0.000000e+00> : vector<16xf32>
    %88 = vector.multi_reduction <add>, %87, %cst_49 [1] : vector<16x32xf32> to vector<16xf32>
    %89 = vector.shape_cast %88 : vector<16xf32> to vector<16x1xf32>
    %cst_50 = arith.constant 3.200000e+01 : f32
    %90 = vector.broadcast %cst_50 : f32 to vector<16x1xf32>
    %91 = arith.divf %89, %90 : vector<16x1xf32>
    %92 = vector.broadcast %91 : vector<16x1xf32> to vector<16x32xf32>
    %93 = arith.subf %87, %92 : vector<16x32xf32>
    %94 = arith.mulf %93, %93 : vector<16x32xf32>
    %cst_51 = arith.constant dense<0.000000e+00> : vector<16xf32>
    %95 = vector.multi_reduction <add>, %94, %cst_51 [1] : vector<16x32xf32> to vector<16xf32>
    %96 = vector.shape_cast %95 : vector<16xf32> to vector<16x1xf32>
    %cst_52 = arith.constant 3.200000e+01 : f32
    %97 = vector.broadcast %cst_52 : f32 to vector<16x1xf32>
    %98 = arith.divf %96, %97 : vector<16x1xf32>
    %99 = vector.broadcast %91 : vector<16x1xf32> to vector<16x32xf32>
    %100 = arith.subf %87, %99 : vector<16x32xf32>
    %cst_53 = arith.constant 9.99999974E-6 : f32
    %101 = vector.broadcast %cst_53 : f32 to vector<16x1xf32>
    %102 = arith.addf %98, %101 : vector<16x1xf32>
    %103 = math.rsqrt %102 : vector<16x1xf32>
    %104 = vector.broadcast %103 : vector<16x1xf32> to vector<16x32xf32>
    %105 = arith.mulf %100, %104 : vector<16x32xf32>
    %106 = vector.broadcast %14 : vector<1x32xf32> to vector<16x32xf32>
    %107 = arith.mulf %105, %106 : vector<16x32xf32>
    %108 = vector.broadcast %16 : vector<1x32xf32> to vector<16x32xf32>
    %109 = arith.addf %107, %108 : vector<16x32xf32>
    %110 = arith.truncf %109 : vector<16x32xf32> to vector<16x32xbf16>
    %cst_54 = arith.constant dense<0.000000e+00> : vector<16x64xf32>
    %111 = tpu.matmul %110, %18, %cst_54 {dimension_numbers = #tpu.dot_dimension_numbers<[1], [0], [0], [1], [0, 0, 1, 1], [], []>} : vector<16x32xbf16>, vector<32x64xbf16>, vector<16x64xf32> -> vector<16x64xf32>
    %112 = vector.broadcast %20 : vector<1x64xf32> to vector<16x64xf32>
    %113 = arith.addf %111, %112 : vector<16x64xf32>
    %cst_55 = arith.constant 5.000000e-01 : f32
    %114 = vector.broadcast %cst_55 : f32 to vector<16x64xf32>
    %115 = arith.mulf %114, %113 : vector<16x64xf32>
    %116 = arith.mulf %113, %113 : vector<16x64xf32>
    %117 = arith.mulf %116, %113 : vector<16x64xf32>
    %cst_56 = arith.constant 4.471500e-02 : f32
    %118 = vector.broadcast %cst_56 : f32 to vector<16x64xf32>
    %119 = arith.mulf %118, %117 : vector<16x64xf32>
    %120 = arith.addf %113, %119 : vector<16x64xf32>
    %cst_57 = arith.constant 0.797884583 : f32
    %121 = vector.broadcast %cst_57 : f32 to vector<16x64xf32>
    %122 = arith.mulf %121, %120 : vector<16x64xf32>
    %123 = math.tanh %122 : vector<16x64xf32>
    %cst_58 = arith.constant 1.000000e+00 : f32
    %124 = vector.broadcast %cst_58 : f32 to vector<16x64xf32>
    %125 = arith.addf %124, %123 : vector<16x64xf32>
    %126 = arith.mulf %115, %125 : vector<16x64xf32>
    %127 = arith.truncf %126 : vector<16x64xf32> to vector<16x64xbf16>
    %cst_59 = arith.constant dense<0.000000e+00> : vector<16x32xf32>
    %128 = tpu.matmul %127, %22, %cst_59 {dimension_numbers = #tpu.dot_dimension_numbers<[1], [0], [0], [1], [0, 0, 1, 1], [], []>} : vector<16x64xbf16>, vector<64x32xbf16>, vector<16x32xf32> -> vector<16x32xf32>
    %129 = vector.broadcast %24 : vector<1x32xf32> to vector<16x32xf32>
    %130 = arith.addf %128, %129 : vector<16x32xf32>
    %131 = arith.addf %87, %130 : vector<16x32xf32>
    %c1_60 = arith.constant 1 : index
    %c0_61 = arith.constant 0 : index
    %c0_62 = arith.constant 0 : index
    %132 = vector.load %arg5[%c1_60, %c0_61, %c0_62] : memref<2x1x32xf32, #tpu.memory_space<vmem>>, vector<1x1x32xf32>
    %133 = vector.shape_cast %132 : vector<1x1x32xf32> to vector<1x32xf32>
    %c1_63 = arith.constant 1 : index
    %c0_64 = arith.constant 0 : index
    %c0_65 = arith.constant 0 : index
    %134 = vector.load %arg6[%c1_63, %c0_64, %c0_65] : memref<2x1x32xf32, #tpu.memory_space<vmem>>, vector<1x1x32xf32>
    %135 = vector.shape_cast %134 : vector<1x1x32xf32> to vector<1x32xf32>
    %c1_66 = arith.constant 1 : index
    %c0_67 = arith.constant 0 : index
    %c0_68 = arith.constant 0 : index
    %136 = vector.load %arg7[%c1_66, %c0_67, %c0_68] : memref<2x1x32xf32, #tpu.memory_space<vmem>>, vector<1x1x32xf32>
    %137 = vector.shape_cast %136 : vector<1x1x32xf32> to vector<1x32xf32>
    %c1_69 = arith.constant 1 : index
    %c0_70 = arith.constant 0 : index
    %c0_71 = arith.constant 0 : index
    %138 = vector.load %arg8[%c1_69, %c0_70, %c0_71] : memref<2x32x64xbf16, #tpu.memory_space<vmem>>, vector<1x32x64xbf16>
    %139 = vector.shape_cast %138 : vector<1x32x64xbf16> to vector<32x64xbf16>
    %c1_72 = arith.constant 1 : index
    %c0_73 = arith.constant 0 : index
    %c0_74 = arith.constant 0 : index
    %140 = vector.load %arg9[%c1_72, %c0_73, %c0_74] : memref<2x1x64xf32, #tpu.memory_space<vmem>>, vector<1x1x64xf32>
    %141 = vector.shape_cast %140 : vector<1x1x64xf32> to vector<1x64xf32>
    %c1_75 = arith.constant 1 : index
    %c0_76 = arith.constant 0 : index
    %c0_77 = arith.constant 0 : index
    %142 = vector.load %arg10[%c1_75, %c0_76, %c0_77] : memref<2x64x32xbf16, #tpu.memory_space<vmem>>, vector<1x64x32xbf16>
    %143 = vector.shape_cast %142 : vector<1x64x32xbf16> to vector<64x32xbf16>
    %c1_78 = arith.constant 1 : index
    %c0_79 = arith.constant 0 : index
    %c0_80 = arith.constant 0 : index
    %144 = vector.load %arg11[%c1_78, %c0_79, %c0_80] : memref<2x1x32xf32, #tpu.memory_space<vmem>>, vector<1x1x32xf32>
    %145 = vector.shape_cast %144 : vector<1x1x32xf32> to vector<1x32xf32>
    %146 = arith.truncf %131 : vector<16x32xf32> to vector<16x32xbf16>
    %147 = vector.shape_cast %146 : vector<16x32xbf16> to vector<4x4x32xbf16>
    %cst_81 = arith.constant 0.000000e+00 : f32
    %148 = vector.broadcast %cst_81 : f32 to vector<4x4x32xf32>
    %c2 = arith.constant 2 : index
    %c0_82 = arith.constant 0 : index
    %c0_83 = arith.constant 0 : index
    %149 = vector.load %arg3[%c2, %c0_82, %c0_83] : memref<4x32x32xbf16, #tpu.memory_space<vmem>>, vector<1x32x32xbf16>
    %150 = vector.shape_cast %149 : vector<1x32x32xbf16> to vector<32x32xbf16>
    %c2_84 = arith.constant 2 : index
    %c0_85 = arith.constant 0 : index
    %c0_86 = arith.constant 0 : index
    %151 = vector.load %arg4[%c2_84, %c0_85, %c0_86] : memref<4x32x32xbf16, #tpu.memory_space<vmem>>, vector<1x32x32xbf16>
    %152 = vector.shape_cast %151 : vector<1x32x32xbf16> to vector<32x32xbf16>
    %cst_87 = arith.constant dense<0.000000e+00> : vector<16x32xf32>
    %153 = tpu.matmul %146, %150, %cst_87 {dimension_numbers = #tpu.dot_dimension_numbers<[1], [0], [0], [1], [0, 0, 1, 1], [], []>} : vector<16x32xbf16>, vector<32x32xbf16>, vector<16x32xf32> -> vector<16x32xf32>
    %154 = vector.shape_cast %153 : vector<16x32xf32> to vector<4x4x32xf32>
    %155 = arith.truncf %154 : vector<4x4x32xf32> to vector<4x4x32xbf16>
    "tpu.trace_start"() <{level = 10 : i32, message = "bqc,bkc->bqk"}> : () -> ()
    %cst_88 = arith.constant dense<0.000000e+00> : vector<4x4x4xf32>
    %156 = tpu.matmul %155, %147, %cst_88 {dimension_numbers = #tpu.dot_dimension_numbers<[2], [2], [1], [1], [0, 0, 0, 1, 1, 1], [0], [0]>} : vector<4x4x32xbf16>, vector<4x4x32xbf16>, vector<4x4x4xf32> -> vector<4x4x4xf32>
    %cst_89 = arith.constant -1.000000e+30 : f32
    "tpu.trace_stop"() : () -> ()
    %157 = vector.shape_cast %10 : vector<1x4x4xi1> to vector<1x4x4xi1>
    %158 = vector.broadcast %157 : vector<1x4x4xi1> to vector<4x4x4xi1>
    %159 = vector.broadcast %cst_89 : f32 to vector<4x4x4xf32>
    %160 = arith.select %158, %156, %159 : vector<4x4x4xi1>, vector<4x4x4xf32>
    %cst_90 = arith.constant dense<0xFF800000> : vector<4x4xf32>
    %161 = vector.multi_reduction <maximumf>, %160, %cst_90 [2] : vector<4x4x4xf32> to vector<4x4xf32>
    %162 = vector.shape_cast %161 : vector<4x4xf32> to vector<4x4x1xf32>
    %163 = vector.broadcast %162 : vector<4x4x1xf32> to vector<4x4x4xf32>
    %164 = arith.subf %160, %163 : vector<4x4x4xf32>
    %165 = math.exp %164 : vector<4x4x4xf32>
    %cst_91 = arith.constant dense<0.000000e+00> : vector<4x4xf32>
    %166 = vector.multi_reduction <add>, %165, %cst_91 [2] : vector<4x4x4xf32> to vector<4x4xf32>
    %167 = vector.shape_cast %166 : vector<4x4xf32> to vector<4x4x1xf32>
    %168 = tpu.reciprocal %167 {approx = true} : vector<4x4x1xf32> -> vector<4x4x1xf32>
    %169 = vector.broadcast %168 : vector<4x4x1xf32> to vector<4x4x4xf32>
    %170 = arith.mulf %165, %169 : vector<4x4x4xf32>
    %cst_92 = arith.constant dense<0.000000e+00> : vector<16x32xf32>
    %171 = tpu.matmul %146, %152, %cst_92 {dimension_numbers = #tpu.dot_dimension_numbers<[1], [0], [0], [1], [0, 0, 1, 1], [], []>} : vector<16x32xbf16>, vector<32x32xbf16>, vector<16x32xf32> -> vector<16x32xf32>
    %172 = vector.shape_cast %171 : vector<16x32xf32> to vector<4x4x32xf32>
    %173 = arith.truncf %172 : vector<4x4x32xf32> to vector<4x4x32xbf16>
    %174 = arith.truncf %170 : vector<4x4x4xf32> to vector<4x4x4xbf16>
    "tpu.trace_start"() <{level = 10 : i32, message = "bqk,bkc->bqc"}> : () -> ()
    %cst_93 = arith.constant dense<0.000000e+00> : vector<4x4x32xf32>
    %175 = tpu.matmul %174, %173, %cst_93 {dimension_numbers = #tpu.dot_dimension_numbers<[2], [1], [1], [2], [0, 0, 0, 1, 1, 2], [0], [0]>} : vector<4x4x4xbf16>, vector<4x4x32xbf16>, vector<4x4x32xf32> -> vector<4x4x32xf32>
    "tpu.trace_stop"() : () -> ()
    %176 = arith.addf %148, %175 : vector<4x4x32xf32>
    %c3 = arith.constant 3 : index
    %c0_94 = arith.constant 0 : index
    %c0_95 = arith.constant 0 : index
    %177 = vector.load %arg3[%c3, %c0_94, %c0_95] : memref<4x32x32xbf16, #tpu.memory_space<vmem>>, vector<1x32x32xbf16>
    %178 = vector.shape_cast %177 : vector<1x32x32xbf16> to vector<32x32xbf16>
    %c3_96 = arith.constant 3 : index
    %c0_97 = arith.constant 0 : index
    %c0_98 = arith.constant 0 : index
    %179 = vector.load %arg4[%c3_96, %c0_97, %c0_98] : memref<4x32x32xbf16, #tpu.memory_space<vmem>>, vector<1x32x32xbf16>
    %180 = vector.shape_cast %179 : vector<1x32x32xbf16> to vector<32x32xbf16>
    %cst_99 = arith.constant dense<0.000000e+00> : vector<16x32xf32>
    %181 = tpu.matmul %146, %178, %cst_99 {dimension_numbers = #tpu.dot_dimension_numbers<[1], [0], [0], [1], [0, 0, 1, 1], [], []>} : vector<16x32xbf16>, vector<32x32xbf16>, vector<16x32xf32> -> vector<16x32xf32>
    %182 = vector.shape_cast %181 : vector<16x32xf32> to vector<4x4x32xf32>
    %183 = arith.truncf %182 : vector<4x4x32xf32> to vector<4x4x32xbf16>
    "tpu.trace_start"() <{level = 10 : i32, message = "bqc,bkc->bqk"}> : () -> ()
    %cst_100 = arith.constant dense<0.000000e+00> : vector<4x4x4xf32>
    %184 = tpu.matmul %183, %147, %cst_100 {dimension_numbers = #tpu.dot_dimension_numbers<[2], [2], [1], [1], [0, 0, 0, 1, 1, 1], [0], [0]>} : vector<4x4x32xbf16>, vector<4x4x32xbf16>, vector<4x4x4xf32> -> vector<4x4x4xf32>
    %cst_101 = arith.constant -1.000000e+30 : f32
    "tpu.trace_stop"() : () -> ()
    %185 = vector.shape_cast %10 : vector<1x4x4xi1> to vector<1x4x4xi1>
    %186 = vector.broadcast %185 : vector<1x4x4xi1> to vector<4x4x4xi1>
    %187 = vector.broadcast %cst_101 : f32 to vector<4x4x4xf32>
    %188 = arith.select %186, %184, %187 : vector<4x4x4xi1>, vector<4x4x4xf32>
    %cst_102 = arith.constant dense<0xFF800000> : vector<4x4xf32>
    %189 = vector.multi_reduction <maximumf>, %188, %cst_102 [2] : vector<4x4x4xf32> to vector<4x4xf32>
    %190 = vector.shape_cast %189 : vector<4x4xf32> to vector<4x4x1xf32>
    %191 = vector.broadcast %190 : vector<4x4x1xf32> to vector<4x4x4xf32>
    %192 = arith.subf %188, %191 : vector<4x4x4xf32>
    %193 = math.exp %192 : vector<4x4x4xf32>
    %cst_103 = arith.constant dense<0.000000e+00> : vector<4x4xf32>
    %194 = vector.multi_reduction <add>, %193, %cst_103 [2] : vector<4x4x4xf32> to vector<4x4xf32>
    %195 = vector.shape_cast %194 : vector<4x4xf32> to vector<4x4x1xf32>
    %196 = tpu.reciprocal %195 {approx = true} : vector<4x4x1xf32> -> vector<4x4x1xf32>
    %197 = vector.broadcast %196 : vector<4x4x1xf32> to vector<4x4x4xf32>
    %198 = arith.mulf %193, %197 : vector<4x4x4xf32>
    %cst_104 = arith.constant dense<0.000000e+00> : vector<16x32xf32>
    %199 = tpu.matmul %146, %180, %cst_104 {dimension_numbers = #tpu.dot_dimension_numbers<[1], [0], [0], [1], [0, 0, 1, 1], [], []>} : vector<16x32xbf16>, vector<32x32xbf16>, vector<16x32xf32> -> vector<16x32xf32>
    %200 = vector.shape_cast %199 : vector<16x32xf32> to vector<4x4x32xf32>
    %201 = arith.truncf %200 : vector<4x4x32xf32> to vector<4x4x32xbf16>
    %202 = arith.truncf %198 : vector<4x4x4xf32> to vector<4x4x4xbf16>
    "tpu.trace_start"() <{level = 10 : i32, message = "bqk,bkc->bqc"}> : () -> ()
    %cst_105 = arith.constant dense<0.000000e+00> : vector<4x4x32xf32>
    %203 = tpu.matmul %202, %201, %cst_105 {dimension_numbers = #tpu.dot_dimension_numbers<[2], [1], [1], [2], [0, 0, 0, 1, 1, 2], [0], [0]>} : vector<4x4x4xbf16>, vector<4x4x32xbf16>, vector<4x4x32xf32> -> vector<4x4x32xf32>
    "tpu.trace_stop"() : () -> ()
    %204 = arith.addf %176, %203 : vector<4x4x32xf32>
    %205 = vector.shape_cast %204 : vector<4x4x32xf32> to vector<16x32xf32>
    %206 = arith.addf %131, %205 : vector<16x32xf32>
    %207 = vector.broadcast %133 : vector<1x32xf32> to vector<16x32xf32>
    %208 = arith.addf %206, %207 : vector<16x32xf32>
    %cst_106 = arith.constant dense<0.000000e+00> : vector<16xf32>
    %209 = vector.multi_reduction <add>, %208, %cst_106 [1] : vector<16x32xf32> to vector<16xf32>
    %210 = vector.shape_cast %209 : vector<16xf32> to vector<16x1xf32>
    %cst_107 = arith.constant 3.200000e+01 : f32
    %211 = vector.broadcast %cst_107 : f32 to vector<16x1xf32>
    %212 = arith.divf %210, %211 : vector<16x1xf32>
    %213 = vector.broadcast %212 : vector<16x1xf32> to vector<16x32xf32>
    %214 = arith.subf %208, %213 : vector<16x32xf32>
    %215 = arith.mulf %214, %214 : vector<16x32xf32>
    %cst_108 = arith.constant dense<0.000000e+00> : vector<16xf32>
    %216 = vector.multi_reduction <add>, %215, %cst_108 [1] : vector<16x32xf32> to vector<16xf32>
    %217 = vector.shape_cast %216 : vector<16xf32> to vector<16x1xf32>
    %cst_109 = arith.constant 3.200000e+01 : f32
    %218 = vector.broadcast %cst_109 : f32 to vector<16x1xf32>
    %219 = arith.divf %217, %218 : vector<16x1xf32>
    %220 = vector.broadcast %212 : vector<16x1xf32> to vector<16x32xf32>
    %221 = arith.subf %208, %220 : vector<16x32xf32>
    %cst_110 = arith.constant 9.99999974E-6 : f32
    %222 = vector.broadcast %cst_110 : f32 to vector<16x1xf32>
    %223 = arith.addf %219, %222 : vector<16x1xf32>
    %224 = math.rsqrt %223 : vector<16x1xf32>
    %225 = vector.broadcast %224 : vector<16x1xf32> to vector<16x32xf32>
    %226 = arith.mulf %221, %225 : vector<16x32xf32>
    %227 = vector.broadcast %135 : vector<1x32xf32> to vector<16x32xf32>
    %228 = arith.mulf %226, %227 : vector<16x32xf32>
    %229 = vector.broadcast %137 : vector<1x32xf32> to vector<16x32xf32>
    %230 = arith.addf %228, %229 : vector<16x32xf32>
    %231 = arith.truncf %230 : vector<16x32xf32> to vector<16x32xbf16>
    %cst_111 = arith.constant dense<0.000000e+00> : vector<16x64xf32>
    %232 = tpu.matmul %231, %139, %cst_111 {dimension_numbers = #tpu.dot_dimension_numbers<[1], [0], [0], [1], [0, 0, 1, 1], [], []>} : vector<16x32xbf16>, vector<32x64xbf16>, vector<16x64xf32> -> vector<16x64xf32>
    %233 = vector.broadcast %141 : vector<1x64xf32> to vector<16x64xf32>
    %234 = arith.addf %232, %233 : vector<16x64xf32>
    %cst_112 = arith.constant 5.000000e-01 : f32
    %235 = vector.broadcast %cst_112 : f32 to vector<16x64xf32>
    %236 = arith.mulf %235, %234 : vector<16x64xf32>
    %237 = arith.mulf %234, %234 : vector<16x64xf32>
    %238 = arith.mulf %237, %234 : vector<16x64xf32>
    %cst_113 = arith.constant 4.471500e-02 : f32
    %239 = vector.broadcast %cst_113 : f32 to vector<16x64xf32>
    %240 = arith.mulf %239, %238 : vector<16x64xf32>
    %241 = arith.addf %234, %240 : vector<16x64xf32>
    %cst_114 = arith.constant 0.797884583 : f32
    %242 = vector.broadcast %cst_114 : f32 to vector<16x64xf32>
    %243 = arith.mulf %242, %241 : vector<16x64xf32>
    %244 = math.tanh %243 : vector<16x64xf32>
    %cst_115 = arith.constant 1.000000e+00 : f32
    %245 = vector.broadcast %cst_115 : f32 to vector<16x64xf32>
    %246 = arith.addf %245, %244 : vector<16x64xf32>
    %247 = arith.mulf %236, %246 : vector<16x64xf32>
    %248 = arith.truncf %247 : vector<16x64xf32> to vector<16x64xbf16>
    %cst_116 = arith.constant dense<0.000000e+00> : vector<16x32xf32>
    %249 = tpu.matmul %248, %143, %cst_116 {dimension_numbers = #tpu.dot_dimension_numbers<[1], [0], [0], [1], [0, 0, 1, 1], [], []>} : vector<16x64xbf16>, vector<64x32xbf16>, vector<16x32xf32> -> vector<16x32xf32>
    %250 = vector.broadcast %145 : vector<1x32xf32> to vector<16x32xf32>
    %251 = arith.addf %249, %250 : vector<16x32xf32>
    %252 = arith.addf %208, %251 : vector<16x32xf32>
    %c0_117 = arith.constant 0 : index
    %c0_118 = arith.constant 0 : index
    %253 = vector.load %arg12[%c0_117, %c0_118] : memref<16x32xf32, #tpu.memory_space<vmem>>, vector<16x32xf32>
    tpu.vector_store %arg12[%c0_117, %c0_118], %252 {strides = array<i32>} : memref<16x32xf32, #tpu.memory_space<vmem>>, vector<16x32xf32>,
    return
  }
  func.func @transform_0(%arg0: i32) -> (i32, i32) {
    %c0_i32 = arith.constant 0 : i32
    %c0_i32_0 = arith.constant 0 : i32
    return %arg0, %c0_i32 : i32, i32
  }
  func.func @transform_1(%arg0: i32) -> (i32, i32) {
    %c0_i32 = arith.constant 0 : i32
    %c0_i32_0 = arith.constant 0 : i32
    %c0_i32_1 = arith.constant 0 : i32
    return %c0_i32, %c0_i32_0 : i32, i32
  }
  func.func @transform_2(%arg0: i32) -> (i32, i32, i32) {
    %c0_i32 = arith.constant 0 : i32
    %c0_i32_0 = arith.constant 0 : i32
    %c0_i32_1 = arith.constant 0 : i32
    %c0_i32_2 = arith.constant 0 : i32
    return %c0_i32, %c0_i32_0, %c0_i32_1 : i32, i32, i32
  }
  func.func @transform_3(%arg0: i32) -> (i32, i32, i32) {
    %c0_i32 = arith.constant 0 : i32
    %c0_i32_0 = arith.constant 0 : i32
    %c0_i32_1 = arith.constant 0 : i32
    %c0_i32_2 = arith.constant 0 : i32
    return %c0_i32, %c0_i32_0, %c0_i32_1 : i32, i32, i32
  }
  func.func @transform_4(%arg0: i32) -> (i32, i32, i32) {
    %c0_i32 = arith.constant 0 : i32
    %c0_i32_0 = arith.constant 0 : i32
    %c0_i32_1 = arith.constant 0 : i32
    %c0_i32_2 = arith.constant 0 : i32
    return %c0_i32, %c0_i32_0, %c0_i32_1 : i32, i32, i32
  }
  func.func @transform_5(%arg0: i32) -> (i32, i32, i32) {
    %c0_i32 = arith.constant 0 : i32
    %c0_i32_0 = arith.constant 0 : i32
    %c0_i32_1 = arith.constant 0 : i32
    %c0_i32_2 = arith.constant 0 : i32
    return %c0_i32, %c0_i32_0, %c0_i32_1 : i32, i32, i32
  }
  func.func @transform_6(%arg0: i32) -> (i32, i32, i32) {
    %c0_i32 = arith.constant 0 : i32
    %c0_i32_0 = arith.constant 0 : i32
    %c0_i32_1 = arith.constant 0 : i32
    %c0_i32_2 = arith.constant 0 : i32
    return %c0_i32, %c0_i32_0, %c0_i32_1 : i32, i32, i32
  }
  func.func @transform_7(%arg0: i32) -> (i32, i32, i32) {
    %c0_i32 = arith.constant 0 : i32
    %c0_i32_0 = arith.constant 0 : i32
    %c0_i32_1 = arith.constant 0 : i32
    %c0_i32_2 = arith.constant 0 : i32
    return %c0_i32, %c0_i32_0, %c0_i32_1 : i32, i32, i32
  }
  func.func @transform_8(%arg0: i32) -> (i32, i32, i32) {
    %c0_i32 = arith.constant 0 : i32
    %c0_i32_0 = arith.constant 0 : i32
    %c0_i32_1 = arith.constant 0 : i32
    %c0_i32_2 = arith.constant 0 : i32
    return %c0_i32, %c0_i32_0, %c0_i32_1 : i32, i32, i32
  }
  func.func @transform_9(%arg0: i32) -> (i32, i32, i32) {
    %c0_i32 = arith.constant 0 : i32
    %c0_i32_0 = arith.constant 0 : i32
    %c0_i32_1 = arith.constant 0 : i32
    %c0_i32_2 = arith.constant 0 : i32
    return %c0_i32, %c0_i32_0, %c0_i32_1 : i32, i32, i32
  }
  func.func @transform_10(%arg0: i32) -> (i32, i32, i32) {
    %c0_i32 = arith.constant 0 : i32
    %c0_i32_0 = arith.constant 0 : i32
    %c0_i32_1 = arith.constant 0 : i32
    %c0_i32_2 = arith.constant 0 : i32
    return %c0_i32, %c0_i32_0, %c0_i32_1 : i32, i32, i32
  }
  func.func @transform_11(%arg0: i32) -> (i32, i32) {
    %c0_i32 = arith.constant 0 : i32
    %c0_i32_0 = arith.constant 0 : i32
    return %arg0, %c0_i32 : i32, i32
  }
}

</mosaic_0001>

<llo_original>
// kernel: tpu_custom_call.1
$region0: #{tpu_custom_call.1}
  #allocation0 [shape = 'u32[]', space=smem, size = 0x4, offset = 0x4, fixed_abs, tag = 'smem constant byte address 0x4 - core index']
  #allocation1 [shape = 'u32[144,128]{1,0:T(1,128)}', space=vmem, size = 0x12000, scoped, tag = 'internal scratch']
  %s0 = inlined_call_operand.vmem [shape: f32[64,32], index: 0, kind: input, shape index: {}]
  %s1 = inlined_call_operand.hbm [shape: f32[8,32], index: 1, kind: input, shape index: {}]
  %s2 = inlined_call_operand.vmem [shape: bf16[4,32,32], index: 2, kind: input, shape index: {}]
  %s3 = inlined_call_operand.vmem [shape: bf16[4,32,32], index: 3, kind: input, shape index: {}]
  %s4 = inlined_call_operand.vmem [shape: f32[2,1,32], index: 4, kind: input, shape index: {}]
  %s5 = inlined_call_operand.vmem [shape: f32[2,1,32], index: 5, kind: input, shape index: {}]
  %s6 = inlined_call_operand.vmem [shape: f32[2,1,32], index: 6, kind: input, shape index: {}]
  %s7 = inlined_call_operand.vmem [shape: bf16[2,32,64], index: 7, kind: input, shape index: {}]
  %s8 = inlined_call_operand.vmem [shape: f32[2,1,64], index: 8, kind: input, shape index: {}]
  %s9 = inlined_call_operand.vmem [shape: bf16[2,64,32], index: 9, kind: input, shape index: {}]
  %s10 = inlined_call_operand.vmem [shape: f32[2,1,32], index: 10, kind: input, shape index: {}]
  %s11 = inlined_call_operand.vmem [shape: f32[64,32], index: 11, kind: output, shape index: {}]
  %s12 = sld [smem:[#allocation0]]
  $region81: #{tpu_custom_call.1} parent=0
    _
  %s14 = ssub.s32 1, %s12
  %s15 = scalar_select 0, %s14, %s12
  $region1: #{tpu_custom_call.1} parent=0
    #allocation2 [shape = 'u8[4096]{0}', space=vmem, size = 0x1000, scoped, tag = 'input window, operand 1, single buffered']
    #allocation3 [shape = 's32[2]{0}', space=sflag, size = 0x8, scoped, tag = 'scoped memory for tpu_custom_call.1']
    %16 = vsyncpa [#allocation3], 0
    loop: start=0, step=1, limit=6
    $region2: #{tpu_custom_call.1} parent=1 // loop_pre_header
      _
    $region3: #{tpu_custom_call.1} parent=1 // loop_header
      %s18 = sphi 0, %s22
      %p19 = scmp.ge.s32.totalorder %s18, 6
      %s28 = sphi 0, %s30
      %s31 = sphi 0, %s28
      %s32 = sphi 0, %s31
      %s48 = sphi 0, %s32
      %s52 = sphi 0, %s52
      %s54 = sphi 0, %s52
      %s55 = sphi 0, %s54
      %s69 = sphi 0, %s55
      %s73 = sphi 0, %s73
      %s75 = sphi 0, %s73
      %s76 = sphi 0, %s75
      %s90 = sphi 0, %s76
      %s94 = sphi 0, %s94
      %s96 = sphi 0, %s94
      %s97 = sphi 0, %s96
      %s111 = sphi 0, %s97
      %s115 = sphi 0, %s115
      %s117 = sphi 0, %s115
      %s118 = sphi 0, %s117
      %s132 = sphi 0, %s118
      %s136 = sphi 0, %s136
      %s138 = sphi 0, %s136
      %s139 = sphi 0, %s138
      %s153 = sphi 0, %s139
      %s157 = sphi 0, %s157
      %s159 = sphi 0, %s157
      %s160 = sphi 0, %s159
      %s174 = sphi 0, %s160
      %s178 = sphi 0, %s178
      %s180 = sphi 0, %s178
      %s181 = sphi 0, %s180
      %s195 = sphi 0, %s181
      %s199 = sphi 0, %s199
      %s201 = sphi 0, %s199
      %s202 = sphi 0, %s201
      %s216 = sphi 0, %s202
      %s220 = sphi 0, %s220
      %s222 = sphi 0, %s220
      %s223 = sphi 0, %s222
      %s237 = sphi 0, %s223
      %s241 = sphi 0, %s241
      %s243 = sphi 0, %s241
      %s244 = sphi 0, %s243
      %s258 = sphi 0, %s244
      %s264 = sphi 0, %s266
      %s267 = sphi 0, %s264
      %s268 = sphi 0, %s267
      %s284 = sphi 0, %s268
    $region4: #{tpu_custom_call.1} parent=1 // loop_header_branch
      %21 = sbr.rel (%p19) target = $region8
    $region5: #{tpu_custom_call.1} parent=1 // loop_body
      %s23 = ssub.s32 %s18, 1
      %s24 = ssub.s32 %s18, 2
      %s25 = sadd.s32 %s18, 1
      %s26 = ssub.s32 %s18, %s25
      %p27 = scmp.eq.s32.totalorder %s26, 0
      %s29 = sadd.s32 %s28, 1
      %s30 = scalar_select %p27, %s28, %s29
      %p33 = pneg %p27
      %p34 = scmp.eq.s32.totalorder %s18, 3
      %p35 = por %p33, %p34
      %p36 = scmp.ne.s32.totalorder %s28, %s31
      %p37 = scmp.eq.s32.totalorder %s18, 0
      %p38 = por %p36, %p37
      %p39 = scmp.ne.s32.totalorder %s28, %s31
      %p40 = scmp.eq.s32.totalorder %s23, 3
      %p41 = por %p39, %p40
      %p42 = scmp.ne.s32.totalorder %s31, %s32
      %p43 = scmp.eq.s32.totalorder %s23, 0
      %p44 = por %p42, %p43
      %p45 = scmp.ne.s32.totalorder %s31, %s32
      %p46 = scmp.eq.s32.totalorder %s24, 3
      %p47 = por %p45, %p46
      %p49 = scmp.ne.s32.totalorder %s32, %s48
      %p50 = scmp.eq.s32.totalorder %s24, 0
      %p51 = por %p49, %p50
      %s53 = sadd.s32 %s52, 1
      %p56 = scmp.eq.s32.totalorder %s18, 3
      %p57 = scmp.ne.s32.totalorder %s52, %s54
      %p58 = scmp.eq.s32.totalorder %s18, 0
      %p59 = por %p57, %p58
      %p60 = scmp.ne.s32.totalorder %s52, %s54
      %p61 = scmp.eq.s32.totalorder %s23, 3
      %p62 = por %p60, %p61
      %p63 = scmp.ne.s32.totalorder %s54, %s55
      %p64 = scmp.eq.s32.totalorder %s23, 0
      %p65 = por %p63, %p64
      %p66 = scmp.ne.s32.totalorder %s54, %s55
      %p67 = scmp.eq.s32.totalorder %s24, 3
      %p68 = por %p66, %p67
      %p70 = scmp.ne.s32.totalorder %s55, %s69
      %p71 = scmp.eq.s32.totalorder %s24, 0
      %p72 = por %p70, %p71
      %s74 = sadd.s32 %s73, 1
      %p77 = scmp.eq.s32.totalorder %s18, 3
      %p78 = scmp.ne.s32.totalorder %s73, %s75
      %p79 = scmp.eq.s32.totalorder %s18, 0
      %p80 = por %p78, %p79
      %p81 = scmp.ne.s32.totalorder %s73, %s75
      %p82 = scmp.eq.s32.totalorder %s23, 3
      %p83 = por %p81, %p82
      %p84 = scmp.ne.s32.totalorder %s75, %s76
      %p85 = scmp.eq.s32.totalorder %s23, 0
      %p86 = por %p84, %p85
      %p87 = scmp.ne.s32.totalorder %s75, %s76
      %p88 = scmp.eq.s32.totalorder %s24, 3
      %p89 = por %p87, %p88
      %p91 = scmp.ne.s32.totalorder %s76, %s90
      %p92 = scmp.eq.s32.totalorder %s24, 0
      %p93 = por %p91, %p92
      %s95 = sadd.s32 %s94, 1
      %p98 = scmp.eq.s32.totalorder %s18, 3
      %p99 = scmp.ne.s32.totalorder %s94, %s96
      %p100 = scmp.eq.s32.totalorder %s18, 0
      %p101 = por %p99, %p100
      %p102 = scmp.ne.s32.totalorder %s94, %s96
      %p103 = scmp.eq.s32.totalorder %s23, 3
      %p104 = por %p102, %p103
      %p105 = scmp.ne.s32.totalorder %s96, %s97
      %p106 = scmp.eq.s32.totalorder %s23, 0
      %p107 = por %p105, %p106
      %p108 = scmp.ne.s32.totalorder %s96, %s97
      %p109 = scmp.eq.s32.totalorder %s24, 3
      %p110 = por %p108, %p109
      %p112 = scmp.ne.s32.totalorder %s97, %s111
      %p113 = scmp.eq.s32.totalorder %s24, 0
      %p114 = por %p112, %p113
      %s116 = sadd.s32 %s115, 1
      %p119 = scmp.eq.s32.totalorder %s18, 3
      %p120 = scmp.ne.s32.totalorder %s115, %s117
      %p121 = scmp.eq.s32.totalorder %s18, 0
      %p122 = por %p120, %p121
      %p123 = scmp.ne.s32.totalorder %s115, %s117
      %p124 = scmp.eq.s32.totalorder %s23, 3
      %p125 = por %p123, %p124
      %p126 = scmp.ne.s32.totalorder %s117, %s118
      %p127 = scmp.eq.s32.totalorder %s23, 0
      %p128 = por %p126, %p127
      %p129 = scmp.ne.s32.totalorder %s117, %s118
      %p130 = scmp.eq.s32.totalorder %s24, 3
      %p131 = por %p129, %p130
      %p133 = scmp.ne.s32.totalorder %s118, %s132
      %p134 = scmp.eq.s32.totalorder %s24, 0
      %p135 = por %p133, %p134
      %s137 = sadd.s32 %s136, 1
      %p140 = scmp.eq.s32.totalorder %s18, 3
      %p141 = scmp.ne.s32.totalorder %s136, %s138
      %p142 = scmp.eq.s32.totalorder %s18, 0
      %p143 = por %p141, %p142
      %p144 = scmp.ne.s32.totalorder %s136, %s138
      %p145 = scmp.eq.s32.totalorder %s23, 3
      %p146 = por %p144, %p145
      %p147 = scmp.ne.s32.totalorder %s138, %s139
      %p148 = scmp.eq.s32.totalorder %s23, 0
      %p149 = por %p147, %p148
      %p150 = scmp.ne.s32.totalorder %s138, %s139
      %p151 = scmp.eq.s32.totalorder %s24, 3
      %p152 = por %p150, %p151
      %p154 = scmp.ne.s32.totalorder %s139, %s153
      %p155 = scmp.eq.s32.totalorder %s24, 0
      %p156 = por %p154, %p155
      %s158 = sadd.s32 %s157, 1
      %p161 = scmp.eq.s32.totalorder %s18, 3
      %p162 = scmp.ne.s32.totalorder %s157, %s159
      %p163 = scmp.eq.s32.totalorder %s18, 0
      %p164 = por %p162, %p163
      %p165 = scmp.ne.s32.totalorder %s157, %s159
      %p166 = scmp.eq.s32.totalorder %s23, 3
      %p167 = por %p165, %p166
      %p168 = scmp.ne.s32.totalorder %s159, %s160
      %p169 = scmp.eq.s32.totalorder %s23, 0
      %p170 = por %p168, %p169
      %p171 = scmp.ne.s32.totalorder %s159, %s160
      %p172 = scmp.eq.s32.totalorder %s24, 3
      %p173 = por %p171, %p172
      %p175 = scmp.ne.s32.totalorder %s160, %s174
      %p176 = scmp.eq.s32.totalorder %s24, 0
      %p177 = por %p175, %p176
      %s179 = sadd.s32 %s178, 1
      %p182 = scmp.eq.s32.totalorder %s18, 3
      %p183 = scmp.ne.s32.totalorder %s178, %s180
      %p184 = scmp.eq.s32.totalorder %s18, 0
      %p185 = por %p183, %p184
      %p186 = scmp.ne.s32.totalorder %s178, %s180
      %p187 = scmp.eq.s32.totalorder %s23, 3
      %p188 = por %p186, %p187
      %p189 = scmp.ne.s32.totalorder %s180, %s181
      %p190 = scmp.eq.s32.totalorder %s23, 0
      %p191 = por %p189, %p190
      %p192 = scmp.ne.s32.totalorder %s180, %s181
      %p193 = scmp.eq.s32.totalorder %s24, 3
      %p194 = por %p192, %p193
      %p196 = scmp.ne.s32.totalorder %s181, %s195
      %p197 = scmp.eq.s32.totalorder %s24, 0
      %p198 = por %p196, %p197
      %s200 = sadd.s32 %s199, 1
      %p203 = scmp.eq.s32.totalorder %s18, 3
      %p204 = scmp.ne.s32.totalorder %s199, %s201
      %p205 = scmp.eq.s32.totalorder %s18, 0
      %p206 = por %p204, %p205
      %p207 = scmp.ne.s32.totalorder %s199, %s201
      %p208 = scmp.eq.s32.totalorder %s23, 3
      %p209 = por %p207, %p208
      %p210 = scmp.ne.s32.totalorder %s201, %s202
      %p211 = scmp.eq.s32.totalorder %s23, 0
      %p212 = por %p210, %p211
      %p213 = scmp.ne.s32.totalorder %s201, %s202
      %p214 = scmp.eq.s32.totalorder %s24, 3
      %p215 = por %p213, %p214
      %p217 = scmp.ne.s32.totalorder %s202, %s216
      %p218 = scmp.eq.s32.totalorder %s24, 0
      %p219 = por %p217, %p218
      %s221 = sadd.s32 %s220, 1
      %p224 = scmp.eq.s32.totalorder %s18, 3
      %p225 = scmp.ne.s32.totalorder %s220, %s222
      %p226 = scmp.eq.s32.totalorder %s18, 0
      %p227 = por %p225, %p226
      %p228 = scmp.ne.s32.totalorder %s220, %s222
      %p229 = scmp.eq.s32.totalorder %s23, 3
      %p230 = por %p228, %p229
      %p231 = scmp.ne.s32.totalorder %s222, %s223
      %p232 = scmp.eq.s32.totalorder %s23, 0
      %p233 = por %p231, %p232
      %p234 = scmp.ne.s32.totalorder %s222, %s223
      %p235 = scmp.eq.s32.totalorder %s24, 3
      %p236 = por %p234, %p235
      %p238 = scmp.ne.s32.totalorder %s223, %s237
      %p239 = scmp.eq.s32.totalorder %s24, 0
      %p240 = por %p238, %p239
      %s242 = sadd.s32 %s241, 1
      %p245 = scmp.eq.s32.totalorder %s18, 3
      %p246 = scmp.ne.s32.totalorder %s241, %s243
      %p247 = scmp.eq.s32.totalorder %s18, 0
      %p248 = por %p246, %p247
      %p249 = scmp.ne.s32.totalorder %s241, %s243
      %p250 = scmp.eq.s32.totalorder %s23, 3
      %p251 = por %p249, %p250
      %p252 = scmp.ne.s32.totalorder %s243, %s244
      %p253 = scmp.eq.s32.totalorder %s23, 0
      %p254 = por %p252, %p253
      %p255 = scmp.ne.s32.totalorder %s243, %s244
      %p256 = scmp.eq.s32.totalorder %s24, 3
      %p257 = por %p255, %p256
      %p259 = scmp.ne.s32.totalorder %s244, %s258
      %p260 = scmp.eq.s32.totalorder %s24, 0
      %p261 = por %p259, %p260
      %s262 = ssub.s32 %s18, %s25
      %p263 = scmp.eq.s32.totalorder %s262, 0
      %s265 = sadd.s32 %s264, 1
      %s266 = scalar_select %p263, %s264, %s265
      %p269 = pneg %p263
      %p270 = scmp.eq.s32.totalorder %s18, 3
      %p271 = por %p269, %p270
      %p272 = scmp.ne.s32.totalorder %s264, %s267
      %p273 = scmp.eq.s32.totalorder %s18, 0
      %p274 = por %p272, %p273
      %p275 = scmp.ne.s32.totalorder %s264, %s267
      %p276 = scmp.eq.s32.totalorder %s23, 3
      %p277 = por %p275, %p276
      %p278 = scmp.ne.s32.totalorder %s267, %s268
      %p279 = scmp.eq.s32.totalorder %s23, 0
      %p280 = por %p278, %p279
      %p281 = scmp.ne.s32.totalorder %s267, %s268
      %p282 = scmp.eq.s32.totalorder %s24, 3
      %p283 = por %p281, %p282
      %p285 = scmp.ne.s32.totalorder %s268, %s284
      %p286 = scmp.eq.s32.totalorder %s24, 0
      %p287 = por %p285, %p286
      %p288 = scmp.le.s32.totalorder 1, %s18
      %p289 = scmp.lt.s32.totalorder %s18, 5
      %p290 = pnand %p288, %p289
      %p291 = pneg %p290
      // Predicated region
      $region9: #{tpu_custom_call.1} parent=5 // pred_check
        _
      $region10: #{tpu_custom_call.1} parent=5 // pred_check_branch
        %293 = sbr.rel (%p290) target = $region12
      $region11: #{tpu_custom_call.1} parent=5 // pred_region
        %s294 = ssub.s32 %s18, 1
        // Predicated region
        $region13: #{tpu_custom_call.1} parent=11 // pred_check
          %p295 = pneg %p65
        $region14: #{tpu_custom_call.1} parent=11 // pred_check_branch
          %297 = sbr.rel (%p295) target = $region16
        $region15: #{tpu_custom_call.1} parent=11 // pred_region
          %s299 = ssub.s32 128, 128
          %300 = vsyncadd [#allocation3], %s299
          %s302 = sshll.u32 [#allocation2], 4
          %s303 = int_to_ptr.vmem [resolvable:$true] %s302
          %305 = dma.hbm_to_vmem [thread:$0]  %s1, 128, %s303, [#allocation3]
        $region16: #{tpu_custom_call.1} parent=11 // pred_fallthru
          _
        // Predicated region
        $region17: #{tpu_custom_call.1} parent=11 // pred_check
          %p306 = pneg %p86
        $region18: #{tpu_custom_call.1} parent=11 // pred_check_branch
          %308 = sbr.rel (%p306) target = $region20
        $region19: #{tpu_custom_call.1} parent=11 // pred_region
          _
        $region20: #{tpu_custom_call.1} parent=11 // pred_fallthru
          _
        // Predicated region
        $region21: #{tpu_custom_call.1} parent=11 // pred_check
          %p309 = pneg %p107
        $region22: #{tpu_custom_call.1} parent=11 // pred_check_branch
          %311 = sbr.rel (%p309) target = $region24
        $region23: #{tpu_custom_call.1} parent=11 // pred_region
          _
        $region24: #{tpu_custom_call.1} parent=11 // pred_fallthru
          _
        // Predicated region
        $region25: #{tpu_custom_call.1} parent=11 // pred_check
          %p312 = pneg %p128
        $region26: #{tpu_custom_call.1} parent=11 // pred_check_branch
          %314 = sbr.rel (%p312) target = $region28
        $region27: #{tpu_custom_call.1} parent=11 // pred_region
          _
        $region28: #{tpu_custom_call.1} parent=11 // pred_fallthru
          _
        // Predicated region
        $region29: #{tpu_custom_call.1} parent=11 // pred_check
          %p315 = pneg %p149
        $region30: #{tpu_custom_call.1} parent=11 // pred_check_branch
          %317 = sbr.rel (%p315) target = $region32
        $region31: #{tpu_custom_call.1} parent=11 // pred_region
          _
        $region32: #{tpu_custom_call.1} parent=11 // pred_fallthru
          _
        // Predicated region
        $region33: #{tpu_custom_call.1} parent=11 // pred_check
          %p318 = pneg %p170
        $region34: #{tpu_custom_call.1} parent=11 // pred_check_branch
          %320 = sbr.rel (%p318) target = $region36
        $region35: #{tpu_custom_call.1} parent=11 // pred_region
          _
        $region36: #{tpu_custom_call.1} parent=11 // pred_fallthru
          _
        // Predicated region
        $region37: #{tpu_custom_call.1} parent=11 // pred_check
          %p321 = pneg %p191
        $region38: #{tpu_custom_call.1} parent=11 // pred_check_branch
          %323 = sbr.rel (%p321) target = $region40
        $region39: #{tpu_custom_call.1} parent=11 // pred_region
          _
        $region40: #{tpu_custom_call.1} parent=11 // pred_fallthru
          _
        // Predicated region
        $region41: #{tpu_custom_call.1} parent=11 // pred_check
          %p324 = pneg %p212
        $region42: #{tpu_custom_call.1} parent=11 // pred_check_branch
          %326 = sbr.rel (%p324) target = $region44
        $region43: #{tpu_custom_call.1} parent=11 // pred_region
          _
        $region44: #{tpu_custom_call.1} parent=11 // pred_fallthru
          _
        // Predicated region
        $region45: #{tpu_custom_call.1} parent=11 // pred_check
          %p327 = pneg %p233
        $region46: #{tpu_custom_call.1} parent=11 // pred_check_branch
          %329 = sbr.rel (%p327) target = $region48
        $region47: #{tpu_custom_call.1} parent=11 // pred_region
          _
        $region48: #{tpu_custom_call.1} parent=11 // pred_fallthru
          _
        // Predicated region
        $region49: #{tpu_custom_call.1} parent=11 // pred_check
          %p330 = pneg %p254
        $region50: #{tpu_custom_call.1} parent=11 // pred_check_branch
          %332 = sbr.rel (%p330) target = $region52
        $region51: #{tpu_custom_call.1} parent=11 // pred_region
          _
        $region52: #{tpu_custom_call.1} parent=11 // pred_fallthru
          _
      $region12: #{tpu_custom_call.1} parent=5 // pred_fallthru
        _
      %p333 = scmp.lt.s32.totalorder %s18, 4
      // Predicated region
      $region53: #{tpu_custom_call.1} parent=5 // pred_check
        %p334 = pneg %p333
      $region54: #{tpu_custom_call.1} parent=5 // pred_check_branch
        %336 = sbr.rel (%p334) target = $region56
      $region55: #{tpu_custom_call.1} parent=5 // pred_region
        // Predicated region
        $region57: #{tpu_custom_call.1} parent=55 // pred_check
          %p337 = pneg %p38
        $region58: #{tpu_custom_call.1} parent=55 // pred_check_branch
          %339 = sbr.rel (%p337) target = $region60
        $region59: #{tpu_custom_call.1} parent=55 // pred_region
          %s340 = smul.u32 2, %s18
          %p341 = scmp.lt.s32.totalorder %s340, 7
          %s342 = scalar_select %p341, %s340, 7
          %s343 = smul.addr %s342, 8
          %s344 = scalar_lea.vmem %s0, %s343
          %s345 = smul.u32 2, %s18
        $region60: #{tpu_custom_call.1} parent=55 // pred_fallthru
          _
      $region56: #{tpu_custom_call.1} parent=5 // pred_fallthru
        _
      %p346 = scmp.le.s32.totalorder 1, %s18
      %p347 = scmp.lt.s32.totalorder %s18, 5
      %p348 = pnand %p346, %p347
      %p349 = pneg %p348
      // Predicated region
      $region61: #{tpu_custom_call.1} parent=5 // pred_check
        _
      $region62: #{tpu_custom_call.1} parent=5 // pred_check_branch
        %351 = sbr.rel (%p348) target = $region64
      $region63: #{tpu_custom_call.1} parent=5 // pred_region
        %s352 = ssub.s32 %s18, 1
        // Predicated region
        $region65: #{tpu_custom_call.1} parent=63 // pred_check
          %p353 = pneg %p65
        $region66: #{tpu_custom_call.1} parent=63 // pred_check_branch
          %355 = sbr.rel (%p353) target = $region68
        $region67: #{tpu_custom_call.1} parent=63 // pred_region
          %356 = dma.done [#allocation3], 128
        $region68: #{tpu_custom_call.1} parent=63 // pred_fallthru
          _
        %s357 = smul.u32 2, %s23
        %p358 = scmp.lt.s32.totalorder %s357, 7
        %s359 = scalar_select %p358, %s357, 7
        %s360 = smul.addr %s359, 8
        %s361 = scalar_lea.vmem %s0, %s360
        %p362 = pneg %p44
        %p363 = pneg %p41
        %p364 = pneg %p65
        %p365 = pneg %p62
        %p366 = pneg %p86
        %p367 = pneg %p83
        %p368 = pneg %p107
        %p369 = pneg %p104
        %p370 = pneg %p128
        %p371 = pneg %p125
        %p372 = pneg %p149
        %p373 = pneg %p146
        %p374 = pneg %p170
        %p375 = pneg %p167
        %p376 = pneg %p191
        %p377 = pneg %p188
        %p378 = pneg %p212
        %p379 = pneg %p209
        %p380 = pneg %p233
        %p381 = pneg %p230
        %p382 = pneg %p254
        %p383 = pneg %p251
        %p384 = pneg %p280
        %p385 = pneg %p277
        %s386 = smul.u32 2, %s23
        %p387 = scmp.lt.s32.totalorder %s386, 7
        %s388 = scalar_select %p387, %s386, 7
        %s389 = smul.addr %s388, 8
        %s390 = scalar_lea.vmem %s11, %s389
        %s391 = smul.u32 2, %s23
        %p392 = scmp.lt.s32.totalorder %s391, 7
        %s393 = scalar_select %p392, %s391, 7
        %s394 = smul.addr %s393, 8
        %s395 = scalar_lea.vmem %s0, %s394
        %s396 = smul.u32 2, %s23
        %s397 = smul.u32 2, %s23
        %p398 = scmp.lt.s32.totalorder %s397, 7
        %s399 = scalar_select %p398, %s397, 7
        %s400 = smul.addr %s399, 8
        %s401 = scalar_lea.vmem %s11, %s400
        %s402 = smul.u32 2, %s23
        %v404 = vld [vmem:[#allocation2] sm:$0xff]
        %v405 = vld [vmem:[%s395] sm:$0xff]
        %v406 = vld [vmem:[%s395 + $0x8] sm:$0xff]
        %v407 = vadd.f32 %v405, %v404
        %v408 = vadd.f32 %v406, %v404
        %v409 = vlaneseq
        %v410 = vshrl.u32 %v409, 7
        %v411 = vlaneseq
        %v412 = vand.u32 %v411, 127
        %vm413 = vcmp.ge.s32.totalorder %v410, %v412
        %v414 = vld [vmem:[%s4] sm:$0x1]
        %v415 = vld [vmem:[%s5] sm:$0x1]
        %v416 = vld [vmem:[%s6] sm:$0x1]
        %v417 = vld [vmem:[%s7] sm:$0xf]
        %v418 = vld [vmem:[%s7 + $0x4] sm:$0xf]
        %v419 = vld [vmem:[%s7 + $0x8] sm:$0xf]
        %v420 = vld [vmem:[%s7 + $0xc] sm:$0xf]
        %v421 = vld [vmem:[%s8] sm:$0x1]
        %v422 = vld [vmem:[%s9] sm:$0xf]
        %v423 = vld [vmem:[%s9 + $0x4] sm:$0xf]
        %v424 = vld [vmem:[%s9 + $0x8] sm:$0xf]
        %v425 = vld [vmem:[%s9 + $0xc] sm:$0xf]
        %v426 = vld [vmem:[%s9 + $0x10] sm:$0xf]
        %v427 = vld [vmem:[%s9 + $0x14] sm:$0xf]
        %v428 = vld [vmem:[%s9 + $0x18] sm:$0xf]
        %v429 = vld [vmem:[%s9 + $0x1c] sm:$0xf]
        %v430 = vld [vmem:[%s10] sm:$0x1]
        %v431 = vpack.c.bf16 %v408, %v407
        %v433 = vcombine.high %v431, %v431
        %v435 = vunpack.c.l.s4 1983009808
        %v436 = vunpack.c.0.s8 %v435
        %v437 = vlaneseq
        %v438 = vshrl.u32 %v437, 7
        %v439 = vsub.s32 %v436, %v438
        %v440 = vrot.slane %v431, %v439
        %v442 = vunpack.c.l.s4 1983009808
        %v443 = vunpack.c.0.s8 %v442
        %v444 = vlaneseq
        %v445 = vshrl.u32 %v444, 7
        %v446 = vsub.s32 %v443, %v445
        %v447 = vrot.slane %v433, %v446
        %v448 = vcombine.high %v440, %v440
        %v449 = vcombine.high %v447, %v447
        %v450 = vld [vmem:[%s2] sm:$0xf]
        %v451 = vld [vmem:[%s2 + $0x4] sm:$0xf]
        %v452 = vld [vmem:[%s2 + $0x8] sm:$0xf]
        %v453 = vld [vmem:[%s2 + $0xc] sm:$0xf]
        %v454 = vld [vmem:[%s3] sm:$0xf]
        %v455 = vld [vmem:[%s3 + $0x4] sm:$0xf]
        %v456 = vld [vmem:[%s3 + $0x8] sm:$0xf]
        %v457 = vld [vmem:[%s3 + $0xc] sm:$0xf]
        %v462 = vunpack.c.l.b16 %v450
        %v463 = vunpack.c.l.b16 %v451
        %v464 = vunpack.c.l.b16 %v452
        %v465 = vunpack.c.l.b16 %v453
        %v466 = vpack.c.b16 %v463, %v462
        %v467 = vpack.c.b16 %v465, %v464
        %vm470 = vcmask 261120
        %v472 = vsel %vm470, %v431, 0
        %474 = vmatprep.subr.bf16.mxu0 0
        %475 = vmatpush1.bf16.msra.mxu0 %v466
        %476 = vmatprep.subr.bf16.mxu0 0
        %477 = vmatpush1.bf16.msra.mxu0 %v467
        %478 = vmatprep.subr.bf16.mxu0 0
        %479 = vmatpush1.bf16.msra.mxu0 0
        %480 = vmatprep.subr.bf16.mxu0 0
        %481 = vmatpush1.bf16.msra.mxu0 0
        %482 = vmatprep.subr.bf16.mxu0 0
        %483 = vmatpush1.bf16.msra.mxu0 0
        %484 = vmatprep.subr.bf16.mxu0 0
        %485 = vmatpush1.bf16.msra.mxu0 0
        %486 = vmatprep.subr.bf16.mxu0 0
        %487 = vmatpush1.bf16.msra.mxu0 0
        %488 = vmatprep.subr.bf16.mxu0 0
        %489 = vmatpush1.bf16.msra.mxu0 0
        %490 = vmatprep.subr.bf16.mxu0 0
        %491 = vmatpush1.bf16.msra.mxu0 0
        %492 = vmatprep.subr.bf16.mxu0 0
        %493 = vmatpush1.bf16.msra.mxu0 0
        %494 = vmatprep.subr.bf16.mxu0 0
        %495 = vmatpush1.bf16.msra.mxu0 0
        %496 = vmatprep.subr.bf16.mxu0 0
        %497 = vmatpush1.bf16.msra.mxu0 0
        %498 = vmatprep.subr.bf16.mxu0 0
        %499 = vmatpush1.bf16.msra.mxu0 0
        %500 = vmatprep.subr.bf16.mxu0 0
        %501 = vmatpush1.bf16.msra.mxu0 0
        %502 = vmatprep.subr.bf16.mxu0 0
        %503 = vmatpush1.bf16.msra.mxu0 0
        %504 = vmatprep.subr.bf16.mxu0 0
        %505 = vmatpush1.bf16.msra.mxu0 0
        %506 = vmatprep.mubr.bf16.mxu0 0
        %507 = vmatmul.mubr.bf16.gmra.mrb[0].mxu0 %v472
        %v508 = vpop.f32.mrb[0].mxu0
        %v509 = vadd.f32 0.0, %v508
        %v510 = vpop.f32.mrb[0].mxu0
        %v511 = vpop.f32.mrb[0].mxu0
        %v512 = vadd.f32 0.0, %v511
        %v513 = vpop.f32.mrb[0].mxu0
        %514 = vdwg.mxu0
        %v517 = vcombine.high %v509, %v509
        %v518 = vcombine.high %v512, %v512
        %v521 = vpack.c.bf16 %v509, %v509
        %v522 = vpack.c.bf16 %v517, %v517
        %v523 = vpack.c.bf16 %v512, %v512
        %v524 = vpack.c.bf16 %v518, %v518
        %v526 = vsel %vm470, %v521, 0
        %v529 = vsel %vm470, %v440, 0
        %531 = vmatprep.subr.bf16.mxu0 0
        %532 = vmatpush1.bf16.xpose.msra.mxu0 %v529
        %533 = vmatprep.subr.bf16.mxu0 0
        %534 = vmatpush1.bf16.xpose.msra.mxu0 0
        %535 = vmatprep.subr.bf16.mxu0 0
        %536 = vmatpush1.bf16.xpose.msra.mxu0 0
        %537 = vmatprep.subr.bf16.mxu0 0
        %538 = vmatpush1.bf16.xpose.msra.mxu0 0
        %539 = vmatprep.subr.bf16.mxu0 0
        %540 = vmatpush1.bf16.xpose.msra.mxu0 0
        %541 = vmatprep.subr.bf16.mxu0 0
        %542 = vmatpush1.bf16.xpose.msra.mxu0 0
        %543 = vmatprep.subr.bf16.mxu0 0
        %544 = vmatpush1.bf16.xpose.msra.mxu0 0
        %545 = vmatprep.subr.bf16.mxu0 0
        %546 = vmatpush1.bf16.xpose.msra.mxu0 0
        %547 = vmatprep.subr.bf16.mxu0 0
        %548 = vmatpush1.bf16.xpose.msra.mxu0 0
        %549 = vmatprep.subr.bf16.mxu0 0
        %550 = vmatpush1.bf16.xpose.msra.mxu0 0
        %551 = vmatprep.subr.bf16.mxu0 0
        %552 = vmatpush1.bf16.xpose.msra.mxu0 0
        %553 = vmatprep.subr.bf16.mxu0 0
        %554 = vmatpush1.bf16.xpose.msra.mxu0 0
        %555 = vmatprep.subr.bf16.mxu0 0
        %556 = vmatpush1.bf16.xpose.msra.mxu0 0
        %557 = vmatprep.subr.bf16.mxu0 0
        %558 = vmatpush1.bf16.xpose.msra.mxu0 0
        %559 = vmatprep.subr.bf16.mxu0 0
        %560 = vmatpush1.bf16.xpose.msra.mxu0 0
        %561 = vmatprep.subr.bf16.mxu0 0
        %562 = vmatpush1.bf16.xpose.msra.mxu0 0
        %563 = vmatprep.mubr.bf16.mxu0 0
        %564 = vmatmul.mubr.bf16.gmra.mrb[0].mxu0 %v526
        %v565 = vpop.f32.mrb[0].mxu0
        %v566 = vadd.f32 0.0, %v565
        %v567 = vpop.f32.mrb[0].mxu0
        %v568 = vpop.f32.mrb[0].mxu0
        %v569 = vpop.f32.mrb[0].mxu0
        %570 = vdwg.mxu0
        %v572 = vsel %vm470, %v522, 0
        %v575 = vsel %vm470, %v448, 0
        %577 = vmatprep.subr.bf16.mxu0 0
        %578 = vmatpush1.bf16.xpose.msra.mxu0 %v575
        %579 = vmatprep.subr.bf16.mxu0 0
        %580 = vmatpush1.bf16.xpose.msra.mxu0 0
        %581 = vmatprep.subr.bf16.mxu0 0
        %582 = vmatpush1.bf16.xpose.msra.mxu0 0
        %583 = vmatprep.subr.bf16.mxu0 0
        %584 = vmatpush1.bf16.xpose.msra.mxu0 0
        %585 = vmatprep.subr.bf16.mxu0 0
        %586 = vmatpush1.bf16.xpose.msra.mxu0 0
        %587 = vmatprep.subr.bf16.mxu0 0
        %588 = vmatpush1.bf16.xpose.msra.mxu0 0
        %589 = vmatprep.subr.bf16.mxu0 0
        %590 = vmatpush1.bf16.xpose.msra.mxu0 0
        %591 = vmatprep.subr.bf16.mxu0 0
        %592 = vmatpush1.bf16.xpose.msra.mxu0 0
        %593 = vmatprep.subr.bf16.mxu0 0
        %594 = vmatpush1.bf16.xpose.msra.mxu0 0
        %595 = vmatprep.subr.bf16.mxu0 0
        %596 = vmatpush1.bf16.xpose.msra.mxu0 0
        %597 = vmatprep.subr.bf16.mxu0 0
        %598 = vmatpush1.bf16.xpose.msra.mxu0 0
        %599 = vmatprep.subr.bf16.mxu0 0
        %600 = vmatpush1.bf16.xpose.msra.mxu0 0
        %601 = vmatprep.subr.bf16.mxu0 0
        %602 = vmatpush1.bf16.xpose.msra.mxu0 0
        %603 = vmatprep.subr.bf16.mxu0 0
        %604 = vmatpush1.bf16.xpose.msra.mxu0 0
        %605 = vmatprep.subr.bf16.mxu0 0
        %606 = vmatpush1.bf16.xpose.msra.mxu0 0
        %607 = vmatprep.subr.bf16.mxu0 0
        %608 = vmatpush1.bf16.xpose.msra.mxu0 0
        %609 = vmatprep.mubr.bf16.mxu0 0
        %610 = vmatmul.mubr.bf16.gmra.mrb[0].mxu0 %v572
        %v611 = vpop.f32.mrb[0].mxu0
        %v612 = vadd.f32 0.0, %v611
        %v613 = vpop.f32.mrb[0].mxu0
        %v614 = vpop.f32.mrb[0].mxu0
        %v615 = vpop.f32.mrb[0].mxu0
        %616 = vdwg.mxu0
        %v618 = vsel %vm470, %v523, 0
        %v621 = vsel %vm470, %v447, 0
        %623 = vmatprep.subr.bf16.mxu0 0
        %624 = vmatpush1.bf16.xpose.msra.mxu0 %v621
        %625 = vmatprep.subr.bf16.mxu0 0
        %626 = vmatpush1.bf16.xpose.msra.mxu0 0
        %627 = vmatprep.subr.bf16.mxu0 0
        %628 = vmatpush1.bf16.xpose.msra.mxu0 0
        %629 = vmatprep.subr.bf16.mxu0 0
        %630 = vmatpush1.bf16.xpose.msra.mxu0 0
        %631 = vmatprep.subr.bf16.mxu0 0
        %632 = vmatpush1.bf16.xpose.msra.mxu0 0
        %633 = vmatprep.subr.bf16.mxu0 0
        %634 = vmatpush1.bf16.xpose.msra.mxu0 0
        %635 = vmatprep.subr.bf16.mxu0 0
        %636 = vmatpush1.bf16.xpose.msra.mxu0 0
        %637 = vmatprep.subr.bf16.mxu0 0
        %638 = vmatpush1.bf16.xpose.msra.mxu0 0
        %639 = vmatprep.subr.bf16.mxu0 0
        %640 = vmatpush1.bf16.xpose.msra.mxu0 0
        %641 = vmatprep.subr.bf16.mxu0 0
        %642 = vmatpush1.bf16.xpose.msra.mxu0 0
        %643 = vmatprep.subr.bf16.mxu0 0
        %644 = vmatpush1.bf16.xpose.msra.mxu0 0
        %645 = vmatprep.subr.bf16.mxu0 0
        %646 = vmatpush1.bf16.xpose.msra.mxu0 0
        %647 = vmatprep.subr.bf16.mxu0 0
        %648 = vmatpush1.bf16.xpose.msra.mxu0 0
        %649 = vmatprep.subr.bf16.mxu0 0
        %650 = vmatpush1.bf16.xpose.msra.mxu0 0
        %651 = vmatprep.subr.bf16.mxu0 0
        %652 = vmatpush1.bf16.xpose.msra.mxu0 0
        %653 = vmatprep.subr.bf16.mxu0 0
        %654 = vmatpush1.bf16.xpose.msra.mxu0 0
        %655 = vmatprep.mubr.bf16.mxu0 0
        %656 = vmatmul.mubr.bf16.gmra.mrb[0].mxu0 %v618
        %v657 = vpop.f32.mrb[0].mxu0
        %v658 = vadd.f32 0.0, %v657
        %v659 = vpop.f32.mrb[0].mxu0
        %v660 = vpop.f32.mrb[0].mxu0
        %v661 = vpop.f32.mrb[0].mxu0
        %662 = vdwg.mxu0
        %v664 = vsel %vm470, %v524, 0
        %v667 = vsel %vm470, %v449, 0
        %669 = vmatprep.subr.bf16.mxu0 0
        %670 = vmatpush1.bf16.xpose.msra.mxu0 %v667
        %671 = vmatprep.subr.bf16.mxu0 0
        %672 = vmatpush1.bf16.xpose.msra.mxu0 0
        %673 = vmatprep.subr.bf16.mxu0 0
        %674 = vmatpush1.bf16.xpose.msra.mxu0 0
        %675 = vmatprep.subr.bf16.mxu0 0
        %676 = vmatpush1.bf16.xpose.msra.mxu0 0
        %677 = vmatprep.subr.bf16.mxu0 0
        %678 = vmatpush1.bf16.xpose.msra.mxu0 0
        %679 = vmatprep.subr.bf16.mxu0 0
        %680 = vmatpush1.bf16.xpose.msra.mxu0 0
        %681 = vmatprep.subr.bf16.mxu0 0
        %682 = vmatpush1.bf16.xpose.msra.mxu0 0
        %683 = vmatprep.subr.bf16.mxu0 0
        %684 = vmatpush1.bf16.xpose.msra.mxu0 0
        %685 = vmatprep.subr.bf16.mxu0 0
        %686 = vmatpush1.bf16.xpose.msra.mxu0 0
        %687 = vmatprep.subr.bf16.mxu0 0
        %688 = vmatpush1.bf16.xpose.msra.mxu0 0
        %689 = vmatprep.subr.bf16.mxu0 0
        %690 = vmatpush1.bf16.xpose.msra.mxu0 0
        %691 = vmatprep.subr.bf16.mxu0 0
        %692 = vmatpush1.bf16.xpose.msra.mxu0 0
        %693 = vmatprep.subr.bf16.mxu0 0
        %694 = vmatpush1.bf16.xpose.msra.mxu0 0
        %695 = vmatprep.subr.bf16.mxu0 0
        %696 = vmatpush1.bf16.xpose.msra.mxu0 0
        %697 = vmatprep.subr.bf16.mxu0 0
        %698 = vmatpush1.bf16.xpose.msra.mxu0 0
        %699 = vmatprep.subr.bf16.mxu0 0
        %700 = vmatpush1.bf16.xpose.msra.mxu0 0
        %701 = vmatprep.mubr.bf16.mxu0 0
        %702 = vmatmul.mubr.bf16.gmra.mrb[0].mxu0 %v664
        %v703 = vpop.f32.mrb[0].mxu0
        %v704 = vadd.f32 0.0, %v703
        %v705 = vpop.f32.mrb[0].mxu0
        %v706 = vpop.f32.mrb[0].mxu0
        %v707 = vpop.f32.mrb[0].mxu0
        %708 = vdwg.mxu0
        %v709 = vsel %vm413, 1, 0
        %vm710 = vcmp.eq.s32.totalorder %v709, 1
        %v711 = vsel %vm710, %v566, -1e+30
        %v712 = vsel %vm710, %v612, -1e+30
        %v713 = vsel %vm710, %v658, -1e+30
        %v714 = vsel %vm710, %v704, -1e+30
        %vm715 = vcmask 27648
        %v716 = vsel %vm715, %v711, -inf
        %717 = vmax.xlane.f32.xlu0 %v716
        %v718 = vpop.xlane.xlu0 %717
        %v719 = vsel %vm715, %v712, -inf
        %720 = vmax.xlane.f32.xlu0 %v719
        %v721 = vpop.xlane.xlu0 %720
        %v722 = vsel %vm715, %v713, -inf
        %723 = vmax.xlane.f32.xlu0 %v722
        %v724 = vpop.xlane.xlu0 %723
        %v725 = vsel %vm715, %v714, -inf
        %726 = vmax.xlane.f32.xlu0 %v725
        %v727 = vpop.xlane.xlu0 %726
        %v728 = vsub.f32 %v711, %v718
        %v729 = vsub.f32 %v712, %v721
        %v730 = vsub.f32 %v713, %v724
        %v731 = vsub.f32 %v714, %v727
        %v732 = vmul.f32 %v728, 1.442695
        %v733 = vpow.pop %v732
        %v734 = vmul.f32 %v729, 1.442695
        %v735 = vpow.pop %v734
        %v736 = vmul.f32 %v730, 1.442695
        %v737 = vpow.pop %v736
        %v738 = vmul.f32 %v731, 1.442695
        %v739 = vpow.pop %v738
        %v740 = vsel %vm715, %v733, 0.0
        %741 = vadd.xlane.f32.xlu0 %v740
        %v742 = vpop.xlane.xlu0 %741
        %v743 = vsel %vm715, %v735, 0.0
        %744 = vadd.xlane.f32.xlu0 %v743
        %v745 = vpop.xlane.xlu0 %744
        %v746 = vsel %vm715, %v737, 0.0
        %747 = vadd.xlane.f32.xlu0 %v746
        %v748 = vpop.xlane.xlu0 %747
        %v749 = vsel %vm715, %v739, 0.0
        %750 = vadd.xlane.f32.xlu0 %v749
        %v751 = vpop.xlane.xlu0 %750
        %v752 = vrcp.pop %v742
        %v753 = vrcp.pop %v745
        %v754 = vrcp.pop %v748
        %v755 = vrcp.pop %v751
        %v756 = vmul.f32 %v733, %v752
        %v757 = vmul.f32 %v735, %v753
        %v758 = vmul.f32 %v737, %v754
        %v759 = vmul.f32 %v739, %v755
        %v764 = vunpack.c.l.b16 %v454
        %v765 = vunpack.c.l.b16 %v455
        %v766 = vunpack.c.l.b16 %v456
        %v767 = vunpack.c.l.b16 %v457
        %v768 = vpack.c.b16 %v765, %v764
        %v769 = vpack.c.b16 %v767, %v766
        %772 = vmatprep.subr.bf16.mxu0 0
        %773 = vmatpush1.bf16.msra.mxu0 %v768
        %774 = vmatprep.subr.bf16.mxu0 0
        %775 = vmatpush1.bf16.msra.mxu0 %v769
        %776 = vmatprep.subr.bf16.mxu0 0
        %777 = vmatpush1.bf16.msra.mxu0 0
        %778 = vmatprep.subr.bf16.mxu0 0
        %779 = vmatpush1.bf16.msra.mxu0 0
        %780 = vmatprep.subr.bf16.mxu0 0
        %781 = vmatpush1.bf16.msra.mxu0 0
        %782 = vmatprep.subr.bf16.mxu0 0
        %783 = vmatpush1.bf16.msra.mxu0 0
        %784 = vmatprep.subr.bf16.mxu0 0
        %785 = vmatpush1.bf16.msra.mxu0 0
        %786 = vmatprep.subr.bf16.mxu0 0
        %787 = vmatpush1.bf16.msra.mxu0 0
        %788 = vmatprep.subr.bf16.mxu0 0
        %789 = vmatpush1.bf16.msra.mxu0 0
        %790 = vmatprep.subr.bf16.mxu0 0
        %791 = vmatpush1.bf16.msra.mxu0 0
        %792 = vmatprep.subr.bf16.mxu0 0
        %793 = vmatpush1.bf16.msra.mxu0 0
        %794 = vmatprep.subr.bf16.mxu0 0
        %795 = vmatpush1.bf16.msra.mxu0 0
        %796 = vmatprep.subr.bf16.mxu0 0
        %797 = vmatpush1.bf16.msra.mxu0 0
        %798 = vmatprep.subr.bf16.mxu0 0
        %799 = vmatpush1.bf16.msra.mxu0 0
        %800 = vmatprep.subr.bf16.mxu0 0
        %801 = vmatpush1.bf16.msra.mxu0 0
        %802 = vmatprep.subr.bf16.mxu0 0
        %803 = vmatpush1.bf16.msra.mxu0 0
        %804 = vmatprep.mubr.bf16.mxu0 0
        %805 = vmatmul.mubr.bf16.gmra.mrb[0].mxu0 %v472
        %v806 = vpop.f32.mrb[0].mxu0
        %v807 = vadd.f32 0.0, %v806
        %v808 = vpop.f32.mrb[0].mxu0
        %v809 = vpop.f32.mrb[0].mxu0
        %v810 = vadd.f32 0.0, %v809
        %v811 = vpop.f32.mrb[0].mxu0
        %812 = vdwg.mxu0
        %v815 = vcombine.high %v807, %v807
        %v816 = vcombine.high %v810, %v810
        %v819 = vpack.c.bf16 %v807, %v807
        %v820 = vpack.c.bf16 %v815, %v815
        %v821 = vpack.c.bf16 %v810, %v810
        %v822 = vpack.c.bf16 %v816, %v816
        %v823 = vpack.c.bf16 %v756, %v756
        %v824 = vpack.c.bf16 %v757, %v757
        %v825 = vpack.c.bf16 %v758, %v758
        %v826 = vpack.c.bf16 %v759, %v759
        %s827 = scalar_lea.vmem %s2, 16
        %v828 = vld [vmem:[%s827] sm:$0xf]
        %v829 = vld [vmem:[%s827 + $0x4] sm:$0xf]
        %v830 = vld [vmem:[%s827 + $0x8] sm:$0xf]
        %v831 = vld [vmem:[%s827 + $0xc] sm:$0xf]
        %s832 = scalar_lea.vmem %s3, 16
        %v833 = vld [vmem:[%s832] sm:$0xf]
        %v834 = vld [vmem:[%s832 + $0x4] sm:$0xf]
        %v835 = vld [vmem:[%s832 + $0x8] sm:$0xf]
        %v836 = vld [vmem:[%s832 + $0xc] sm:$0xf]
        %v841 = vunpack.c.l.b16 %v828
        %v842 = vunpack.c.l.b16 %v829
        %v843 = vunpack.c.l.b16 %v830
        %v844 = vunpack.c.l.b16 %v831
        %v845 = vpack.c.b16 %v842, %v841
        %v846 = vpack.c.b16 %v844, %v843
        %849 = vmatprep.subr.bf16.mxu0 0
        %850 = vmatpush1.bf16.msra.mxu0 %v845
        %851 = vmatprep.subr.bf16.mxu0 0
        %852 = vmatpush1.bf16.msra.mxu0 %v846
        %853 = vmatprep.subr.bf16.mxu0 0
        %854 = vmatpush1.bf16.msra.mxu0 0
        %855 = vmatprep.subr.bf16.mxu0 0
        %856 = vmatpush1.bf16.msra.mxu0 0
        %857 = vmatprep.subr.bf16.mxu0 0
        %858 = vmatpush1.bf16.msra.mxu0 0
        %859 = vmatprep.subr.bf16.mxu0 0
        %860 = vmatpush1.bf16.msra.mxu0 0
        %861 = vmatprep.subr.bf16.mxu0 0
        %862 = vmatpush1.bf16.msra.mxu0 0
        %863 = vmatprep.subr.bf16.mxu0 0
        %864 = vmatpush1.bf16.msra.mxu0 0
        %865 = vmatprep.subr.bf16.mxu0 0
        %866 = vmatpush1.bf16.msra.mxu0 0
        %867 = vmatprep.subr.bf16.mxu0 0
        %868 = vmatpush1.bf16.msra.mxu0 0
        %869 = vmatprep.subr.bf16.mxu0 0
        %870 = vmatpush1.bf16.msra.mxu0 0
        %871 = vmatprep.subr.bf16.mxu0 0
        %872 = vmatpush1.bf16.msra.mxu0 0
        %873 = vmatprep.subr.bf16.mxu0 0
        %874 = vmatpush1.bf16.msra.mxu0 0
        %875 = vmatprep.subr.bf16.mxu0 0
        %876 = vmatpush1.bf16.msra.mxu0 0
        %877 = vmatprep.subr.bf16.mxu0 0
        %878 = vmatpush1.bf16.msra.mxu0 0
        %879 = vmatprep.subr.bf16.mxu0 0
        %880 = vmatpush1.bf16.msra.mxu0 0
        %881 = vmatprep.mubr.bf16.mxu0 0
        %882 = vmatmul.mubr.bf16.gmra.mrb[0].mxu0 %v472
        %v883 = vpop.f32.mrb[0].mxu0
        %v884 = vadd.f32 0.0, %v883
        %v885 = vpop.f32.mrb[0].mxu0
        %v886 = vpop.f32.mrb[0].mxu0
        %v887 = vadd.f32 0.0, %v886
        %v888 = vpop.f32.mrb[0].mxu0
        %889 = vdwg.mxu0
        %v892 = vcombine.high %v884, %v884
        %v893 = vcombine.high %v887, %v887
        %v896 = vpack.c.bf16 %v884, %v884
        %v897 = vpack.c.bf16 %v892, %v892
        %v898 = vpack.c.bf16 %v887, %v887
        %v899 = vpack.c.bf16 %v893, %v893
        %v901 = vsel %vm470, %v896, 0
        %903 = vmatprep.subr.bf16.mxu0 0
        %904 = vmatpush1.bf16.xpose.msra.mxu0 %v529
        %905 = vmatprep.subr.bf16.mxu0 0
        %906 = vmatpush1.bf16.xpose.msra.mxu0 0
        %907 = vmatprep.subr.bf16.mxu0 0
        %908 = vmatpush1.bf16.xpose.msra.mxu0 0
        %909 = vmatprep.subr.bf16.mxu0 0
        %910 = vmatpush1.bf16.xpose.msra.mxu0 0
        %911 = vmatprep.subr.bf16.mxu0 0
        %912 = vmatpush1.bf16.xpose.msra.mxu0 0
        %913 = vmatprep.subr.bf16.mxu0 0
        %914 = vmatpush1.bf16.xpose.msra.mxu0 0
        %915 = vmatprep.subr.bf16.mxu0 0
        %916 = vmatpush1.bf16.xpose.msra.mxu0 0
        %917 = vmatprep.subr.bf16.mxu0 0
        %918 = vmatpush1.bf16.xpose.msra.mxu0 0
        %919 = vmatprep.subr.bf16.mxu0 0
        %920 = vmatpush1.bf16.xpose.msra.mxu0 0
        %921 = vmatprep.subr.bf16.mxu0 0
        %922 = vmatpush1.bf16.xpose.msra.mxu0 0
        %923 = vmatprep.subr.bf16.mxu0 0
        %924 = vmatpush1.bf16.xpose.msra.mxu0 0
        %925 = vmatprep.subr.bf16.mxu0 0
        %926 = vmatpush1.bf16.xpose.msra.mxu0 0
        %927 = vmatprep.subr.bf16.mxu0 0
        %928 = vmatpush1.bf16.xpose.msra.mxu0 0
        %929 = vmatprep.subr.bf16.mxu0 0
        %930 = vmatpush1.bf16.xpose.msra.mxu0 0
        %931 = vmatprep.subr.bf16.mxu0 0
        %932 = vmatpush1.bf16.xpose.msra.mxu0 0
        %933 = vmatprep.subr.bf16.mxu0 0
        %934 = vmatpush1.bf16.xpose.msra.mxu0 0
        %935 = vmatprep.mubr.bf16.mxu0 0
        %936 = vmatmul.mubr.bf16.gmra.mrb[0].mxu0 %v901
        %v937 = vpop.f32.mrb[0].mxu0
        %v938 = vadd.f32 0.0, %v937
        %v939 = vpop.f32.mrb[0].mxu0
        %v940 = vpop.f32.mrb[0].mxu0
        %v941 = vpop.f32.mrb[0].mxu0
        %942 = vdwg.mxu0
        %v944 = vsel %vm470, %v897, 0
        %946 = vmatprep.subr.bf16.mxu0 0
        %947 = vmatpush1.bf16.xpose.msra.mxu0 %v575
        %948 = vmatprep.subr.bf16.mxu0 0
        %949 = vmatpush1.bf16.xpose.msra.mxu0 0
        %950 = vmatprep.subr.bf16.mxu0 0
        %951 = vmatpush1.bf16.xpose.msra.mxu0 0
        %952 = vmatprep.subr.bf16.mxu0 0
        %953 = vmatpush1.bf16.xpose.msra.mxu0 0
        %954 = vmatprep.subr.bf16.mxu0 0
        %955 = vmatpush1.bf16.xpose.msra.mxu0 0
        %956 = vmatprep.subr.bf16.mxu0 0
        %957 = vmatpush1.bf16.xpose.msra.mxu0 0
        %958 = vmatprep.subr.bf16.mxu0 0
        %959 = vmatpush1.bf16.xpose.msra.mxu0 0
        %960 = vmatprep.subr.bf16.mxu0 0
        %961 = vmatpush1.bf16.xpose.msra.mxu0 0
        %962 = vmatprep.subr.bf16.mxu0 0
        %963 = vmatpush1.bf16.xpose.msra.mxu0 0
        %964 = vmatprep.subr.bf16.mxu0 0
        %965 = vmatpush1.bf16.xpose.msra.mxu0 0
        %966 = vmatprep.subr.bf16.mxu0 0
        %967 = vmatpush1.bf16.xpose.msra.mxu0 0
        %968 = vmatprep.subr.bf16.mxu0 0
        %969 = vmatpush1.bf16.xpose.msra.mxu0 0
        %970 = vmatprep.subr.bf16.mxu0 0
        %971 = vmatpush1.bf16.xpose.msra.mxu0 0
        %972 = vmatprep.subr.bf16.mxu0 0
        %973 = vmatpush1.bf16.xpose.msra.mxu0 0
        %974 = vmatprep.subr.bf16.mxu0 0
        %975 = vmatpush1.bf16.xpose.msra.mxu0 0
        %976 = vmatprep.subr.bf16.mxu0 0
        %977 = vmatpush1.bf16.xpose.msra.mxu0 0
        %978 = vmatprep.mubr.bf16.mxu0 0
        %979 = vmatmul.mubr.bf16.gmra.mrb[0].mxu0 %v944
        %v980 = vpop.f32.mrb[0].mxu0
        %v981 = vadd.f32 0.0, %v980
        %v982 = vpop.f32.mrb[0].mxu0
        %v983 = vpop.f32.mrb[0].mxu0
        %v984 = vpop.f32.mrb[0].mxu0
        %985 = vdwg.mxu0
        %v987 = vsel %vm470, %v898, 0
        %989 = vmatprep.subr.bf16.mxu0 0
        %990 = vmatpush1.bf16.xpose.msra.mxu0 %v621
        %991 = vmatprep.subr.bf16.mxu0 0
        %992 = vmatpush1.bf16.xpose.msra.mxu0 0
        %993 = vmatprep.subr.bf16.mxu0 0
        %994 = vmatpush1.bf16.xpose.msra.mxu0 0
        %995 = vmatprep.subr.bf16.mxu0 0
        %996 = vmatpush1.bf16.xpose.msra.mxu0 0
        %997 = vmatprep.subr.bf16.mxu0 0
        %998 = vmatpush1.bf16.xpose.msra.mxu0 0
        %999 = vmatprep.subr.bf16.mxu0 0
        %1000 = vmatpush1.bf16.xpose.msra.mxu0 0
        %1001 = vmatprep.subr.bf16.mxu0 0
        %1002 = vmatpush1.bf16.xpose.msra.mxu0 0
        %1003 = vmatprep.subr.bf16.mxu0 0
        %1004 = vmatpush1.bf16.xpose.msra.mxu0 0
        %1005 = vmatprep.subr.bf16.mxu0 0
        %1006 = vmatpush1.bf16.xpose.msra.mxu0 0
        %1007 = vmatprep.subr.bf16.mxu0 0
        %1008 = vmatpush1.bf16.xpose.msra.mxu0 0
        %1009 = vmatprep.subr.bf16.mxu0 0
        %1010 = vmatpush1.bf16.xpose.msra.mxu0 0
        %1011 = vmatprep.subr.bf16.mxu0 0
        %1012 = vmatpush1.bf16.xpose.msra.mxu0 0
        %1013 = vmatprep.subr.bf16.mxu0 0
        %1014 = vmatpush1.bf16.xpose.msra.mxu0 0
        %1015 = vmatprep.subr.bf16.mxu0 0
        %1016 = vmatpush1.bf16.xpose.msra.mxu0 0
        %1017 = vmatprep.subr.bf16.mxu0 0
        %1018 = vmatpush1.bf16.xpose.msra.mxu0 0
        %1019 = vmatprep.subr.bf16.mxu0 0
        %1020 = vmatpush1.bf16.xpose.msra.mxu0 0
        %1021 = vmatprep.mubr.bf16.mxu0 0
        %1022 = vmatmul.mubr.bf16.gmra.mrb[0].mxu0 %v987
        %v1023 = vpop.f32.mrb[0].mxu0
        %v1024 = vadd.f32 0.0, %v1023
        %v1025 = vpop.f32.mrb[0].mxu0
        %v1026 = vpop.f32.mrb[0].mxu0
        %v1027 = vpop.f32.mrb[0].mxu0
        %1028 = vdwg.mxu0
        %v1030 = vsel %vm470, %v899, 0
        %1032 = vmatprep.subr.bf16.mxu0 0
        %1033 = vmatpush1.bf16.xpose.msra.mxu0 %v667
        %1034 = vmatprep.subr.bf16.mxu0 0
        %1035 = vmatpush1.bf16.xpose.msra.mxu0 0
        %1036 = vmatprep.subr.bf16.mxu0 0
        %1037 = vmatpush1.bf16.xpose.msra.mxu0 0
        %1038 = vmatprep.subr.bf16.mxu0 0
        %1039 = vmatpush1.bf16.xpose.msra.mxu0 0
        %1040 = vmatprep.subr.bf16.mxu0 0
        %1041 = vmatpush1.bf16.xpose.msra.mxu0 0
        %1042 = vmatprep.subr.bf16.mxu0 0
        %1043 = vmatpush1.bf16.xpose.msra.mxu0 0
        %1044 = vmatprep.subr.bf16.mxu0 0
        %1045 = vmatpush1.bf16.xpose.msra.mxu0 0
        %1046 = vmatprep.subr.bf16.mxu0 0
        %1047 = vmatpush1.bf16.xpose.msra.mxu0 0
        %1048 = vmatprep.subr.bf16.mxu0 0
        %1049 = vmatpush1.bf16.xpose.msra.mxu0 0
        %1050 = vmatprep.subr.bf16.mxu0 0
        %1051 = vmatpush1.bf16.xpose.msra.mxu0 0
        %1052 = vmatprep.subr.bf16.mxu0 0
        %1053 = vmatpush1.bf16.xpose.msra.mxu0 0
        %1054 = vmatprep.subr.bf16.mxu0 0
        %1055 = vmatpush1.bf16.xpose.msra.mxu0 0
        %1056 = vmatprep.subr.bf16.mxu0 0
        %1057 = vmatpush1.bf16.xpose.msra.mxu0 0
        %1058 = vmatprep.subr.bf16.mxu0 0
        %1059 = vmatpush1.bf16.xpose.msra.mxu0 0
        %1060 = vmatprep.subr.bf16.mxu0 0
        %1061 = vmatpush1.bf16.xpose.msra.mxu0 0
        %1062 = vmatprep.subr.bf16.mxu0 0
        %1063 = vmatpush1.bf16.xpose.msra.mxu0 0
        %1064 = vmatprep.mubr.bf16.mxu0 0
        %1065 = vmatmul.mubr.bf16.gmra.mrb[0].mxu0 %v1030
        %v1066 = vpop.f32.mrb[0].mxu0
        %v1067 = vadd.f32 0.0, %v1066
        %v1068 = vpop.f32.mrb[0].mxu0
        %v1069 = vpop.f32.mrb[0].mxu0
        %v1070 = vpop.f32.mrb[0].mxu0
        %1071 = vdwg.mxu0
        %v1072 = vsel %vm710, %v938, -1e+30
        %v1073 = vsel %vm710, %v981, -1e+30
        %v1074 = vsel %vm710, %v1024, -1e+30
        %v1075 = vsel %vm710, %v1067, -1e+30
        %v1076 = vsel %vm715, %v1072, -inf
        %1077 = vmax.xlane.f32.xlu0 %v1076
        %v1078 = vpop.xlane.xlu0 %1077
        %v1079 = vsel %vm715, %v1073, -inf
        %1080 = vmax.xlane.f32.xlu0 %v1079
        %v1081 = vpop.xlane.xlu0 %1080
        %v1082 = vsel %vm715, %v1074, -inf
        %1083 = vmax.xlane.f32.xlu0 %v1082
        %v1084 = vpop.xlane.xlu0 %1083
        %v1085 = vsel %vm715, %v1075, -inf
        %1086 = vmax.xlane.f32.xlu0 %v1085
        %v1087 = vpop.xlane.xlu0 %1086
        %v1088 = vsub.f32 %v1072, %v1078
        %v1089 = vsub.f32 %v1073, %v1081
        %v1090 = vsub.f32 %v1074, %v1084
        %v1091 = vsub.f32 %v1075, %v1087
        %v1092 = vmul.f32 %v1088, 1.442695
        %v1093 = vpow.pop %v1092
        %v1094 = vmul.f32 %v1089, 1.442695
        %v1095 = vpow.pop %v1094
        %v1096 = vmul.f32 %v1090, 1.442695
        %v1097 = vpow.pop %v1096
        %v1098 = vmul.f32 %v1091, 1.442695
        %v1099 = vpow.pop %v1098
        %v1100 = vsel %vm715, %v1093, 0.0
        %1101 = vadd.xlane.f32.xlu0 %v1100
        %v1102 = vpop.xlane.xlu0 %1101
        %v1103 = vsel %vm715, %v1095, 0.0
        %1104 = vadd.xlane.f32.xlu0 %v1103
        %v1105 = vpop.xlane.xlu0 %1104
        %v1106 = vsel %vm715, %v1097, 0.0
        %1107 = vadd.xlane.f32.xlu0 %v1106
        %v1108 = vpop.xlane.xlu0 %1107
        %v1109 = vsel %vm715, %v1099, 0.0
        %1110 = vadd.xlane.f32.xlu0 %v1109
        %v1111 = vpop.xlane.xlu0 %1110
        %v1112 = vrcp.pop %v1102
        %v1113 = vrcp.pop %v1105
        %v1114 = vrcp.pop %v1108
        %v1115 = vrcp.pop %v1111
        %v1116 = vmul.f32 %v1093, %v1112
        %v1117 = vmul.f32 %v1095, %v1113
        %v1118 = vmul.f32 %v1097, %v1114
        %v1119 = vmul.f32 %v1099, %v1115
        %v1124 = vunpack.c.l.b16 %v833
        %v1125 = vunpack.c.l.b16 %v834
        %v1126 = vunpack.c.l.b16 %v835
        %v1127 = vunpack.c.l.b16 %v836
        %v1128 = vpack.c.b16 %v1125, %v1124
        %v1129 = vpack.c.b16 %v1127, %v1126
        %1132 = vmatprep.subr.bf16.mxu0 0
        %1133 = vmatpush1.bf16.msra.mxu0 %v1128
        %1134 = vmatprep.subr.bf16.mxu0 0
        %1135 = vmatpush1.bf16.msra.mxu0 %v1129
        %1136 = vmatprep.subr.bf16.mxu0 0
        %1137 = vmatpush1.bf16.msra.mxu0 0
        %1138 = vmatprep.subr.bf16.mxu0 0
        %1139 = vmatpush1.bf16.msra.mxu0 0
        %1140 = vmatprep.subr.bf16.mxu0 0
        %1141 = vmatpush1.bf16.msra.mxu0 0
        %1142 = vmatprep.subr.bf16.mxu0 0
        %1143 = vmatpush1.bf16.msra.mxu0 0
        %1144 = vmatprep.subr.bf16.mxu0 0
        %1145 = vmatpush1.bf16.msra.mxu0 0
        %1146 = vmatprep.subr.bf16.mxu0 0
        %1147 = vmatpush1.bf16.msra.mxu0 0
        %1148 = vmatprep.subr.bf16.mxu0 0
        %1149 = vmatpush1.bf16.msra.mxu0 0
        %1150 = vmatprep.subr.bf16.mxu0 0
        %1151 = vmatpush1.bf16.msra.mxu0 0
        %1152 = vmatprep.subr.bf16.mxu0 0
        %1153 = vmatpush1.bf16.msra.mxu0 0
        %1154 = vmatprep.subr.bf16.mxu0 0
        %1155 = vmatpush1.bf16.msra.mxu0 0
        %1156 = vmatprep.subr.bf16.mxu0 0
        %1157 = vmatpush1.bf16.msra.mxu0 0
        %1158 = vmatprep.subr.bf16.mxu0 0
        %1159 = vmatpush1.bf16.msra.mxu0 0
        %1160 = vmatprep.subr.bf16.mxu0 0
        %1161 = vmatpush1.bf16.msra.mxu0 0
        %1162 = vmatprep.subr.bf16.mxu0 0
        %1163 = vmatpush1.bf16.msra.mxu0 0
        %1164 = vmatprep.mubr.bf16.mxu0 0
        %1165 = vmatmul.mubr.bf16.gmra.mrb[0].mxu0 %v472
        %v1166 = vpop.f32.mrb[0].mxu0
        %v1167 = vadd.f32 0.0, %v1166
        %v1168 = vpop.f32.mrb[0].mxu0
        %v1169 = vpop.f32.mrb[0].mxu0
        %v1170 = vadd.f32 0.0, %v1169
        %v1171 = vpop.f32.mrb[0].mxu0
        %1172 = vdwg.mxu0
        %v1175 = vcombine.high %v1167, %v1167
        %v1176 = vcombine.high %v1170, %v1170
        %v1179 = vpack.c.bf16 %v1167, %v1167
        %v1180 = vpack.c.bf16 %v1175, %v1175
        %v1181 = vpack.c.bf16 %v1170, %v1170
        %v1182 = vpack.c.bf16 %v1176, %v1176
        %v1183 = vpack.c.bf16 %v1116, %v1116
        %v1184 = vpack.c.bf16 %v1117, %v1117
        %v1185 = vpack.c.bf16 %v1118, %v1118
        %v1186 = vpack.c.bf16 %v1119, %v1119
        %vm1187 = vcmask 31744
        %v1189 = vsel %vm1187, %v1183, 0
        %vm1191 = vcmask 1041408
        %v1193 = vsel %vm1191, %v1179, 0
        %1195 = vmatprep.subr.bf16.mxu0 0
        %1196 = vmatpush1.bf16.msra.mxu0 %v1193
        %1197 = vmatprep.subr.bf16.mxu0 0
        %1198 = vmatpush1.bf16.msra.mxu0 0
        %1199 = vmatprep.subr.bf16.mxu0 0
        %1200 = vmatpush1.bf16.msra.mxu0 0
        %1201 = vmatprep.subr.bf16.mxu0 0
        %1202 = vmatpush1.bf16.msra.mxu0 0
        %1203 = vmatprep.subr.bf16.mxu0 0
        %1204 = vmatpush1.bf16.msra.mxu0 0
        %1205 = vmatprep.subr.bf16.mxu0 0
        %1206 = vmatpush1.bf16.msra.mxu0 0
        %1207 = vmatprep.subr.bf16.mxu0 0
        %1208 = vmatpush1.bf16.msra.mxu0 0
        %1209 = vmatprep.subr.bf16.mxu0 0
        %1210 = vmatpush1.bf16.msra.mxu0 0
        %1211 = vmatprep.subr.bf16.mxu0 0
        %1212 = vmatpush1.bf16.msra.mxu0 0
        %1213 = vmatprep.subr.bf16.mxu0 0
        %1214 = vmatpush1.bf16.msra.mxu0 0
        %1215 = vmatprep.subr.bf16.mxu0 0
        %1216 = vmatpush1.bf16.msra.mxu0 0
        %1217 = vmatprep.subr.bf16.mxu0 0
        %1218 = vmatpush1.bf16.msra.mxu0 0
        %1219 = vmatprep.subr.bf16.mxu0 0
        %1220 = vmatpush1.bf16.msra.mxu0 0
        %1221 = vmatprep.subr.bf16.mxu0 0
        %1222 = vmatpush1.bf16.msra.mxu0 0
        %1223 = vmatprep.subr.bf16.mxu0 0
        %1224 = vmatpush1.bf16.msra.mxu0 0
        %1225 = vmatprep.subr.bf16.mxu0 0
        %1226 = vmatpush1.bf16.msra.mxu0 0
        %1227 = vmatprep.mubr.bf16.mxu0 0
        %1228 = vmatmul.mubr.bf16.gmra.mrb[0].mxu0 %v1189
        %v1229 = vpop.f32.mrb[0].mxu0
        %v1230 = vadd.f32 0.0, %v1229
        %v1231 = vpop.f32.mrb[0].mxu0
        %v1232 = vpop.f32.mrb[0].mxu0
        %v1233 = vpop.f32.mrb[0].mxu0
        %1234 = vdwg.mxu0
        %v1236 = vsel %vm1187, %v1184, 0
        %v1239 = vsel %vm1191, %v1180, 0
        %1241 = vmatprep.subr.bf16.mxu0 0
        %1242 = vmatpush1.bf16.msra.mxu0 %v1239
        %1243 = vmatprep.subr.bf16.mxu0 0
        %1244 = vmatpush1.bf16.msra.mxu0 0
        %1245 = vmatprep.subr.bf16.mxu0 0
        %1246 = vmatpush1.bf16.msra.mxu0 0
        %1247 = vmatprep.subr.bf16.mxu0 0
        %1248 = vmatpush1.bf16.msra.mxu0 0
        %1249 = vmatprep.subr.bf16.mxu0 0
        %1250 = vmatpush1.bf16.msra.mxu0 0
        %1251 = vmatprep.subr.bf16.mxu0 0
        %1252 = vmatpush1.bf16.msra.mxu0 0
        %1253 = vmatprep.subr.bf16.mxu0 0
        %1254 = vmatpush1.bf16.msra.mxu0 0
        %1255 = vmatprep.subr.bf16.mxu0 0
        %1256 = vmatpush1.bf16.msra.mxu0 0
        %1257 = vmatprep.subr.bf16.mxu0 0
        %1258 = vmatpush1.bf16.msra.mxu0 0
        %1259 = vmatprep.subr.bf16.mxu0 0
        %1260 = vmatpush1.bf16.msra.mxu0 0
        %1261 = vmatprep.subr.bf16.mxu0 0
        %1262 = vmatpush1.bf16.msra.mxu0 0
        %1263 = vmatprep.subr.bf16.mxu0 0
        %1264 = vmatpush1.bf16.msra.mxu0 0
        %1265 = vmatprep.subr.bf16.mxu0 0
        %1266 = vmatpush1.bf16.msra.mxu0 0
        %1267 = vmatprep.subr.bf16.mxu0 0
        %1268 = vmatpush1.bf16.msra.mxu0 0
        %1269 = vmatprep.subr.bf16.mxu0 0
        %1270 = vmatpush1.bf16.msra.mxu0 0
        %1271 = vmatprep.subr.bf16.mxu0 0
        %1272 = vmatpush1.bf16.msra.mxu0 0
        %1273 = vmatprep.mubr.bf16.mxu0 0
        %1274 = vmatmul.mubr.bf16.gmra.mrb[0].mxu0 %v1236
        %v1275 = vpop.f32.mrb[0].mxu0
        %v1276 = vadd.f32 0.0, %v1275
        %v1277 = vpop.f32.mrb[0].mxu0
        %v1278 = vpop.f32.mrb[0].mxu0
        %v1279 = vpop.f32.mrb[0].mxu0
        %1280 = vdwg.mxu0
        %v1282 = vsel %vm1187, %v1185, 0
        %v1285 = vsel %vm1191, %v1181, 0
        %1287 = vmatprep.subr.bf16.mxu0 0
        %1288 = vmatpush1.bf16.msra.mxu0 %v1285
        %1289 = vmatprep.subr.bf16.mxu0 0
        %1290 = vmatpush1.bf16.msra.mxu0 0
        %1291 = vmatprep.subr.bf16.mxu0 0
        %1292 = vmatpush1.bf16.msra.mxu0 0
        %1293 = vmatprep.subr.bf16.mxu0 0
        %1294 = vmatpush1.bf16.msra.mxu0 0
        %1295 = vmatprep.subr.bf16.mxu0 0
        %1296 = vmatpush1.bf16.msra.mxu0 0
        %1297 = vmatprep.subr.bf16.mxu0 0
        %1298 = vmatpush1.bf16.msra.mxu0 0
        %1299 = vmatprep.subr.bf16.mxu0 0
        %1300 = vmatpush1.bf16.msra.mxu0 0
        %1301 = vmatprep.subr.bf16.mxu0 0
        %1302 = vmatpush1.bf16.msra.mxu0 0
        %1303 = vmatprep.subr.bf16.mxu0 0
        %1304 = vmatpush1.bf16.msra.mxu0 0
        %1305 = vmatprep.subr.bf16.mxu0 0
        %1306 = vmatpush1.bf16.msra.mxu0 0
        %1307 = vmatprep.subr.bf16.mxu0 0
        %1308 = vmatpush1.bf16.msra.mxu0 0
        %1309 = vmatprep.subr.bf16.mxu0 0
        %1310 = vmatpush1.bf16.msra.mxu0 0
        %1311 = vmatprep.subr.bf16.mxu0 0
        %1312 = vmatpush1.bf16.msra.mxu0 0
        %1313 = vmatprep.subr.bf16.mxu0 0
        %1314 = vmatpush1.bf16.msra.mxu0 0
        %1315 = vmatprep.subr.bf16.mxu0 0
        %1316 = vmatpush1.bf16.msra.mxu0 0
        %1317 = vmatprep.subr.bf16.mxu0 0
        %1318 = vmatpush1.bf16.msra.mxu0 0
        %1319 = vmatprep.mubr.bf16.mxu0 0
        %1320 = vmatmul.mubr.bf16.gmra.mrb[0].mxu0 %v1282
        %v1321 = vpop.f32.mrb[0].mxu0
        %v1322 = vadd.f32 0.0, %v1321
        %v1323 = vpop.f32.mrb[0].mxu0
        %v1324 = vpop.f32.mrb[0].mxu0
        %v1325 = vpop.f32.mrb[0].mxu0
        %1326 = vdwg.mxu0
        %v1328 = vsel %vm1187, %v1186, 0
        %v1331 = vsel %vm1191, %v1182, 0
        %1333 = vmatprep.subr.bf16.mxu0 0
        %1334 = vmatpush1.bf16.msra.mxu0 %v1331
        %1335 = vmatprep.subr.bf16.mxu0 0
        %1336 = vmatpush1.bf16.msra.mxu0 0
        %1337 = vmatprep.subr.bf16.mxu0 0
        %1338 = vmatpush1.bf16.msra.mxu0 0
        %1339 = vmatprep.subr.bf16.mxu0 0
        %1340 = vmatpush1.bf16.msra.mxu0 0
        %1341 = vmatprep.subr.bf16.mxu0 0
        %1342 = vmatpush1.bf16.msra.mxu0 0
        %1343 = vmatprep.subr.bf16.mxu0 0
        %1344 = vmatpush1.bf16.msra.mxu0 0
        %1345 = vmatprep.subr.bf16.mxu0 0
        %1346 = vmatpush1.bf16.msra.mxu0 0
        %1347 = vmatprep.subr.bf16.mxu0 0
        %1348 = vmatpush1.bf16.msra.mxu0 0
        %1349 = vmatprep.subr.bf16.mxu0 0
        %1350 = vmatpush1.bf16.msra.mxu0 0
        %1351 = vmatprep.subr.bf16.mxu0 0
        %1352 = vmatpush1.bf16.msra.mxu0 0
        %1353 = vmatprep.subr.bf16.mxu0 0
        %1354 = vmatpush1.bf16.msra.mxu0 0
        %1355 = vmatprep.subr.bf16.mxu0 0
        %1356 = vmatpush1.bf16.msra.mxu0 0
        %1357 = vmatprep.subr.bf16.mxu0 0
        %1358 = vmatpush1.bf16.msra.mxu0 0
        %1359 = vmatprep.subr.bf16.mxu0 0
        %1360 = vmatpush1.bf16.msra.mxu0 0
        %1361 = vmatprep.subr.bf16.mxu0 0
        %1362 = vmatpush1.bf16.msra.mxu0 0
        %1363 = vmatprep.subr.bf16.mxu0 0
        %1364 = vmatpush1.bf16.msra.mxu0 0
        %1365 = vmatprep.mubr.bf16.mxu0 0
        %1366 = vmatmul.mubr.bf16.gmra.mrb[0].mxu0 %v1328
        %v1367 = vpop.f32.mrb[0].mxu0
        %v1368 = vadd.f32 0.0, %v1367
        %v1369 = vpop.f32.mrb[0].mxu0
        %v1370 = vpop.f32.mrb[0].mxu0
        %v1371 = vpop.f32.mrb[0].mxu0
        %1372 = vdwg.mxu0
        %v1374 = vsel %vm1187, %v823, 0
        %v1377 = vsel %vm1191, %v819, 0
        %1379 = vmatprep.subr.bf16.mxu0 0
        %1380 = vmatpush1.bf16.msra.mxu0 %v1377
        %1381 = vmatprep.subr.bf16.mxu0 0
        %1382 = vmatpush1.bf16.msra.mxu0 0
        %1383 = vmatprep.subr.bf16.mxu0 0
        %1384 = vmatpush1.bf16.msra.mxu0 0
        %1385 = vmatprep.subr.bf16.mxu0 0
        %1386 = vmatpush1.bf16.msra.mxu0 0
        %1387 = vmatprep.subr.bf16.mxu0 0
        %1388 = vmatpush1.bf16.msra.mxu0 0
        %1389 = vmatprep.subr.bf16.mxu0 0
        %1390 = vmatpush1.bf16.msra.mxu0 0
        %1391 = vmatprep.subr.bf16.mxu0 0
        %1392 = vmatpush1.bf16.msra.mxu0 0
        %1393 = vmatprep.subr.bf16.mxu0 0
        %1394 = vmatpush1.bf16.msra.mxu0 0
        %1395 = vmatprep.subr.bf16.mxu0 0
        %1396 = vmatpush1.bf16.msra.mxu0 0
        %1397 = vmatprep.subr.bf16.mxu0 0
        %1398 = vmatpush1.bf16.msra.mxu0 0
        %1399 = vmatprep.subr.bf16.mxu0 0
        %1400 = vmatpush1.bf16.msra.mxu0 0
        %1401 = vmatprep.subr.bf16.mxu0 0
        %1402 = vmatpush1.bf16.msra.mxu0 0
        %1403 = vmatprep.subr.bf16.mxu0 0
        %1404 = vmatpush1.bf16.msra.mxu0 0
        %1405 = vmatprep.subr.bf16.mxu0 0
        %1406 = vmatpush1.bf16.msra.mxu0 0
        %1407 = vmatprep.subr.bf16.mxu0 0
        %1408 = vmatpush1.bf16.msra.mxu0 0
        %1409 = vmatprep.subr.bf16.mxu0 0
        %1410 = vmatpush1.bf16.msra.mxu0 0
        %1411 = vmatprep.mubr.bf16.mxu0 0
        %1412 = vmatmul.mubr.bf16.gmra.mrb[0].mxu0 %v1374
        %v1413 = vpop.f32.mrb[0].mxu0
        %v1414 = vadd.f32 %v1230, %v1413
        %v1415 = vpop.f32.mrb[0].mxu0
        %v1416 = vpop.f32.mrb[0].mxu0
        %v1417 = vpop.f32.mrb[0].mxu0
        %1418 = vdwg.mxu0
        %v1420 = vsel %vm1187, %v824, 0
        %v1423 = vsel %vm1191, %v820, 0
        %1425 = vmatprep.subr.bf16.mxu0 0
        %1426 = vmatpush1.bf16.msra.mxu0 %v1423
        %1427 = vmatprep.subr.bf16.mxu0 0
        %1428 = vmatpush1.bf16.msra.mxu0 0
        %1429 = vmatprep.subr.bf16.mxu0 0
        %1430 = vmatpush1.bf16.msra.mxu0 0
        %1431 = vmatprep.subr.bf16.mxu0 0
        %1432 = vmatpush1.bf16.msra.mxu0 0
        %1433 = vmatprep.subr.bf16.mxu0 0
        %1434 = vmatpush1.bf16.msra.mxu0 0
        %1435 = vmatprep.subr.bf16.mxu0 0
        %1436 = vmatpush1.bf16.msra.mxu0 0
        %1437 = vmatprep.subr.bf16.mxu0 0
        %1438 = vmatpush1.bf16.msra.mxu0 0
        %1439 = vmatprep.subr.bf16.mxu0 0
        %1440 = vmatpush1.bf16.msra.mxu0 0
        %1441 = vmatprep.subr.bf16.mxu0 0
        %1442 = vmatpush1.bf16.msra.mxu0 0
        %1443 = vmatprep.subr.bf16.mxu0 0
        %1444 = vmatpush1.bf16.msra.mxu0 0
        %1445 = vmatprep.subr.bf16.mxu0 0
        %1446 = vmatpush1.bf16.msra.mxu0 0
        %1447 = vmatprep.subr.bf16.mxu0 0
        %1448 = vmatpush1.bf16.msra.mxu0 0
        %1449 = vmatprep.subr.bf16.mxu0 0
        %1450 = vmatpush1.bf16.msra.mxu0 0
        %1451 = vmatprep.subr.bf16.mxu0 0
        %1452 = vmatpush1.bf16.msra.mxu0 0
        %1453 = vmatprep.subr.bf16.mxu0 0
        %1454 = vmatpush1.bf16.msra.mxu0 0
        %1455 = vmatprep.subr.bf16.mxu0 0
        %1456 = vmatpush1.bf16.msra.mxu0 0
        %1457 = vmatprep.mubr.bf16.mxu0 0
        %1458 = vmatmul.mubr.bf16.gmra.mrb[0].mxu0 %v1420
        %v1459 = vpop.f32.mrb[0].mxu0
        %v1460 = vadd.f32 %v1276, %v1459
        %v1461 = vpop.f32.mrb[0].mxu0
        %v1462 = vpop.f32.mrb[0].mxu0
        %v1463 = vpop.f32.mrb[0].mxu0
        %1464 = vdwg.mxu0
        %v1466 = vsel %vm1187, %v825, 0
        %v1469 = vsel %vm1191, %v821, 0
        %1471 = vmatprep.subr.bf16.mxu0 0
        %1472 = vmatpush1.bf16.msra.mxu0 %v1469
        %1473 = vmatprep.subr.bf16.mxu0 0
        %1474 = vmatpush1.bf16.msra.mxu0 0
        %1475 = vmatprep.subr.bf16.mxu0 0
        %1476 = vmatpush1.bf16.msra.mxu0 0
        %1477 = vmatprep.subr.bf16.mxu0 0
        %1478 = vmatpush1.bf16.msra.mxu0 0
        %1479 = vmatprep.subr.bf16.mxu0 0
        %1480 = vmatpush1.bf16.msra.mxu0 0
        %1481 = vmatprep.subr.bf16.mxu0 0
        %1482 = vmatpush1.bf16.msra.mxu0 0
        %1483 = vmatprep.subr.bf16.mxu0 0
        %1484 = vmatpush1.bf16.msra.mxu0 0
        %1485 = vmatprep.subr.bf16.mxu0 0
        %1486 = vmatpush1.bf16.msra.mxu0 0
        %1487 = vmatprep.subr.bf16.mxu0 0
        %1488 = vmatpush1.bf16.msra.mxu0 0
        %1489 = vmatprep.subr.bf16.mxu0 0
        %1490 = vmatpush1.bf16.msra.mxu0 0
        %1491 = vmatprep.subr.bf16.mxu0 0
        %1492 = vmatpush1.bf16.msra.mxu0 0
        %1493 = vmatprep.subr.bf16.mxu0 0
        %1494 = vmatpush1.bf16.msra.mxu0 0
        %1495 = vmatprep.subr.bf16.mxu0 0
        %1496 = vmatpush1.bf16.msra.mxu0 0
        %1497 = vmatprep.subr.bf16.mxu0 0
        %1498 = vmatpush1.bf16.msra.mxu0 0
        %1499 = vmatprep.subr.bf16.mxu0 0
        %1500 = vmatpush1.bf16.msra.mxu0 0
        %1501 = vmatprep.subr.bf16.mxu0 0
        %1502 = vmatpush1.bf16.msra.mxu0 0
        %1503 = vmatprep.mubr.bf16.mxu0 0
        %1504 = vmatmul.mubr.bf16.gmra.mrb[0].mxu0 %v1466
        %v1505 = vpop.f32.mrb[0].mxu0
        %v1506 = vadd.f32 %v1322, %v1505
        %v1507 = vpop.f32.mrb[0].mxu0
        %v1508 = vpop.f32.mrb[0].mxu0
        %v1509 = vpop.f32.mrb[0].mxu0
        %1510 = vdwg.mxu0
        %v1512 = vsel %vm1187, %v826, 0
        %v1515 = vsel %vm1191, %v822, 0
        %1517 = vmatprep.subr.bf16.mxu0 0
        %1518 = vmatpush1.bf16.msra.mxu0 %v1515
        %1519 = vmatprep.subr.bf16.mxu0 0
        %1520 = vmatpush1.bf16.msra.mxu0 0
        %1521 = vmatprep.subr.bf16.mxu0 0
        %1522 = vmatpush1.bf16.msra.mxu0 0
        %1523 = vmatprep.subr.bf16.mxu0 0
        %1524 = vmatpush1.bf16.msra.mxu0 0
        %1525 = vmatprep.subr.bf16.mxu0 0
        %1526 = vmatpush1.bf16.msra.mxu0 0
        %1527 = vmatprep.subr.bf16.mxu0 0
        %1528 = vmatpush1.bf16.msra.mxu0 0
        %1529 = vmatprep.subr.bf16.mxu0 0
        %1530 = vmatpush1.bf16.msra.mxu0 0
        %1531 = vmatprep.subr.bf16.mxu0 0
        %1532 = vmatpush1.bf16.msra.mxu0 0
        %1533 = vmatprep.subr.bf16.mxu0 0
        %1534 = vmatpush1.bf16.msra.mxu0 0
        %1535 = vmatprep.subr.bf16.mxu0 0
        %1536 = vmatpush1.bf16.msra.mxu0 0
        %1537 = vmatprep.subr.bf16.mxu0 0
        %1538 = vmatpush1.bf16.msra.mxu0 0
        %1539 = vmatprep.subr.bf16.mxu0 0
        %1540 = vmatpush1.bf16.msra.mxu0 0
        %1541 = vmatprep.subr.bf16.mxu0 0
        %1542 = vmatpush1.bf16.msra.mxu0 0
        %1543 = vmatprep.subr.bf16.mxu0 0
        %1544 = vmatpush1.bf16.msra.mxu0 0
        %1545 = vmatprep.subr.bf16.mxu0 0
        %1546 = vmatpush1.bf16.msra.mxu0 0
        %1547 = vmatprep.subr.bf16.mxu0 0
        %1548 = vmatpush1.bf16.msra.mxu0 0
        %1549 = vmatprep.mubr.bf16.mxu0 0
        %1550 = vmatmul.mubr.bf16.gmra.mrb[0].mxu0 %v1512
        %v1551 = vpop.f32.mrb[0].mxu0
        %v1552 = vadd.f32 %v1368, %v1551
        %v1553 = vpop.f32.mrb[0].mxu0
        %v1554 = vpop.f32.mrb[0].mxu0
        %v1555 = vpop.f32.mrb[0].mxu0
        %1556 = vdwg.mxu0
        %v1561 = vcombine.low %v1414, %v1460
        %v1562 = vcombine.low %v1506, %v1552
        %v1565 = vadd.f32 %v407, %v1561
        %v1566 = vadd.f32 %v408, %v1562
        %v1568 = vlaneseq
        %v1569 = vshrl.u32 %v1568, 7
        %v1570 = vsub.s32 0, %v1569
        %v1571 = vrot.slane %v414, %v1570
        %v1573 = vadd.f32 %v1565, %v1571
        %v1574 = vadd.f32 %v1566, %v1571
        %v1575 = vsel %vm470, %v1573, 0.0
        %1576 = vadd.xlane.f32.xlu0 %v1575
        %v1577 = vpop.xlane.xlu0 %1576
        %v1578 = vsel %vm470, %v1574, 0.0
        %1579 = vadd.xlane.f32.xlu0 %v1578
        %v1580 = vpop.xlane.xlu0 %1579
        %v1581 = vrcp.pop 32.0
        %v1582 = vmul.f32 %v1577, %v1581
        %v1583 = vmul.f32 %v1580, %v1581
        %v1584 = vsub.f32 %v1573, %v1582
        %v1585 = vsub.f32 %v1574, %v1583
        %v1586 = vmul.f32 %v1584, %v1584
        %v1587 = vmul.f32 %v1585, %v1585
        %v1588 = vsel %vm470, %v1586, 0.0
        %1589 = vadd.xlane.f32.xlu0 %v1588
        %v1590 = vpop.xlane.xlu0 %1589
        %v1591 = vsel %vm470, %v1587, 0.0
        %1592 = vadd.xlane.f32.xlu0 %v1591
        %v1593 = vpop.xlane.xlu0 %1592
        %v1594 = vmul.f32 %v1590, %v1581
        %v1595 = vmul.f32 %v1593, %v1581
        %v1596 = vadd.f32 %v1594, 1e-05
        %v1597 = vadd.f32 %v1595, 1e-05
        %v1598 = vrsqrt.pop %v1596
        %v1599 = vrsqrt.pop %v1597
        %v1600 = vmul.f32 %v1584, %v1598
        %v1601 = vmul.f32 %v1585, %v1599
        %v1603 = vlaneseq
        %v1604 = vshrl.u32 %v1603, 7
        %v1605 = vsub.s32 0, %v1604
        %v1606 = vrot.slane %v415, %v1605
        %v1608 = vmul.f32 %v1600, %v1606
        %v1609 = vmul.f32 %v1601, %v1606
        %v1611 = vlaneseq
        %v1612 = vshrl.u32 %v1611, 7
        %v1613 = vsub.s32 0, %v1612
        %v1614 = vrot.slane %v416, %v1613
        %v1616 = vadd.f32 %v1608, %v1614
        %v1617 = vadd.f32 %v1609, %v1614
        %v1618 = vpack.c.bf16 %v1617, %v1616
        %v1620 = vlaneseq
        %v1621 = vshrl.u32 %v1620, 7
        %v1622 = vsub.s32 0, %v1621
        %v1623 = vrot.slane %v421, %v1622
        %v1629 = vunpack.c.l.b16 %v417
        %v1630 = vunpack.c.l.b16 %v418
        %v1631 = vunpack.c.l.b16 %v419
        %v1632 = vunpack.c.l.b16 %v420
        %v1633 = vpack.c.b16 %v1630, %v1629
        %v1634 = vpack.c.b16 %v1632, %v1631
        %v1638 = vsel %vm470, %v1618, 0
        %1640 = vmatprep.subr.bf16.mxu0 0
        %1641 = vmatpush1.bf16.msra.mxu0 %v1633
        %1642 = vmatprep.subr.bf16.mxu0 0
        %1643 = vmatpush1.bf16.msra.mxu0 %v1634
        %1644 = vmatprep.subr.bf16.mxu0 0
        %1645 = vmatpush1.bf16.msra.mxu0 0
        %1646 = vmatprep.subr.bf16.mxu0 0
        %1647 = vmatpush1.bf16.msra.mxu0 0
        %1648 = vmatprep.subr.bf16.mxu0 0
        %1649 = vmatpush1.bf16.msra.mxu0 0
        %1650 = vmatprep.subr.bf16.mxu0 0
        %1651 = vmatpush1.bf16.msra.mxu0 0
        %1652 = vmatprep.subr.bf16.mxu0 0
        %1653 = vmatpush1.bf16.msra.mxu0 0
        %1654 = vmatprep.subr.bf16.mxu0 0
        %1655 = vmatpush1.bf16.msra.mxu0 0
        %1656 = vmatprep.subr.bf16.mxu0 0
        %1657 = vmatpush1.bf16.msra.mxu0 0
        %1658 = vmatprep.subr.bf16.mxu0 0
        %1659 = vmatpush1.bf16.msra.mxu0 0
        %1660 = vmatprep.subr.bf16.mxu0 0
        %1661 = vmatpush1.bf16.msra.mxu0 0
        %1662 = vmatprep.subr.bf16.mxu0 0
        %1663 = vmatpush1.bf16.msra.mxu0 0
        %1664 = vmatprep.subr.bf16.mxu0 0
        %1665 = vmatpush1.bf16.msra.mxu0 0
        %1666 = vmatprep.subr.bf16.mxu0 0
        %1667 = vmatpush1.bf16.msra.mxu0 0
        %1668 = vmatprep.subr.bf16.mxu0 0
        %1669 = vmatpush1.bf16.msra.mxu0 0
        %1670 = vmatprep.subr.bf16.mxu0 0
        %1671 = vmatpush1.bf16.msra.mxu0 0
        %1672 = vmatprep.mubr.bf16.mxu0 0
        %1673 = vmatmul.mubr.bf16.gmra.mrb[0].mxu0 %v1638
        %v1674 = vpop.f32.mrb[0].mxu0
        %v1675 = vadd.f32 %v1623, %v1674
        %v1676 = vpop.f32.mrb[0].mxu0
        %v1677 = vpop.f32.mrb[0].mxu0
        %v1678 = vadd.f32 %v1623, %v1677
        %v1679 = vpop.f32.mrb[0].mxu0
        %1680 = vdwg.mxu0
        %v1681 = vmul.f32 %v1675, 0.5
        %v1682 = vmul.f32 %v1678, 0.5
        %v1683 = vmul.f32 %v1675, %v1675
        %v1684 = vmul.f32 %v1678, %v1678
        %v1685 = vmul.f32 %v1683, %v1675
        %v1686 = vmul.f32 %v1684, %v1678
        %v1687 = vmul.f32 %v1685, 0.044715
        %v1688 = vmul.f32 %v1686, 0.044715
        %v1689 = vadd.f32 %v1675, %v1687
        %v1690 = vadd.f32 %v1678, %v1688
        %v1691 = vmul.f32 %v1689, 0.7978846
        %v1692 = vmul.f32 %v1690, 0.7978846
        %v1693 = vtanh.pop %v1691
        %v1694 = vtanh.pop %v1692
        %v1695 = vadd.f32 %v1693, 1.0
        %v1696 = vadd.f32 %v1694, 1.0
        %v1697 = vmul.f32 %v1681, %v1695
        %v1698 = vmul.f32 %v1682, %v1696
        %v1699 = vpack.c.bf16 %v1698, %v1697
        %v1701 = vlaneseq
        %v1702 = vshrl.u32 %v1701, 7
        %v1703 = vsub.s32 0, %v1702
        %v1704 = vrot.slane %v430, %v1703
        %v1714 = vunpack.c.l.b16 %v422
        %v1715 = vunpack.c.l.b16 %v423
        %v1716 = vunpack.c.l.b16 %v424
        %v1717 = vunpack.c.l.b16 %v425
        %v1718 = vunpack.c.l.b16 %v426
        %v1719 = vunpack.c.l.b16 %v427
        %v1720 = vunpack.c.l.b16 %v428
        %v1721 = vunpack.c.l.b16 %v429
        %v1722 = vpack.c.b16 %v1715, %v1714
        %v1723 = vpack.c.b16 %v1717, %v1716
        %v1724 = vpack.c.b16 %v1719, %v1718
        %v1725 = vpack.c.b16 %v1721, %v1720
        %vm1730 = vcmask 523264
        %v1732 = vsel %vm1730, %v1699, 0
        %1734 = vmatprep.subr.bf16.mxu0 0
        %1735 = vmatpush1.bf16.msra.mxu0 %v1722
        %1736 = vmatprep.subr.bf16.mxu0 0
        %1737 = vmatpush1.bf16.msra.mxu0 %v1723
        %1738 = vmatprep.subr.bf16.mxu0 0
        %1739 = vmatpush1.bf16.msra.mxu0 %v1724
        %1740 = vmatprep.subr.bf16.mxu0 0
        %1741 = vmatpush1.bf16.msra.mxu0 %v1725
        %1742 = vmatprep.subr.bf16.mxu0 0
        %1743 = vmatpush1.bf16.msra.mxu0 0
        %1744 = vmatprep.subr.bf16.mxu0 0
        %1745 = vmatpush1.bf16.msra.mxu0 0
        %1746 = vmatprep.subr.bf16.mxu0 0
        %1747 = vmatpush1.bf16.msra.mxu0 0
        %1748 = vmatprep.subr.bf16.mxu0 0
        %1749 = vmatpush1.bf16.msra.mxu0 0
        %1750 = vmatprep.subr.bf16.mxu0 0
        %1751 = vmatpush1.bf16.msra.mxu0 0
        %1752 = vmatprep.subr.bf16.mxu0 0
        %1753 = vmatpush1.bf16.msra.mxu0 0
        %1754 = vmatprep.subr.bf16.mxu0 0
        %1755 = vmatpush1.bf16.msra.mxu0 0
        %1756 = vmatprep.subr.bf16.mxu0 0
        %1757 = vmatpush1.bf16.msra.mxu0 0
        %1758 = vmatprep.subr.bf16.mxu0 0
        %1759 = vmatpush1.bf16.msra.mxu0 0
        %1760 = vmatprep.subr.bf16.mxu0 0
        %1761 = vmatpush1.bf16.msra.mxu0 0
        %1762 = vmatprep.subr.bf16.mxu0 0
        %1763 = vmatpush1.bf16.msra.mxu0 0
        %1764 = vmatprep.subr.bf16.mxu0 0
        %1765 = vmatpush1.bf16.msra.mxu0 0
        %1766 = vmatprep.mubr.bf16.mxu0 0
        %1767 = vmatmul.mubr.bf16.gmra.mrb[0].mxu0 %v1732
        %v1768 = vpop.f32.mrb[0].mxu0
        %v1769 = vadd.f32 %v1704, %v1768
        %v1770 = vpop.f32.mrb[0].mxu0
        %v1771 = vpop.f32.mrb[0].mxu0
        %v1772 = vadd.f32 %v1704, %v1771
        %v1773 = vpop.f32.mrb[0].mxu0
        %1774 = vdwg.mxu0
        %v1775 = vadd.f32 %v1573, %v1769
        %v1776 = vadd.f32 %v1574, %v1772
        %s1777 = scalar_lea.vmem %s4, 1
        %v1778 = vld [vmem:[%s1777] sm:$0x1]
        %s1779 = scalar_lea.vmem %s5, 1
        %v1780 = vld [vmem:[%s1779] sm:$0x1]
        %s1781 = scalar_lea.vmem %s6, 1
        %v1782 = vld [vmem:[%s1781] sm:$0x1]
        %s1783 = scalar_lea.vmem %s7, 16
        %v1784 = vld [vmem:[%s1783] sm:$0xf]
        %v1785 = vld [vmem:[%s1783 + $0x4] sm:$0xf]
        %v1786 = vld [vmem:[%s1783 + $0x8] sm:$0xf]
        %v1787 = vld [vmem:[%s1783 + $0xc] sm:$0xf]
        %s1788 = scalar_lea.vmem %s8, 1
        %v1789 = vld [vmem:[%s1788] sm:$0x1]
        %s1790 = scalar_lea.vmem %s9, 32
        %v1791 = vld [vmem:[%s1790] sm:$0xf]
        %v1792 = vld [vmem:[%s1790 + $0x4] sm:$0xf]
        %v1793 = vld [vmem:[%s1790 + $0x8] sm:$0xf]
        %v1794 = vld [vmem:[%s1790 + $0xc] sm:$0xf]
        %v1795 = vld [vmem:[%s1790 + $0x10] sm:$0xf]
        %v1796 = vld [vmem:[%s1790 + $0x14] sm:$0xf]
        %v1797 = vld [vmem:[%s1790 + $0x18] sm:$0xf]
        %v1798 = vld [vmem:[%s1790 + $0x1c] sm:$0xf]
        %s1799 = scalar_lea.vmem %s10, 1
        %v1800 = vld [vmem:[%s1799] sm:$0x1]
        %v1801 = vpack.c.bf16 %v1776, %v1775
        %v1803 = vcombine.high %v1801, %v1801
        %v1805 = vunpack.c.l.s4 1983009808
        %v1806 = vunpack.c.0.s8 %v1805
        %v1807 = vlaneseq
        %v1808 = vshrl.u32 %v1807, 7
        %v1809 = vsub.s32 %v1806, %v1808
        %v1810 = vrot.slane %v1801, %v1809
        %v1812 = vunpack.c.l.s4 1983009808
        %v1813 = vunpack.c.0.s8 %v1812
        %v1814 = vlaneseq
        %v1815 = vshrl.u32 %v1814, 7
        %v1816 = vsub.s32 %v1813, %v1815
        %v1817 = vrot.slane %v1803, %v1816
        %v1818 = vcombine.high %v1810, %v1810
        %v1819 = vcombine.high %v1817, %v1817
        %s1820 = scalar_lea.vmem %s2, 32
        %v1821 = vld [vmem:[%s1820] sm:$0xf]
        %v1822 = vld [vmem:[%s1820 + $0x4] sm:$0xf]
        %v1823 = vld [vmem:[%s1820 + $0x8] sm:$0xf]
        %v1824 = vld [vmem:[%s1820 + $0xc] sm:$0xf]
        %s1825 = scalar_lea.vmem %s3, 32
        %v1826 = vld [vmem:[%s1825] sm:$0xf]
        %v1827 = vld [vmem:[%s1825 + $0x4] sm:$0xf]
        %v1828 = vld [vmem:[%s1825 + $0x8] sm:$0xf]
        %v1829 = vld [vmem:[%s1825 + $0xc] sm:$0xf]
        %v1834 = vunpack.c.l.b16 %v1821
        %v1835 = vunpack.c.l.b16 %v1822
        %v1836 = vunpack.c.l.b16 %v1823
        %v1837 = vunpack.c.l.b16 %v1824
        %v1838 = vpack.c.b16 %v1835, %v1834
        %v1839 = vpack.c.b16 %v1837, %v1836
        %v1843 = vsel %vm470, %v1801, 0
        %1845 = vmatprep.subr.bf16.mxu0 0
        %1846 = vmatpush1.bf16.msra.mxu0 %v1838
        %1847 = vmatprep.subr.bf16.mxu0 0
        %1848 = vmatpush1.bf16.msra.mxu0 %v1839
        %1849 = vmatprep.subr.bf16.mxu0 0
        %1850 = vmatpush1.bf16.msra.mxu0 0
        %1851 = vmatprep.subr.bf16.mxu0 0
        %1852 = vmatpush1.bf16.msra.mxu0 0
        %1853 = vmatprep.subr.bf16.mxu0 0
        %1854 = vmatpush1.bf16.msra.mxu0 0
        %1855 = vmatprep.subr.bf16.mxu0 0
        %1856 = vmatpush1.bf16.msra.mxu0 0
        %1857 = vmatprep.subr.bf16.mxu0 0
        %1858 = vmatpush1.bf16.msra.mxu0 0
        %1859 = vmatprep.subr.bf16.mxu0 0
        %1860 = vmatpush1.bf16.msra.mxu0 0
        %1861 = vmatprep.subr.bf16.mxu0 0
        %1862 = vmatpush1.bf16.msra.mxu0 0
        %1863 = vmatprep.subr.bf16.mxu0 0
        %1864 = vmatpush1.bf16.msra.mxu0 0
        %1865 = vmatprep.subr.bf16.mxu0 0
        %1866 = vmatpush1.bf16.msra.mxu0 0
        %1867 = vmatprep.subr.bf16.mxu0 0
        %1868 = vmatpush1.bf16.msra.mxu0 0
        %1869 = vmatprep.subr.bf16.mxu0 0
        %1870 = vmatpush1.bf16.msra.mxu0 0
        %1871 = vmatprep.subr.bf16.mxu0 0
        %1872 = vmatpush1.bf16.msra.mxu0 0
        %1873 = vmatprep.subr.bf16.mxu0 0
        %1874 = vmatpush1.bf16.msra.mxu0 0
        %1875 = vmatprep.subr.bf16.mxu0 0
        %1876 = vmatpush1.bf16.msra.mxu0 0
        %1877 = vmatprep.mubr.bf16.mxu0 0
        %1878 = vmatmul.mubr.bf16.gmra.mrb[0].mxu0 %v1843
        %v1879 = vpop.f32.mrb[0].mxu0
        %v1880 = vadd.f32 0.0, %v1879
        %v1881 = vpop.f32.mrb[0].mxu0
        %v1882 = vpop.f32.mrb[0].mxu0
        %v1883 = vadd.f32 0.0, %v1882
        %v1884 = vpop.f32.mrb[0].mxu0
        %1885 = vdwg.mxu0
        %v1888 = vcombine.high %v1880, %v1880
        %v1889 = vcombine.high %v1883, %v1883
        %v1892 = vpack.c.bf16 %v1880, %v1880
        %v1893 = vpack.c.bf16 %v1888, %v1888
        %v1894 = vpack.c.bf16 %v1883, %v1883
        %v1895 = vpack.c.bf16 %v1889, %v1889
        %v1897 = vsel %vm470, %v1892, 0
        %v1900 = vsel %vm470, %v1810, 0
        %1902 = vmatprep.subr.bf16.mxu0 0
        %1903 = vmatpush1.bf16.xpose.msra.mxu0 %v1900
        %1904 = vmatprep.subr.bf16.mxu0 0
        %1905 = vmatpush1.bf16.xpose.msra.mxu0 0
        %1906 = vmatprep.subr.bf16.mxu0 0
        %1907 = vmatpush1.bf16.xpose.msra.mxu0 0
        %1908 = vmatprep.subr.bf16.mxu0 0
        %1909 = vmatpush1.bf16.xpose.msra.mxu0 0
        %1910 = vmatprep.subr.bf16.mxu0 0
        %1911 = vmatpush1.bf16.xpose.msra.mxu0 0
        %1912 = vmatprep.subr.bf16.mxu0 0
        %1913 = vmatpush1.bf16.xpose.msra.mxu0 0
        %1914 = vmatprep.subr.bf16.mxu0 0
        %1915 = vmatpush1.bf16.xpose.msra.mxu0 0
        %1916 = vmatprep.subr.bf16.mxu0 0
        %1917 = vmatpush1.bf16.xpose.msra.mxu0 0
        %1918 = vmatprep.subr.bf16.mxu0 0
        %1919 = vmatpush1.bf16.xpose.msra.mxu0 0
        %1920 = vmatprep.subr.bf16.mxu0 0
        %1921 = vmatpush1.bf16.xpose.msra.mxu0 0
        %1922 = vmatprep.subr.bf16.mxu0 0
        %1923 = vmatpush1.bf16.xpose.msra.mxu0 0
        %1924 = vmatprep.subr.bf16.mxu0 0
        %1925 = vmatpush1.bf16.xpose.msra.mxu0 0
        %1926 = vmatprep.subr.bf16.mxu0 0
        %1927 = vmatpush1.bf16.xpose.msra.mxu0 0
        %1928 = vmatprep.subr.bf16.mxu0 0
        %1929 = vmatpush1.bf16.xpose.msra.mxu0 0
        %1930 = vmatprep.subr.bf16.mxu0 0
        %1931 = vmatpush1.bf16.xpose.msra.mxu0 0
        %1932 = vmatprep.subr.bf16.mxu0 0
        %1933 = vmatpush1.bf16.xpose.msra.mxu0 0
        %1934 = vmatprep.mubr.bf16.mxu0 0
        %1935 = vmatmul.mubr.bf16.gmra.mrb[0].mxu0 %v1897
        %v1936 = vpop.f32.mrb[0].mxu0
        %v1937 = vadd.f32 0.0, %v1936
        %v1938 = vpop.f32.mrb[0].mxu0
        %v1939 = vpop.f32.mrb[0].mxu0
        %v1940 = vpop.f32.mrb[0].mxu0
        %1941 = vdwg.mxu0
        %v1943 = vsel %vm470, %v1893, 0
        %v1946 = vsel %vm470, %v1818, 0
        %1948 = vmatprep.subr.bf16.mxu0 0
        %1949 = vmatpush1.bf16.xpose.msra.mxu0 %v1946
        %1950 = vmatprep.subr.bf16.mxu0 0
        %1951 = vmatpush1.bf16.xpose.msra.mxu0 0
        %1952 = vmatprep.subr.bf16.mxu0 0
        %1953 = vmatpush1.bf16.xpose.msra.mxu0 0
        %1954 = vmatprep.subr.bf16.mxu0 0
        %1955 = vmatpush1.bf16.xpose.msra.mxu0 0
        %1956 = vmatprep.subr.bf16.mxu0 0
        %1957 = vmatpush1.bf16.xpose.msra.mxu0 0
        %1958 = vmatprep.subr.bf16.mxu0 0
        %1959 = vmatpush1.bf16.xpose.msra.mxu0 0
        %1960 = vmatprep.subr.bf16.mxu0 0
        %1961 = vmatpush1.bf16.xpose.msra.mxu0 0
        %1962 = vmatprep.subr.bf16.mxu0 0
        %1963 = vmatpush1.bf16.xpose.msra.mxu0 0
        %1964 = vmatprep.subr.bf16.mxu0 0
        %1965 = vmatpush1.bf16.xpose.msra.mxu0 0
        %1966 = vmatprep.subr.bf16.mxu0 0
        %1967 = vmatpush1.bf16.xpose.msra.mxu0 0
        %1968 = vmatprep.subr.bf16.mxu0 0
        %1969 = vmatpush1.bf16.xpose.msra.mxu0 0
        %1970 = vmatprep.subr.bf16.mxu0 0
        %1971 = vmatpush1.bf16.xpose.msra.mxu0 0
        %1972 = vmatprep.subr.bf16.mxu0 0
        %1973 = vmatpush1.bf16.xpose.msra.mxu0 0
        %1974 = vmatprep.subr.bf16.mxu0 0
        %1975 = vmatpush1.bf16.xpose.msra.mxu0 0
        %1976 = vmatprep.subr.bf16.mxu0 0
        %1977 = vmatpush1.bf16.xpose.msra.mxu0 0
        %1978 = vmatprep.subr.bf16.mxu0 0
        %1979 = vmatpush1.bf16.xpose.msra.mxu0 0
        %1980 = vmatprep.mubr.bf16.mxu0 0
        %1981 = vmatmul.mubr.bf16.gmra.mrb[0].mxu0 %v1943
        %v1982 = vpop.f32.mrb[0].mxu0
        %v1983 = vadd.f32 0.0, %v1982
        %v1984 = vpop.f32.mrb[0].mxu0
        %v1985 = vpop.f32.mrb[0].mxu0
        %v1986 = vpop.f32.mrb[0].mxu0
        %1987 = vdwg.mxu0
        %v1989 = vsel %vm470, %v1894, 0
        %v1992 = vsel %vm470, %v1817, 0
        %1994 = vmatprep.subr.bf16.mxu0 0
        %1995 = vmatpush1.bf16.xpose.msra.mxu0 %v1992
        %1996 = vmatprep.subr.bf16.mxu0 0
        %1997 = vmatpush1.bf16.xpose.msra.mxu0 0
        %1998 = vmatprep.subr.bf16.mxu0 0
        %1999 = vmatpush1.bf16.xpose.msra.mxu0 0
        %2000 = vmatprep.subr.bf16.mxu0 0
        %2001 = vmatpush1.bf16.xpose.msra.mxu0 0
        %2002 = vmatprep.subr.bf16.mxu0 0
        %2003 = vmatpush1.bf16.xpose.msra.mxu0 0
        %2004 = vmatprep.subr.bf16.mxu0 0
        %2005 = vmatpush1.bf16.xpose.msra.mxu0 0
        %2006 = vmatprep.subr.bf16.mxu0 0
        %2007 = vmatpush1.bf16.xpose.msra.mxu0 0
        %2008 = vmatprep.subr.bf16.mxu0 0
        %2009 = vmatpush1.bf16.xpose.msra.mxu0 0
        %2010 = vmatprep.subr.bf16.mxu0 0
        %2011 = vmatpush1.bf16.xpose.msra.mxu0 0
        %2012 = vmatprep.subr.bf16.mxu0 0
        %2013 = vmatpush1.bf16.xpose.msra.mxu0 0
        %2014 = vmatprep.subr.bf16.mxu0 0
        %2015 = vmatpush1.bf16.xpose.msra.mxu0 0
        %2016 = vmatprep.subr.bf16.mxu0 0
        %2017 = vmatpush1.bf16.xpose.msra.mxu0 0
        %2018 = vmatprep.subr.bf16.mxu0 0
        %2019 = vmatpush1.bf16.xpose.msra.mxu0 0
        %2020 = vmatprep.subr.bf16.mxu0 0
        %2021 = vmatpush1.bf16.xpose.msra.mxu0 0
        %2022 = vmatprep.subr.bf16.mxu0 0
        %2023 = vmatpush1.bf16.xpose.msra.mxu0 0
        %2024 = vmatprep.subr.bf16.mxu0 0
        %2025 = vmatpush1.bf16.xpose.msra.mxu0 0
        %2026 = vmatprep.mubr.bf16.mxu0 0
        %2027 = vmatmul.mubr.bf16.gmra.mrb[0].mxu0 %v1989
        %v2028 = vpop.f32.mrb[0].mxu0
        %v2029 = vadd.f32 0.0, %v2028
        %v2030 = vpop.f32.mrb[0].mxu0
        %v2031 = vpop.f32.mrb[0].mxu0
        %v2032 = vpop.f32.mrb[0].mxu0
        %2033 = vdwg.mxu0
        %v2035 = vsel %vm470, %v1895, 0
        %v2038 = vsel %vm470, %v1819, 0
        %2040 = vmatprep.subr.bf16.mxu0 0
        %2041 = vmatpush1.bf16.xpose.msra.mxu0 %v2038
        %2042 = vmatprep.subr.bf16.mxu0 0
        %2043 = vmatpush1.bf16.xpose.msra.mxu0 0
        %2044 = vmatprep.subr.bf16.mxu0 0
        %2045 = vmatpush1.bf16.xpose.msra.mxu0 0
        %2046 = vmatprep.subr.bf16.mxu0 0
        %2047 = vmatpush1.bf16.xpose.msra.mxu0 0
        %2048 = vmatprep.subr.bf16.mxu0 0
        %2049 = vmatpush1.bf16.xpose.msra.mxu0 0
        %2050 = vmatprep.subr.bf16.mxu0 0
        %2051 = vmatpush1.bf16.xpose.msra.mxu0 0
        %2052 = vmatprep.subr.bf16.mxu0 0
        %2053 = vmatpush1.bf16.xpose.msra.mxu0 0
        %2054 = vmatprep.subr.bf16.mxu0 0
        %2055 = vmatpush1.bf16.xpose.msra.mxu0 0
        %2056 = vmatprep.subr.bf16.mxu0 0
        %2057 = vmatpush1.bf16.xpose.msra.mxu0 0
        %2058 = vmatprep.subr.bf16.mxu0 0
        %2059 = vmatpush1.bf16.xpose.msra.mxu0 0
        %2060 = vmatprep.subr.bf16.mxu0 0
        %2061 = vmatpush1.bf16.xpose.msra.mxu0 0
        %2062 = vmatprep.subr.bf16.mxu0 0
        %2063 = vmatpush1.bf16.xpose.msra.mxu0 0
        %2064 = vmatprep.subr.bf16.mxu0 0
        %2065 = vmatpush1.bf16.xpose.msra.mxu0 0
        %2066 = vmatprep.subr.bf16.mxu0 0
        %2067 = vmatpush1.bf16.xpose.msra.mxu0 0
        %2068 = vmatprep.subr.bf16.mxu0 0
        %2069 = vmatpush1.bf16.xpose.msra.mxu0 0
        %2070 = vmatprep.subr.bf16.mxu0 0
        %2071 = vmatpush1.bf16.xpose.msra.mxu0 0
        %2072 = vmatprep.mubr.bf16.mxu0 0
        %2073 = vmatmul.mubr.bf16.gmra.mrb[0].mxu0 %v2035
        %v2074 = vpop.f32.mrb[0].mxu0
        %v2075 = vadd.f32 0.0, %v2074
        %v2076 = vpop.f32.mrb[0].mxu0
        %v2077 = vpop.f32.mrb[0].mxu0
        %v2078 = vpop.f32.mrb[0].mxu0
        %2079 = vdwg.mxu0
        %v2080 = vsel %vm710, %v1937, -1e+30
        %v2081 = vsel %vm710, %v1983, -1e+30
        %v2082 = vsel %vm710, %v2029, -1e+30
        %v2083 = vsel %vm710, %v2075, -1e+30
        %v2084 = vsel %vm715, %v2080, -inf
        %2085 = vmax.xlane.f32.xlu0 %v2084
        %v2086 = vpop.xlane.xlu0 %2085
        %v2087 = vsel %vm715, %v2081, -inf
        %2088 = vmax.xlane.f32.xlu0 %v2087
        %v2089 = vpop.xlane.xlu0 %2088
        %v2090 = vsel %vm715, %v2082, -inf
        %2091 = vmax.xlane.f32.xlu0 %v2090
        %v2092 = vpop.xlane.xlu0 %2091
        %v2093 = vsel %vm715, %v2083, -inf
        %2094 = vmax.xlane.f32.xlu0 %v2093
        %v2095 = vpop.xlane.xlu0 %2094
        %v2096 = vsub.f32 %v2080, %v2086
        %v2097 = vsub.f32 %v2081, %v2089
        %v2098 = vsub.f32 %v2082, %v2092
        %v2099 = vsub.f32 %v2083, %v2095
        %v2100 = vmul.f32 %v2096, 1.442695
        %v2101 = vpow.pop %v2100
        %v2102 = vmul.f32 %v2097, 1.442695
        %v2103 = vpow.pop %v2102
        %v2104 = vmul.f32 %v2098, 1.442695
        %v2105 = vpow.pop %v2104
        %v2106 = vmul.f32 %v2099, 1.442695
        %v2107 = vpow.pop %v2106
        %v2108 = vsel %vm715, %v2101, 0.0
        %2109 = vadd.xlane.f32.xlu0 %v2108
        %v2110 = vpop.xlane.xlu0 %2109
        %v2111 = vsel %vm715, %v2103, 0.0
        %2112 = vadd.xlane.f32.xlu0 %v2111
        %v2113 = vpop.xlane.xlu0 %2112
        %v2114 = vsel %vm715, %v2105, 0.0
        %2115 = vadd.xlane.f32.xlu0 %v2114
        %v2116 = vpop.xlane.xlu0 %2115
        %v2117 = vsel %vm715, %v2107, 0.0
        %2118 = vadd.xlane.f32.xlu0 %v2117
        %v2119 = vpop.xlane.xlu0 %2118
        %v2120 = vrcp.pop %v2110
        %v2121 = vrcp.pop %v2113
        %v2122 = vrcp.pop %v2116
        %v2123 = vrcp.pop %v2119
        %v2124 = vmul.f32 %v2101, %v2120
        %v2125 = vmul.f32 %v2103, %v2121
        %v2126 = vmul.f32 %v2105, %v2122
        %v2127 = vmul.f32 %v2107, %v2123
        %v2132 = vunpack.c.l.b16 %v1826
        %v2133 = vunpack.c.l.b16 %v1827
        %v2134 = vunpack.c.l.b16 %v1828
        %v2135 = vunpack.c.l.b16 %v1829
        %v2136 = vpack.c.b16 %v2133, %v2132
        %v2137 = vpack.c.b16 %v2135, %v2134
        %2140 = vmatprep.subr.bf16.mxu0 0
        %2141 = vmatpush1.bf16.msra.mxu0 %v2136
        %2142 = vmatprep.subr.bf16.mxu0 0
        %2143 = vmatpush1.bf16.msra.mxu0 %v2137
        %2144 = vmatprep.subr.bf16.mxu0 0
        %2145 = vmatpush1.bf16.msra.mxu0 0
        %2146 = vmatprep.subr.bf16.mxu0 0
        %2147 = vmatpush1.bf16.msra.mxu0 0
        %2148 = vmatprep.subr.bf16.mxu0 0
        %2149 = vmatpush1.bf16.msra.mxu0 0
        %2150 = vmatprep.subr.bf16.mxu0 0
        %2151 = vmatpush1.bf16.msra.mxu0 0
        %2152 = vmatprep.subr.bf16.mxu0 0
        %2153 = vmatpush1.bf16.msra.mxu0 0
        %2154 = vmatprep.subr.bf16.mxu0 0
        %2155 = vmatpush1.bf16.msra.mxu0 0
        %2156 = vmatprep.subr.bf16.mxu0 0
        %2157 = vmatpush1.bf16.msra.mxu0 0
        %2158 = vmatprep.subr.bf16.mxu0 0
        %2159 = vmatpush1.bf16.msra.mxu0 0
        %2160 = vmatprep.subr.bf16.mxu0 0
        %2161 = vmatpush1.bf16.msra.mxu0 0
        %2162 = vmatprep.subr.bf16.mxu0 0
        %2163 = vmatpush1.bf16.msra.mxu0 0
        %2164 = vmatprep.subr.bf16.mxu0 0
        %2165 = vmatpush1.bf16.msra.mxu0 0
        %2166 = vmatprep.subr.bf16.mxu0 0
        %2167 = vmatpush1.bf16.msra.mxu0 0
        %2168 = vmatprep.subr.bf16.mxu0 0
        %2169 = vmatpush1.bf16.msra.mxu0 0
        %2170 = vmatprep.subr.bf16.mxu0 0
        %2171 = vmatpush1.bf16.msra.mxu0 0
        %2172 = vmatprep.mubr.bf16.mxu0 0
        %2173 = vmatmul.mubr.bf16.gmra.mrb[0].mxu0 %v1843
        %v2174 = vpop.f32.mrb[0].mxu0
        %v2175 = vadd.f32 0.0, %v2174
        %v2176 = vpop.f32.mrb[0].mxu0
        %v2177 = vpop.f32.mrb[0].mxu0
        %v2178 = vadd.f32 0.0, %v2177
        %v2179 = vpop.f32.mrb[0].mxu0
        %2180 = vdwg.mxu0
        %v2183 = vcombine.high %v2175, %v2175
        %v2184 = vcombine.high %v2178, %v2178
        %v2187 = vpack.c.bf16 %v2175, %v2175
        %v2188 = vpack.c.bf16 %v2183, %v2183
        %v2189 = vpack.c.bf16 %v2178, %v2178
        %v2190 = vpack.c.bf16 %v2184, %v2184
        %v2191 = vpack.c.bf16 %v2124, %v2124
        %v2192 = vpack.c.bf16 %v2125, %v2125
        %v2193 = vpack.c.bf16 %v2126, %v2126
        %v2194 = vpack.c.bf16 %v2127, %v2127
        %s2195 = scalar_lea.vmem %s2, 48
        %v2196 = vld [vmem:[%s2195] sm:$0xf]
        %v2197 = vld [vmem:[%s2195 + $0x4] sm:$0xf]
        %v2198 = vld [vmem:[%s2195 + $0x8] sm:$0xf]
        %v2199 = vld [vmem:[%s2195 + $0xc] sm:$0xf]
        %s2200 = scalar_lea.vmem %s3, 48
        %v2201 = vld [vmem:[%s2200] sm:$0xf]
        %v2202 = vld [vmem:[%s2200 + $0x4] sm:$0xf]
        %v2203 = vld [vmem:[%s2200 + $0x8] sm:$0xf]
        %v2204 = vld [vmem:[%s2200 + $0xc] sm:$0xf]
        %v2209 = vunpack.c.l.b16 %v2196
        %v2210 = vunpack.c.l.b16 %v2197
        %v2211 = vunpack.c.l.b16 %v2198
        %v2212 = vunpack.c.l.b16 %v2199
        %v2213 = vpack.c.b16 %v2210, %v2209
        %v2214 = vpack.c.b16 %v2212, %v2211
        %2217 = vmatprep.subr.bf16.mxu0 0
        %2218 = vmatpush1.bf16.msra.mxu0 %v2213
        %2219 = vmatprep.subr.bf16.mxu0 0
        %2220 = vmatpush1.bf16.msra.mxu0 %v2214
        %2221 = vmatprep.subr.bf16.mxu0 0
        %2222 = vmatpush1.bf16.msra.mxu0 0
        %2223 = vmatprep.subr.bf16.mxu0 0
        %2224 = vmatpush1.bf16.msra.mxu0 0
        %2225 = vmatprep.subr.bf16.mxu0 0
        %2226 = vmatpush1.bf16.msra.mxu0 0
        %2227 = vmatprep.subr.bf16.mxu0 0
        %2228 = vmatpush1.bf16.msra.mxu0 0
        %2229 = vmatprep.subr.bf16.mxu0 0
        %2230 = vmatpush1.bf16.msra.mxu0 0
        %2231 = vmatprep.subr.bf16.mxu0 0
        %2232 = vmatpush1.bf16.msra.mxu0 0
        %2233 = vmatprep.subr.bf16.mxu0 0
        %2234 = vmatpush1.bf16.msra.mxu0 0
        %2235 = vmatprep.subr.bf16.mxu0 0
        %2236 = vmatpush1.bf16.msra.mxu0 0
        %2237 = vmatprep.subr.bf16.mxu0 0
        %2238 = vmatpush1.bf16.msra.mxu0 0
        %2239 = vmatprep.subr.bf16.mxu0 0
        %2240 = vmatpush1.bf16.msra.mxu0 0
        %2241 = vmatprep.subr.bf16.mxu0 0
        %2242 = vmatpush1.bf16.msra.mxu0 0
        %2243 = vmatprep.subr.bf16.mxu0 0
        %2244 = vmatpush1.bf16.msra.mxu0 0
        %2245 = vmatprep.subr.bf16.mxu0 0
        %2246 = vmatpush1.bf16.msra.mxu0 0
        %2247 = vmatprep.subr.bf16.mxu0 0
        %2248 = vmatpush1.bf16.msra.mxu0 0
        %2249 = vmatprep.mubr.bf16.mxu0 0
        %2250 = vmatmul.mubr.bf16.gmra.mrb[0].mxu0 %v1843
        %v2251 = vpop.f32.mrb[0].mxu0
        %v2252 = vadd.f32 0.0, %v2251
        %v2253 = vpop.f32.mrb[0].mxu0
        %v2254 = vpop.f32.mrb[0].mxu0
        %v2255 = vadd.f32 0.0, %v2254
        %v2256 = vpop.f32.mrb[0].mxu0
        %2257 = vdwg.mxu0
        %v2260 = vcombine.high %v2252, %v2252
        %v2261 = vcombine.high %v2255, %v2255
        %v2264 = vpack.c.bf16 %v2252, %v2252
        %v2265 = vpack.c.bf16 %v2260, %v2260
        %v2266 = vpack.c.bf16 %v2255, %v2255
        %v2267 = vpack.c.bf16 %v2261, %v2261
        %v2269 = vsel %vm470, %v2264, 0
        %2271 = vmatprep.subr.bf16.mxu0 0
        %2272 = vmatpush1.bf16.xpose.msra.mxu0 %v1900
        %2273 = vmatprep.subr.bf16.mxu0 0
        %2274 = vmatpush1.bf16.xpose.msra.mxu0 0
        %2275 = vmatprep.subr.bf16.mxu0 0
        %2276 = vmatpush1.bf16.xpose.msra.mxu0 0
        %2277 = vmatprep.subr.bf16.mxu0 0
        %2278 = vmatpush1.bf16.xpose.msra.mxu0 0
        %2279 = vmatprep.subr.bf16.mxu0 0
        %2280 = vmatpush1.bf16.xpose.msra.mxu0 0
        %2281 = vmatprep.subr.bf16.mxu0 0
        %2282 = vmatpush1.bf16.xpose.msra.mxu0 0
        %2283 = vmatprep.subr.bf16.mxu0 0
        %2284 = vmatpush1.bf16.xpose.msra.mxu0 0
        %2285 = vmatprep.subr.bf16.mxu0 0
        %2286 = vmatpush1.bf16.xpose.msra.mxu0 0
        %2287 = vmatprep.subr.bf16.mxu0 0
        %2288 = vmatpush1.bf16.xpose.msra.mxu0 0
        %2289 = vmatprep.subr.bf16.mxu0 0
        %2290 = vmatpush1.bf16.xpose.msra.mxu0 0
        %2291 = vmatprep.subr.bf16.mxu0 0
        %2292 = vmatpush1.bf16.xpose.msra.mxu0 0
        %2293 = vmatprep.subr.bf16.mxu0 0
        %2294 = vmatpush1.bf16.xpose.msra.mxu0 0
        %2295 = vmatprep.subr.bf16.mxu0 0
        %2296 = vmatpush1.bf16.xpose.msra.mxu0 0
        %2297 = vmatprep.subr.bf16.mxu0 0
        %2298 = vmatpush1.bf16.xpose.msra.mxu0 0
        %2299 = vmatprep.subr.bf16.mxu0 0
        %2300 = vmatpush1.bf16.xpose.msra.mxu0 0
        %2301 = vmatprep.subr.bf16.mxu0 0
        %2302 = vmatpush1.bf16.xpose.msra.mxu0 0
        %2303 = vmatprep.mubr.bf16.mxu0 0
        %2304 = vmatmul.mubr.bf16.gmra.mrb[0].mxu0 %v2269
        %v2305 = vpop.f32.mrb[0].mxu0
        %v2306 = vadd.f32 0.0, %v2305
        %v2307 = vpop.f32.mrb[0].mxu0
        %v2308 = vpop.f32.mrb[0].mxu0
        %v2309 = vpop.f32.mrb[0].mxu0
        %2310 = vdwg.mxu0
        %v2312 = vsel %vm470, %v2265, 0
        %2314 = vmatprep.subr.bf16.mxu0 0
        %2315 = vmatpush1.bf16.xpose.msra.mxu0 %v1946
        %2316 = vmatprep.subr.bf16.mxu0 0
        %2317 = vmatpush1.bf16.xpose.msra.mxu0 0
        %2318 = vmatprep.subr.bf16.mxu0 0
        %2319 = vmatpush1.bf16.xpose.msra.mxu0 0
        %2320 = vmatprep.subr.bf16.mxu0 0
        %2321 = vmatpush1.bf16.xpose.msra.mxu0 0
        %2322 = vmatprep.subr.bf16.mxu0 0
        %2323 = vmatpush1.bf16.xpose.msra.mxu0 0
        %2324 = vmatprep.subr.bf16.mxu0 0
        %2325 = vmatpush1.bf16.xpose.msra.mxu0 0
        %2326 = vmatprep.subr.bf16.mxu0 0
        %2327 = vmatpush1.bf16.xpose.msra.mxu0 0
        %2328 = vmatprep.subr.bf16.mxu0 0
        %2329 = vmatpush1.bf16.xpose.msra.mxu0 0
        %2330 = vmatprep.subr.bf16.mxu0 0
        %2331 = vmatpush1.bf16.xpose.msra.mxu0 0
        %2332 = vmatprep.subr.bf16.mxu0 0
        %2333 = vmatpush1.bf16.xpose.msra.mxu0 0
        %2334 = vmatprep.subr.bf16.mxu0 0
        %2335 = vmatpush1.bf16.xpose.msra.mxu0 0
        %2336 = vmatprep.subr.bf16.mxu0 0
        %2337 = vmatpush1.bf16.xpose.msra.mxu0 0
        %2338 = vmatprep.subr.bf16.mxu0 0
        %2339 = vmatpush1.bf16.xpose.msra.mxu0 0
        %2340 = vmatprep.subr.bf16.mxu0 0
        %2341 = vmatpush1.bf16.xpose.msra.mxu0 0
        %2342 = vmatprep.subr.bf16.mxu0 0
        %2343 = vmatpush1.bf16.xpose.msra.mxu0 0
        %2344 = vmatprep.subr.bf16.mxu0 0
        %2345 = vmatpush1.bf16.xpose.msra.mxu0 0
        %2346 = vmatprep.mubr.bf16.mxu0 0
        %2347 = vmatmul.mubr.bf16.gmra.mrb[0].mxu0 %v2312
        %v2348 = vpop.f32.mrb[0].mxu0
        %v2349 = vadd.f32 0.0, %v2348
        %v2350 = vpop.f32.mrb[0].mxu0
        %v2351 = vpop.f32.mrb[0].mxu0
        %v2352 = vpop.f32.mrb[0].mxu0
        %2353 = vdwg.mxu0
        %v2355 = vsel %vm470, %v2266, 0
        %2357 = vmatprep.subr.bf16.mxu0 0
        %2358 = vmatpush1.bf16.xpose.msra.mxu0 %v1992
        %2359 = vmatprep.subr.bf16.mxu0 0
        %2360 = vmatpush1.bf16.xpose.msra.mxu0 0
        %2361 = vmatprep.subr.bf16.mxu0 0
        %2362 = vmatpush1.bf16.xpose.msra.mxu0 0
        %2363 = vmatprep.subr.bf16.mxu0 0
        %2364 = vmatpush1.bf16.xpose.msra.mxu0 0
        %2365 = vmatprep.subr.bf16.mxu0 0
        %2366 = vmatpush1.bf16.xpose.msra.mxu0 0
        %2367 = vmatprep.subr.bf16.mxu0 0
        %2368 = vmatpush1.bf16.xpose.msra.mxu0 0
        %2369 = vmatprep.subr.bf16.mxu0 0
        %2370 = vmatpush1.bf16.xpose.msra.mxu0 0
        %2371 = vmatprep.subr.bf16.mxu0 0
        %2372 = vmatpush1.bf16.xpose.msra.mxu0 0
        %2373 = vmatprep.subr.bf16.mxu0 0
        %2374 = vmatpush1.bf16.xpose.msra.mxu0 0
        %2375 = vmatprep.subr.bf16.mxu0 0
        %2376 = vmatpush1.bf16.xpose.msra.mxu0 0
        %2377 = vmatprep.subr.bf16.mxu0 0
        %2378 = vmatpush1.bf16.xpose.msra.mxu0 0
        %2379 = vmatprep.subr.bf16.mxu0 0
        %2380 = vmatpush1.bf16.xpose.msra.mxu0 0
        %2381 = vmatprep.subr.bf16.mxu0 0
        %2382 = vmatpush1.bf16.xpose.msra.mxu0 0
        %2383 = vmatprep.subr.bf16.mxu0 0
        %2384 = vmatpush1.bf16.xpose.msra.mxu0 0
        %2385 = vmatprep.subr.bf16.mxu0 0
        %2386 = vmatpush1.bf16.xpose.msra.mxu0 0
        %2387 = vmatprep.subr.bf16.mxu0 0
        %2388 = vmatpush1.bf16.xpose.msra.mxu0 0
        %2389 = vmatprep.mubr.bf16.mxu0 0
        %2390 = vmatmul.mubr.bf16.gmra.mrb[0].mxu0 %v2355
        %v2391 = vpop.f32.mrb[0].mxu0
        %v2392 = vadd.f32 0.0, %v2391
        %v2393 = vpop.f32.mrb[0].mxu0
        %v2394 = vpop.f32.mrb[0].mxu0
        %v2395 = vpop.f32.mrb[0].mxu0
        %2396 = vdwg.mxu0
        %v2398 = vsel %vm470, %v2267, 0
        %2400 = vmatprep.subr.bf16.mxu0 0
        %2401 = vmatpush1.bf16.xpose.msra.mxu0 %v2038
        %2402 = vmatprep.subr.bf16.mxu0 0
        %2403 = vmatpush1.bf16.xpose.msra.mxu0 0
        %2404 = vmatprep.subr.bf16.mxu0 0
        %2405 = vmatpush1.bf16.xpose.msra.mxu0 0
        %2406 = vmatprep.subr.bf16.mxu0 0
        %2407 = vmatpush1.bf16.xpose.msra.mxu0 0
        %2408 = vmatprep.subr.bf16.mxu0 0
        %2409 = vmatpush1.bf16.xpose.msra.mxu0 0
        %2410 = vmatprep.subr.bf16.mxu0 0
        %2411 = vmatpush1.bf16.xpose.msra.mxu0 0
        %2412 = vmatprep.subr.bf16.mxu0 0
        %2413 = vmatpush1.bf16.xpose.msra.mxu0 0
        %2414 = vmatprep.subr.bf16.mxu0 0
        %2415 = vmatpush1.bf16.xpose.msra.mxu0 0
        %2416 = vmatprep.subr.bf16.mxu0 0
        %2417 = vmatpush1.bf16.xpose.msra.mxu0 0
        %2418 = vmatprep.subr.bf16.mxu0 0
        %2419 = vmatpush1.bf16.xpose.msra.mxu0 0
        %2420 = vmatprep.subr.bf16.mxu0 0
        %2421 = vmatpush1.bf16.xpose.msra.mxu0 0
        %2422 = vmatprep.subr.bf16.mxu0 0
        %2423 = vmatpush1.bf16.xpose.msra.mxu0 0
        %2424 = vmatprep.subr.bf16.mxu0 0
        %2425 = vmatpush1.bf16.xpose.msra.mxu0 0
        %2426 = vmatprep.subr.bf16.mxu0 0
        %2427 = vmatpush1.bf16.xpose.msra.mxu0 0
        %2428 = vmatprep.subr.bf16.mxu0 0
        %2429 = vmatpush1.bf16.xpose.msra.mxu0 0
        %2430 = vmatprep.subr.bf16.mxu0 0
        %2431 = vmatpush1.bf16.xpose.msra.mxu0 0
        %2432 = vmatprep.mubr.bf16.mxu0 0
        %2433 = vmatmul.mubr.bf16.gmra.mrb[0].mxu0 %v2398
        %v2434 = vpop.f32.mrb[0].mxu0
        %v2435 = vadd.f32 0.0, %v2434
        %v2436 = vpop.f32.mrb[0].mxu0
        %v2437 = vpop.f32.mrb[0].mxu0
        %v2438 = vpop.f32.mrb[0].mxu0
        %2439 = vdwg.mxu0
        %v2440 = vsel %vm710, %v2306, -1e+30
        %v2441 = vsel %vm710, %v2349, -1e+30
        %v2442 = vsel %vm710, %v2392, -1e+30
        %v2443 = vsel %vm710, %v2435, -1e+30
        %v2444 = vsel %vm715, %v2440, -inf
        %2445 = vmax.xlane.f32.xlu0 %v2444
        %v2446 = vpop.xlane.xlu0 %2445
        %v2447 = vsel %vm715, %v2441, -inf
        %2448 = vmax.xlane.f32.xlu0 %v2447
        %v2449 = vpop.xlane.xlu0 %2448
        %v2450 = vsel %vm715, %v2442, -inf
        %2451 = vmax.xlane.f32.xlu0 %v2450
        %v2452 = vpop.xlane.xlu0 %2451
        %v2453 = vsel %vm715, %v2443, -inf
        %2454 = vmax.xlane.f32.xlu0 %v2453
        %v2455 = vpop.xlane.xlu0 %2454
        %v2456 = vsub.f32 %v2440, %v2446
        %v2457 = vsub.f32 %v2441, %v2449
        %v2458 = vsub.f32 %v2442, %v2452
        %v2459 = vsub.f32 %v2443, %v2455
        %v2460 = vmul.f32 %v2456, 1.442695
        %v2461 = vpow.pop %v2460
        %v2462 = vmul.f32 %v2457, 1.442695
        %v2463 = vpow.pop %v2462
        %v2464 = vmul.f32 %v2458, 1.442695
        %v2465 = vpow.pop %v2464
        %v2466 = vmul.f32 %v2459, 1.442695
        %v2467 = vpow.pop %v2466
        %v2468 = vsel %vm715, %v2461, 0.0
        %2469 = vadd.xlane.f32.xlu0 %v2468
        %v2470 = vpop.xlane.xlu0 %2469
        %v2471 = vsel %vm715, %v2463, 0.0
        %2472 = vadd.xlane.f32.xlu0 %v2471
        %v2473 = vpop.xlane.xlu0 %2472
        %v2474 = vsel %vm715, %v2465, 0.0
        %2475 = vadd.xlane.f32.xlu0 %v2474
        %v2476 = vpop.xlane.xlu0 %2475
        %v2477 = vsel %vm715, %v2467, 0.0
        %2478 = vadd.xlane.f32.xlu0 %v2477
        %v2479 = vpop.xlane.xlu0 %2478
        %v2480 = vrcp.pop %v2470
        %v2481 = vrcp.pop %v2473
        %v2482 = vrcp.pop %v2476
        %v2483 = vrcp.pop %v2479
        %v2484 = vmul.f32 %v2461, %v2480
        %v2485 = vmul.f32 %v2463, %v2481
        %v2486 = vmul.f32 %v2465, %v2482
        %v2487 = vmul.f32 %v2467, %v2483
        %v2492 = vunpack.c.l.b16 %v2201
        %v2493 = vunpack.c.l.b16 %v2202
        %v2494 = vunpack.c.l.b16 %v2203
        %v2495 = vunpack.c.l.b16 %v2204
        %v2496 = vpack.c.b16 %v2493, %v2492
        %v2497 = vpack.c.b16 %v2495, %v2494
        %2500 = vmatprep.subr.bf16.mxu0 0
        %2501 = vmatpush1.bf16.msra.mxu0 %v2496
        %2502 = vmatprep.subr.bf16.mxu0 0
        %2503 = vmatpush1.bf16.msra.mxu0 %v2497
        %2504 = vmatprep.subr.bf16.mxu0 0
        %2505 = vmatpush1.bf16.msra.mxu0 0
        %2506 = vmatprep.subr.bf16.mxu0 0
        %2507 = vmatpush1.bf16.msra.mxu0 0
        %2508 = vmatprep.subr.bf16.mxu0 0
        %2509 = vmatpush1.bf16.msra.mxu0 0
        %2510 = vmatprep.subr.bf16.mxu0 0
        %2511 = vmatpush1.bf16.msra.mxu0 0
        %2512 = vmatprep.subr.bf16.mxu0 0
        %2513 = vmatpush1.bf16.msra.mxu0 0
        %2514 = vmatprep.subr.bf16.mxu0 0
        %2515 = vmatpush1.bf16.msra.mxu0 0
        %2516 = vmatprep.subr.bf16.mxu0 0
        %2517 = vmatpush1.bf16.msra.mxu0 0
        %2518 = vmatprep.subr.bf16.mxu0 0
        %2519 = vmatpush1.bf16.msra.mxu0 0
        %2520 = vmatprep.subr.bf16.mxu0 0
        %2521 = vmatpush1.bf16.msra.mxu0 0
        %2522 = vmatprep.subr.bf16.mxu0 0
        %2523 = vmatpush1.bf16.msra.mxu0 0
        %2524 = vmatprep.subr.bf16.mxu0 0
        %2525 = vmatpush1.bf16.msra.mxu0 0
        %2526 = vmatprep.subr.bf16.mxu0 0
        %2527 = vmatpush1.bf16.msra.mxu0 0
        %2528 = vmatprep.subr.bf16.mxu0 0
        %2529 = vmatpush1.bf16.msra.mxu0 0
        %2530 = vmatprep.subr.bf16.mxu0 0
        %2531 = vmatpush1.bf16.msra.mxu0 0
        %2532 = vmatprep.mubr.bf16.mxu0 0
        %2533 = vmatmul.mubr.bf16.gmra.mrb[0].mxu0 %v1843
        %v2534 = vpop.f32.mrb[0].mxu0
        %v2535 = vadd.f32 0.0, %v2534
        %v2536 = vpop.f32.mrb[0].mxu0
        %v2537 = vpop.f32.mrb[0].mxu0
        %v2538 = vadd.f32 0.0, %v2537
        %v2539 = vpop.f32.mrb[0].mxu0
        %2540 = vdwg.mxu0
        %v2543 = vcombine.high %v2535, %v2535
        %v2544 = vcombine.high %v2538, %v2538
        %v2547 = vpack.c.bf16 %v2535, %v2535
        %v2548 = vpack.c.bf16 %v2543, %v2543
        %v2549 = vpack.c.bf16 %v2538, %v2538
        %v2550 = vpack.c.bf16 %v2544, %v2544
        %v2551 = vpack.c.bf16 %v2484, %v2484
        %v2552 = vpack.c.bf16 %v2485, %v2485
        %v2553 = vpack.c.bf16 %v2486, %v2486
        %v2554 = vpack.c.bf16 %v2487, %v2487
        %v2556 = vsel %vm1187, %v2551, 0
        %v2559 = vsel %vm1191, %v2547, 0
        %2561 = vmatprep.subr.bf16.mxu0 0
        %2562 = vmatpush1.bf16.msra.mxu0 %v2559
        %2563 = vmatprep.subr.bf16.mxu0 0
        %2564 = vmatpush1.bf16.msra.mxu0 0
        %2565 = vmatprep.subr.bf16.mxu0 0
        %2566 = vmatpush1.bf16.msra.mxu0 0
        %2567 = vmatprep.subr.bf16.mxu0 0
        %2568 = vmatpush1.bf16.msra.mxu0 0
        %2569 = vmatprep.subr.bf16.mxu0 0
        %2570 = vmatpush1.bf16.msra.mxu0 0
        %2571 = vmatprep.subr.bf16.mxu0 0
        %2572 = vmatpush1.bf16.msra.mxu0 0
        %2573 = vmatprep.subr.bf16.mxu0 0
        %2574 = vmatpush1.bf16.msra.mxu0 0
        %2575 = vmatprep.subr.bf16.mxu0 0
        %2576 = vmatpush1.bf16.msra.mxu0 0
        %2577 = vmatprep.subr.bf16.mxu0 0
        %2578 = vmatpush1.bf16.msra.mxu0 0
        %2579 = vmatprep.subr.bf16.mxu0 0
        %2580 = vmatpush1.bf16.msra.mxu0 0
        %2581 = vmatprep.subr.bf16.mxu0 0
        %2582 = vmatpush1.bf16.msra.mxu0 0
        %2583 = vmatprep.subr.bf16.mxu0 0
        %2584 = vmatpush1.bf16.msra.mxu0 0
        %2585 = vmatprep.subr.bf16.mxu0 0
        %2586 = vmatpush1.bf16.msra.mxu0 0
        %2587 = vmatprep.subr.bf16.mxu0 0
        %2588 = vmatpush1.bf16.msra.mxu0 0
        %2589 = vmatprep.subr.bf16.mxu0 0
        %2590 = vmatpush1.bf16.msra.mxu0 0
        %2591 = vmatprep.subr.bf16.mxu0 0
        %2592 = vmatpush1.bf16.msra.mxu0 0
        %2593 = vmatprep.mubr.bf16.mxu0 0
        %2594 = vmatmul.mubr.bf16.gmra.mrb[0].mxu0 %v2556
        %v2595 = vpop.f32.mrb[0].mxu0
        %v2596 = vadd.f32 0.0, %v2595
        %v2597 = vpop.f32.mrb[0].mxu0
        %v2598 = vpop.f32.mrb[0].mxu0
        %v2599 = vpop.f32.mrb[0].mxu0
        %2600 = vdwg.mxu0
        %v2602 = vsel %vm1187, %v2552, 0
        %v2605 = vsel %vm1191, %v2548, 0
        %2607 = vmatprep.subr.bf16.mxu0 0
        %2608 = vmatpush1.bf16.msra.mxu0 %v2605
        %2609 = vmatprep.subr.bf16.mxu0 0
        %2610 = vmatpush1.bf16.msra.mxu0 0
        %2611 = vmatprep.subr.bf16.mxu0 0
        %2612 = vmatpush1.bf16.msra.mxu0 0
        %2613 = vmatprep.subr.bf16.mxu0 0
        %2614 = vmatpush1.bf16.msra.mxu0 0
        %2615 = vmatprep.subr.bf16.mxu0 0
        %2616 = vmatpush1.bf16.msra.mxu0 0
        %2617 = vmatprep.subr.bf16.mxu0 0
        %2618 = vmatpush1.bf16.msra.mxu0 0
        %2619 = vmatprep.subr.bf16.mxu0 0
        %2620 = vmatpush1.bf16.msra.mxu0 0
        %2621 = vmatprep.subr.bf16.mxu0 0
        %2622 = vmatpush1.bf16.msra.mxu0 0
        %2623 = vmatprep.subr.bf16.mxu0 0
        %2624 = vmatpush1.bf16.msra.mxu0 0
        %2625 = vmatprep.subr.bf16.mxu0 0
        %2626 = vmatpush1.bf16.msra.mxu0 0
        %2627 = vmatprep.subr.bf16.mxu0 0
        %2628 = vmatpush1.bf16.msra.mxu0 0
        %2629 = vmatprep.subr.bf16.mxu0 0
        %2630 = vmatpush1.bf16.msra.mxu0 0
        %2631 = vmatprep.subr.bf16.mxu0 0
        %2632 = vmatpush1.bf16.msra.mxu0 0
        %2633 = vmatprep.subr.bf16.mxu0 0
        %2634 = vmatpush1.bf16.msra.mxu0 0
        %2635 = vmatprep.subr.bf16.mxu0 0
        %2636 = vmatpush1.bf16.msra.mxu0 0
        %2637 = vmatprep.subr.bf16.mxu0 0
        %2638 = vmatpush1.bf16.msra.mxu0 0
        %2639 = vmatprep.mubr.bf16.mxu0 0
        %2640 = vmatmul.mubr.bf16.gmra.mrb[0].mxu0 %v2602
        %v2641 = vpop.f32.mrb[0].mxu0
        %v2642 = vadd.f32 0.0, %v2641
        %v2643 = vpop.f32.mrb[0].mxu0
        %v2644 = vpop.f32.mrb[0].mxu0
        %v2645 = vpop.f32.mrb[0].mxu0
        %2646 = vdwg.mxu0
        %v2648 = vsel %vm1187, %v2553, 0
        %v2651 = vsel %vm1191, %v2549, 0
        %2653 = vmatprep.subr.bf16.mxu0 0
        %2654 = vmatpush1.bf16.msra.mxu0 %v2651
        %2655 = vmatprep.subr.bf16.mxu0 0
        %2656 = vmatpush1.bf16.msra.mxu0 0
        %2657 = vmatprep.subr.bf16.mxu0 0
        %2658 = vmatpush1.bf16.msra.mxu0 0
        %2659 = vmatprep.subr.bf16.mxu0 0
        %2660 = vmatpush1.bf16.msra.mxu0 0
        %2661 = vmatprep.subr.bf16.mxu0 0
        %2662 = vmatpush1.bf16.msra.mxu0 0
        %2663 = vmatprep.subr.bf16.mxu0 0
        %2664 = vmatpush1.bf16.msra.mxu0 0
        %2665 = vmatprep.subr.bf16.mxu0 0
        %2666 = vmatpush1.bf16.msra.mxu0 0
        %2667 = vmatprep.subr.bf16.mxu0 0
        %2668 = vmatpush1.bf16.msra.mxu0 0
        %2669 = vmatprep.subr.bf16.mxu0 0
        %2670 = vmatpush1.bf16.msra.mxu0 0
        %2671 = vmatprep.subr.bf16.mxu0 0
        %2672 = vmatpush1.bf16.msra.mxu0 0
        %2673 = vmatprep.subr.bf16.mxu0 0
        %2674 = vmatpush1.bf16.msra.mxu0 0
        %2675 = vmatprep.subr.bf16.mxu0 0
        %2676 = vmatpush1.bf16.msra.mxu0 0
        %2677 = vmatprep.subr.bf16.mxu0 0
        %2678 = vmatpush1.bf16.msra.mxu0 0
        %2679 = vmatprep.subr.bf16.mxu0 0
        %2680 = vmatpush1.bf16.msra.mxu0 0
        %2681 = vmatprep.subr.bf16.mxu0 0
        %2682 = vmatpush1.bf16.msra.mxu0 0
        %2683 = vmatprep.subr.bf16.mxu0 0
        %2684 = vmatpush1.bf16.msra.mxu0 0
        %2685 = vmatprep.mubr.bf16.mxu0 0
        %2686 = vmatmul.mubr.bf16.gmra.mrb[0].mxu0 %v2648
        %v2687 = vpop.f32.mrb[0].mxu0
        %v2688 = vadd.f32 0.0, %v2687
        %v2689 = vpop.f32.mrb[0].mxu0
        %v2690 = vpop.f32.mrb[0].mxu0
        %v2691 = vpop.f32.mrb[0].mxu0
        %2692 = vdwg.mxu0
        %v2694 = vsel %vm1187, %v2554, 0
        %v2697 = vsel %vm1191, %v2550, 0
        %2699 = vmatprep.subr.bf16.mxu0 0
        %2700 = vmatpush1.bf16.msra.mxu0 %v2697
        %2701 = vmatprep.subr.bf16.mxu0 0
        %2702 = vmatpush1.bf16.msra.mxu0 0
        %2703 = vmatprep.subr.bf16.mxu0 0
        %2704 = vmatpush1.bf16.msra.mxu0 0
        %2705 = vmatprep.subr.bf16.mxu0 0
        %2706 = vmatpush1.bf16.msra.mxu0 0
        %2707 = vmatprep.subr.bf16.mxu0 0
        %2708 = vmatpush1.bf16.msra.mxu0 0
        %2709 = vmatprep.subr.bf16.mxu0 0
        %2710 = vmatpush1.bf16.msra.mxu0 0
        %2711 = vmatprep.subr.bf16.mxu0 0
        %2712 = vmatpush1.bf16.msra.mxu0 0
        %2713 = vmatprep.subr.bf16.mxu0 0
        %2714 = vmatpush1.bf16.msra.mxu0 0
        %2715 = vmatprep.subr.bf16.mxu0 0
        %2716 = vmatpush1.bf16.msra.mxu0 0
        %2717 = vmatprep.subr.bf16.mxu0 0
        %2718 = vmatpush1.bf16.msra.mxu0 0
        %2719 = vmatprep.subr.bf16.mxu0 0
        %2720 = vmatpush1.bf16.msra.mxu0 0
        %2721 = vmatprep.subr.bf16.mxu0 0
        %2722 = vmatpush1.bf16.msra.mxu0 0
        %2723 = vmatprep.subr.bf16.mxu0 0
        %2724 = vmatpush1.bf16.msra.mxu0 0
        %2725 = vmatprep.subr.bf16.mxu0 0
        %2726 = vmatpush1.bf16.msra.mxu0 0
        %2727 = vmatprep.subr.bf16.mxu0 0
        %2728 = vmatpush1.bf16.msra.mxu0 0
        %2729 = vmatprep.subr.bf16.mxu0 0
        %2730 = vmatpush1.bf16.msra.mxu0 0
        %2731 = vmatprep.mubr.bf16.mxu0 0
        %2732 = vmatmul.mubr.bf16.gmra.mrb[0].mxu0 %v2694
        %v2733 = vpop.f32.mrb[0].mxu0
        %v2734 = vadd.f32 0.0, %v2733
        %v2735 = vpop.f32.mrb[0].mxu0
        %v2736 = vpop.f32.mrb[0].mxu0
        %v2737 = vpop.f32.mrb[0].mxu0
        %2738 = vdwg.mxu0
        %v2740 = vsel %vm1187, %v2191, 0
        %v2743 = vsel %vm1191, %v2187, 0
        %2745 = vmatprep.subr.bf16.mxu0 0
        %2746 = vmatpush1.bf16.msra.mxu0 %v2743
        %2747 = vmatprep.subr.bf16.mxu0 0
        %2748 = vmatpush1.bf16.msra.mxu0 0
        %2749 = vmatprep.subr.bf16.mxu0 0
        %2750 = vmatpush1.bf16.msra.mxu0 0
        %2751 = vmatprep.subr.bf16.mxu0 0
        %2752 = vmatpush1.bf16.msra.mxu0 0
        %2753 = vmatprep.subr.bf16.mxu0 0
        %2754 = vmatpush1.bf16.msra.mxu0 0
        %2755 = vmatprep.subr.bf16.mxu0 0
        %2756 = vmatpush1.bf16.msra.mxu0 0
        %2757 = vmatprep.subr.bf16.mxu0 0
        %2758 = vmatpush1.bf16.msra.mxu0 0
        %2759 = vmatprep.subr.bf16.mxu0 0
        %2760 = vmatpush1.bf16.msra.mxu0 0
        %2761 = vmatprep.subr.bf16.mxu0 0
        %2762 = vmatpush1.bf16.msra.mxu0 0
        %2763 = vmatprep.subr.bf16.mxu0 0
        %2764 = vmatpush1.bf16.msra.mxu0 0
        %2765 = vmatprep.subr.bf16.mxu0 0
        %2766 = vmatpush1.bf16.msra.mxu0 0
        %2767 = vmatprep.subr.bf16.mxu0 0
        %2768 = vmatpush1.bf16.msra.mxu0 0
        %2769 = vmatprep.subr.bf16.mxu0 0
        %2770 = vmatpush1.bf16.msra.mxu0 0
        %2771 = vmatprep.subr.bf16.mxu0 0
        %2772 = vmatpush1.bf16.msra.mxu0 0
        %2773 = vmatprep.subr.bf16.mxu0 0
        %2774 = vmatpush1.bf16.msra.mxu0 0
        %2775 = vmatprep.subr.bf16.mxu0 0
        %2776 = vmatpush1.bf16.msra.mxu0 0
        %2777 = vmatprep.mubr.bf16.mxu0 0
        %2778 = vmatmul.mubr.bf16.gmra.mrb[0].mxu0 %v2740
        %v2779 = vpop.f32.mrb[0].mxu0
        %v2780 = vadd.f32 %v2596, %v2779
        %v2781 = vpop.f32.mrb[0].mxu0
        %v2782 = vpop.f32.mrb[0].mxu0
        %v2783 = vpop.f32.mrb[0].mxu0
        %2784 = vdwg.mxu0
        %v2786 = vsel %vm1187, %v2192, 0
        %v2789 = vsel %vm1191, %v2188, 0
        %2791 = vmatprep.subr.bf16.mxu0 0
        %2792 = vmatpush1.bf16.msra.mxu0 %v2789
        %2793 = vmatprep.subr.bf16.mxu0 0
        %2794 = vmatpush1.bf16.msra.mxu0 0
        %2795 = vmatprep.subr.bf16.mxu0 0
        %2796 = vmatpush1.bf16.msra.mxu0 0
        %2797 = vmatprep.subr.bf16.mxu0 0
        %2798 = vmatpush1.bf16.msra.mxu0 0
        %2799 = vmatprep.subr.bf16.mxu0 0
        %2800 = vmatpush1.bf16.msra.mxu0 0
        %2801 = vmatprep.subr.bf16.mxu0 0
        %2802 = vmatpush1.bf16.msra.mxu0 0
        %2803 = vmatprep.subr.bf16.mxu0 0
        %2804 = vmatpush1.bf16.msra.mxu0 0
        %2805 = vmatprep.subr.bf16.mxu0 0
        %2806 = vmatpush1.bf16.msra.mxu0 0
        %2807 = vmatprep.subr.bf16.mxu0 0
        %2808 = vmatpush1.bf16.msra.mxu0 0
        %2809 = vmatprep.subr.bf16.mxu0 0
        %2810 = vmatpush1.bf16.msra.mxu0 0
        %2811 = vmatprep.subr.bf16.mxu0 0
        %2812 = vmatpush1.bf16.msra.mxu0 0
        %2813 = vmatprep.subr.bf16.mxu0 0
        %2814 = vmatpush1.bf16.msra.mxu0 0
        %2815 = vmatprep.subr.bf16.mxu0 0
        %2816 = vmatpush1.bf16.msra.mxu0 0
        %2817 = vmatprep.subr.bf16.mxu0 0
        %2818 = vmatpush1.bf16.msra.mxu0 0
        %2819 = vmatprep.subr.bf16.mxu0 0
        %2820 = vmatpush1.bf16.msra.mxu0 0
        %2821 = vmatprep.subr.bf16.mxu0 0
        %2822 = vmatpush1.bf16.msra.mxu0 0
        %2823 = vmatprep.mubr.bf16.mxu0 0
        %2824 = vmatmul.mubr.bf16.gmra.mrb[0].mxu0 %v2786
        %v2825 = vpop.f32.mrb[0].mxu0
        %v2826 = vadd.f32 %v2642, %v2825
        %v2827 = vpop.f32.mrb[0].mxu0
        %v2828 = vpop.f32.mrb[0].mxu0
        %v2829 = vpop.f32.mrb[0].mxu0
        %2830 = vdwg.mxu0
        %v2832 = vsel %vm1187, %v2193, 0
        %v2835 = vsel %vm1191, %v2189, 0
        %2837 = vmatprep.subr.bf16.mxu0 0
        %2838 = vmatpush1.bf16.msra.mxu0 %v2835
        %2839 = vmatprep.subr.bf16.mxu0 0
        %2840 = vmatpush1.bf16.msra.mxu0 0
        %2841 = vmatprep.subr.bf16.mxu0 0
        %2842 = vmatpush1.bf16.msra.mxu0 0
        %2843 = vmatprep.subr.bf16.mxu0 0
        %2844 = vmatpush1.bf16.msra.mxu0 0
        %2845 = vmatprep.subr.bf16.mxu0 0
        %2846 = vmatpush1.bf16.msra.mxu0 0
        %2847 = vmatprep.subr.bf16.mxu0 0
        %2848 = vmatpush1.bf16.msra.mxu0 0
        %2849 = vmatprep.subr.bf16.mxu0 0
        %2850 = vmatpush1.bf16.msra.mxu0 0
        %2851 = vmatprep.subr.bf16.mxu0 0
        %2852 = vmatpush1.bf16.msra.mxu0 0
        %2853 = vmatprep.subr.bf16.mxu0 0
        %2854 = vmatpush1.bf16.msra.mxu0 0
        %2855 = vmatprep.subr.bf16.mxu0 0
        %2856 = vmatpush1.bf16.msra.mxu0 0
        %2857 = vmatprep.subr.bf16.mxu0 0
        %2858 = vmatpush1.bf16.msra.mxu0 0
        %2859 = vmatprep.subr.bf16.mxu0 0
        %2860 = vmatpush1.bf16.msra.mxu0 0
        %2861 = vmatprep.subr.bf16.mxu0 0
        %2862 = vmatpush1.bf16.msra.mxu0 0
        %2863 = vmatprep.subr.bf16.mxu0 0
        %2864 = vmatpush1.bf16.msra.mxu0 0
        %2865 = vmatprep.subr.bf16.mxu0 0
        %2866 = vmatpush1.bf16.msra.mxu0 0
        %2867 = vmatprep.subr.bf16.mxu0 0
        %2868 = vmatpush1.bf16.msra.mxu0 0
        %2869 = vmatprep.mubr.bf16.mxu0 0
        %2870 = vmatmul.mubr.bf16.gmra.mrb[0].mxu0 %v2832
        %v2871 = vpop.f32.mrb[0].mxu0
        %v2872 = vadd.f32 %v2688, %v2871
        %v2873 = vpop.f32.mrb[0].mxu0
        %v2874 = vpop.f32.mrb[0].mxu0
        %v2875 = vpop.f32.mrb[0].mxu0
        %2876 = vdwg.mxu0
        %v2878 = vsel %vm1187, %v2194, 0
        %v2881 = vsel %vm1191, %v2190, 0
        %2883 = vmatprep.subr.bf16.mxu0 0
        %2884 = vmatpush1.bf16.msra.mxu0 %v2881
        %2885 = vmatprep.subr.bf16.mxu0 0
        %2886 = vmatpush1.bf16.msra.mxu0 0
        %2887 = vmatprep.subr.bf16.mxu0 0
        %2888 = vmatpush1.bf16.msra.mxu0 0
        %2889 = vmatprep.subr.bf16.mxu0 0
        %2890 = vmatpush1.bf16.msra.mxu0 0
        %2891 = vmatprep.subr.bf16.mxu0 0
        %2892 = vmatpush1.bf16.msra.mxu0 0
        %2893 = vmatprep.subr.bf16.mxu0 0
        %2894 = vmatpush1.bf16.msra.mxu0 0
        %2895 = vmatprep.subr.bf16.mxu0 0
        %2896 = vmatpush1.bf16.msra.mxu0 0
        %2897 = vmatprep.subr.bf16.mxu0 0
        %2898 = vmatpush1.bf16.msra.mxu0 0
        %2899 = vmatprep.subr.bf16.mxu0 0
        %2900 = vmatpush1.bf16.msra.mxu0 0
        %2901 = vmatprep.subr.bf16.mxu0 0
        %2902 = vmatpush1.bf16.msra.mxu0 0
        %2903 = vmatprep.subr.bf16.mxu0 0
        %2904 = vmatpush1.bf16.msra.mxu0 0
        %2905 = vmatprep.subr.bf16.mxu0 0
        %2906 = vmatpush1.bf16.msra.mxu0 0
        %2907 = vmatprep.subr.bf16.mxu0 0
        %2908 = vmatpush1.bf16.msra.mxu0 0
        %2909 = vmatprep.subr.bf16.mxu0 0
        %2910 = vmatpush1.bf16.msra.mxu0 0
        %2911 = vmatprep.subr.bf16.mxu0 0
        %2912 = vmatpush1.bf16.msra.mxu0 0
        %2913 = vmatprep.subr.bf16.mxu0 0
        %2914 = vmatpush1.bf16.msra.mxu0 0
        %2915 = vmatprep.mubr.bf16.mxu0 0
        %2916 = vmatmul.mubr.bf16.gmra.mrb[0].mxu0 %v2878
        %v2917 = vpop.f32.mrb[0].mxu0
        %v2918 = vadd.f32 %v2734, %v2917
        %v2919 = vpop.f32.mrb[0].mxu0
        %v2920 = vpop.f32.mrb[0].mxu0
        %v2921 = vpop.f32.mrb[0].mxu0
        %2922 = vdwg.mxu0
        %v2927 = vcombine.low %v2780, %v2826
        %v2928 = vcombine.low %v2872, %v2918
        %v2931 = vadd.f32 %v1775, %v2927
        %v2932 = vadd.f32 %v1776, %v2928
        %v2934 = vlaneseq
        %v2935 = vshrl.u32 %v2934, 7
        %v2936 = vsub.s32 0, %v2935
        %v2937 = vrot.slane %v1778, %v2936
        %v2939 = vadd.f32 %v2931, %v2937
        %v2940 = vadd.f32 %v2932, %v2937
        %v2941 = vsel %vm470, %v2939, 0.0
        %2942 = vadd.xlane.f32.xlu0 %v2941
        %v2943 = vpop.xlane.xlu0 %2942
        %v2944 = vsel %vm470, %v2940, 0.0
        %2945 = vadd.xlane.f32.xlu0 %v2944
        %v2946 = vpop.xlane.xlu0 %2945
        %v2947 = vmul.f32 %v2943, %v1581
        %v2948 = vmul.f32 %v2946, %v1581
        %v2949 = vsub.f32 %v2939, %v2947
        %v2950 = vsub.f32 %v2940, %v2948
        %v2951 = vmul.f32 %v2949, %v2949
        %v2952 = vmul.f32 %v2950, %v2950
        %v2953 = vsel %vm470, %v2951, 0.0
        %2954 = vadd.xlane.f32.xlu0 %v2953
        %v2955 = vpop.xlane.xlu0 %2954
        %v2956 = vsel %vm470, %v2952, 0.0
        %2957 = vadd.xlane.f32.xlu0 %v2956
        %v2958 = vpop.xlane.xlu0 %2957
        %v2959 = vmul.f32 %v2955, %v1581
        %v2960 = vmul.f32 %v2958, %v1581
        %v2961 = vadd.f32 %v2959, 1e-05
        %v2962 = vadd.f32 %v2960, 1e-05
        %v2963 = vrsqrt.pop %v2961
        %v2964 = vrsqrt.pop %v2962
        %v2965 = vmul.f32 %v2949, %v2963
        %v2966 = vmul.f32 %v2950, %v2964
        %v2968 = vlaneseq
        %v2969 = vshrl.u32 %v2968, 7
        %v2970 = vsub.s32 0, %v2969
        %v2971 = vrot.slane %v1780, %v2970
        %v2973 = vmul.f32 %v2965, %v2971
        %v2974 = vmul.f32 %v2966, %v2971
        %v2976 = vlaneseq
        %v2977 = vshrl.u32 %v2976, 7
        %v2978 = vsub.s32 0, %v2977
        %v2979 = vrot.slane %v1782, %v2978
        %v2981 = vadd.f32 %v2973, %v2979
        %v2982 = vadd.f32 %v2974, %v2979
        %v2983 = vpack.c.bf16 %v2982, %v2981
        %v2985 = vlaneseq
        %v2986 = vshrl.u32 %v2985, 7
        %v2987 = vsub.s32 0, %v2986
        %v2988 = vrot.slane %v1789, %v2987
        %v2994 = vunpack.c.l.b16 %v1784
        %v2995 = vunpack.c.l.b16 %v1785
        %v2996 = vunpack.c.l.b16 %v1786
        %v2997 = vunpack.c.l.b16 %v1787
        %v2998 = vpack.c.b16 %v2995, %v2994
        %v2999 = vpack.c.b16 %v2997, %v2996
        %v3003 = vsel %vm470, %v2983, 0
        %3005 = vmatprep.subr.bf16.mxu0 0
        %3006 = vmatpush1.bf16.msra.mxu0 %v2998
        %3007 = vmatprep.subr.bf16.mxu0 0
        %3008 = vmatpush1.bf16.msra.mxu0 %v2999
        %3009 = vmatprep.subr.bf16.mxu0 0
        %3010 = vmatpush1.bf16.msra.mxu0 0
        %3011 = vmatprep.subr.bf16.mxu0 0
        %3012 = vmatpush1.bf16.msra.mxu0 0
        %3013 = vmatprep.subr.bf16.mxu0 0
        %3014 = vmatpush1.bf16.msra.mxu0 0
        %3015 = vmatprep.subr.bf16.mxu0 0
        %3016 = vmatpush1.bf16.msra.mxu0 0
        %3017 = vmatprep.subr.bf16.mxu0 0
        %3018 = vmatpush1.bf16.msra.mxu0 0
        %3019 = vmatprep.subr.bf16.mxu0 0
        %3020 = vmatpush1.bf16.msra.mxu0 0
        %3021 = vmatprep.subr.bf16.mxu0 0
        %3022 = vmatpush1.bf16.msra.mxu0 0
        %3023 = vmatprep.subr.bf16.mxu0 0
        %3024 = vmatpush1.bf16.msra.mxu0 0
        %3025 = vmatprep.subr.bf16.mxu0 0
        %3026 = vmatpush1.bf16.msra.mxu0 0
        %3027 = vmatprep.subr.bf16.mxu0 0
        %3028 = vmatpush1.bf16.msra.mxu0 0
        %3029 = vmatprep.subr.bf16.mxu0 0
        %3030 = vmatpush1.bf16.msra.mxu0 0
        %3031 = vmatprep.subr.bf16.mxu0 0
        %3032 = vmatpush1.bf16.msra.mxu0 0
        %3033 = vmatprep.subr.bf16.mxu0 0
        %3034 = vmatpush1.bf16.msra.mxu0 0
        %3035 = vmatprep.subr.bf16.mxu0 0
        %3036 = vmatpush1.bf16.msra.mxu0 0
        %3037 = vmatprep.mubr.bf16.mxu0 0
        %3038 = vmatmul.mubr.bf16.gmra.mrb[0].mxu0 %v3003
        %v3039 = vpop.f32.mrb[0].mxu0
        %v3040 = vadd.f32 %v2988, %v3039
        %v3041 = vpop.f32.mrb[0].mxu0
        %v3042 = vpop.f32.mrb[0].mxu0
        %v3043 = vadd.f32 %v2988, %v3042
        %v3044 = vpop.f32.mrb[0].mxu0
        %3045 = vdwg.mxu0
        %v3046 = vmul.f32 %v3040, 0.5
        %v3047 = vmul.f32 %v3043, 0.5
        %v3048 = vmul.f32 %v3040, %v3040
        %v3049 = vmul.f32 %v3043, %v3043
        %v3050 = vmul.f32 %v3048, %v3040
        %v3051 = vmul.f32 %v3049, %v3043
        %v3052 = vmul.f32 %v3050, 0.044715
        %v3053 = vmul.f32 %v3051, 0.044715
        %v3054 = vadd.f32 %v3040, %v3052
        %v3055 = vadd.f32 %v3043, %v3053
        %v3056 = vmul.f32 %v3054, 0.7978846
        %v3057 = vmul.f32 %v3055, 0.7978846
        %v3058 = vtanh.pop %v3056
        %v3059 = vtanh.pop %v3057
        %v3060 = vadd.f32 %v3058, 1.0
        %v3061 = vadd.f32 %v3059, 1.0
        %v3062 = vmul.f32 %v3046, %v3060
        %v3063 = vmul.f32 %v3047, %v3061
        %v3064 = vpack.c.bf16 %v3063, %v3062
        %v3066 = vlaneseq
        %v3067 = vshrl.u32 %v3066, 7
        %v3068 = vsub.s32 0, %v3067
        %v3069 = vrot.slane %v1800, %v3068
        %v3079 = vunpack.c.l.b16 %v1791
        %v3080 = vunpack.c.l.b16 %v1792
        %v3081 = vunpack.c.l.b16 %v1793
        %v3082 = vunpack.c.l.b16 %v1794
        %v3083 = vunpack.c.l.b16 %v1795
        %v3084 = vunpack.c.l.b16 %v1796
        %v3085 = vunpack.c.l.b16 %v1797
        %v3086 = vunpack.c.l.b16 %v1798
        %v3087 = vpack.c.b16 %v3080, %v3079
        %v3088 = vpack.c.b16 %v3082, %v3081
        %v3089 = vpack.c.b16 %v3084, %v3083
        %v3090 = vpack.c.b16 %v3086, %v3085
        %v3096 = vsel %vm1730, %v3064, 0
        %3098 = vmatprep.subr.bf16.mxu0 0
        %3099 = vmatpush1.bf16.msra.mxu0 %v3087
        %3100 = vmatprep.subr.bf16.mxu0 0
        %3101 = vmatpush1.bf16.msra.mxu0 %v3088
        %3102 = vmatprep.subr.bf16.mxu0 0
        %3103 = vmatpush1.bf16.msra.mxu0 %v3089
        %3104 = vmatprep.subr.bf16.mxu0 0
        %3105 = vmatpush1.bf16.msra.mxu0 %v3090
        %3106 = vmatprep.subr.bf16.mxu0 0
        %3107 = vmatpush1.bf16.msra.mxu0 0
        %3108 = vmatprep.subr.bf16.mxu0 0
        %3109 = vmatpush1.bf16.msra.mxu0 0
        %3110 = vmatprep.subr.bf16.mxu0 0
        %3111 = vmatpush1.bf16.msra.mxu0 0
        %3112 = vmatprep.subr.bf16.mxu0 0
        %3113 = vmatpush1.bf16.msra.mxu0 0
        %3114 = vmatprep.subr.bf16.mxu0 0
        %3115 = vmatpush1.bf16.msra.mxu0 0
        %3116 = vmatprep.subr.bf16.mxu0 0
        %3117 = vmatpush1.bf16.msra.mxu0 0
        %3118 = vmatprep.subr.bf16.mxu0 0
        %3119 = vmatpush1.bf16.msra.mxu0 0
        %3120 = vmatprep.subr.bf16.mxu0 0
        %3121 = vmatpush1.bf16.msra.mxu0 0
        %3122 = vmatprep.subr.bf16.mxu0 0
        %3123 = vmatpush1.bf16.msra.mxu0 0
        %3124 = vmatprep.subr.bf16.mxu0 0
        %3125 = vmatpush1.bf16.msra.mxu0 0
        %3126 = vmatprep.subr.bf16.mxu0 0
        %3127 = vmatpush1.bf16.msra.mxu0 0
        %3128 = vmatprep.subr.bf16.mxu0 0
        %3129 = vmatpush1.bf16.msra.mxu0 0
        %3130 = vmatprep.mubr.bf16.mxu0 0
        %3131 = vmatmul.mubr.bf16.gmra.mrb[0].mxu0 %v3096
        %v3132 = vpop.f32.mrb[0].mxu0
        %v3133 = vadd.f32 %v3069, %v3132
        %v3134 = vpop.f32.mrb[0].mxu0
        %v3135 = vpop.f32.mrb[0].mxu0
        %v3136 = vadd.f32 %v3069, %v3135
        %v3137 = vpop.f32.mrb[0].mxu0
        %3138 = vdwg.mxu0
        %v3139 = vadd.f32 %v2939, %v3133
        %v3140 = vadd.f32 %v2940, %v3136
        %3141 = vst.msk [vmem:[%s401] sm:$0xff] %vm470, %v3139
        %3142 = vst.msk [vmem:[%s401 + $0x8] sm:$0xff] %vm470, %v3140
        %s3143 = smul.u32 2, %s23
        %p3144 = scmp.lt.s32.totalorder %s3143, 7
        %s3145 = scalar_select %p3144, %s3143, 7
        %s3146 = smul.addr %s3145, 8
        %s3147 = scalar_lea.vmem %s11, %s3146
        // Predicated region
        $region69: #{tpu_custom_call.1} parent=63 // pred_check
          %p3148 = pneg %p277
        $region70: #{tpu_custom_call.1} parent=63 // pred_check_branch
          %3150 = sbr.rel (%p3148) target = $region72
        $region71: #{tpu_custom_call.1} parent=63 // pred_region
          %s3151 = smul.u32 2, %s23
        $region72: #{tpu_custom_call.1} parent=63 // pred_fallthru
          _
      $region64: #{tpu_custom_call.1} parent=5 // pred_fallthru
        _
      %p3152 = scmp.le.s32.totalorder 2, %s18
      // Predicated region
      $region73: #{tpu_custom_call.1} parent=5 // pred_check
        %p3153 = pneg %p3152
      $region74: #{tpu_custom_call.1} parent=5 // pred_check_branch
        %3155 = sbr.rel (%p3153) target = $region76
      $region75: #{tpu_custom_call.1} parent=5 // pred_region
        %s3156 = ssub.s32 %s18, 2
        // Predicated region
        $region77: #{tpu_custom_call.1} parent=75 // pred_check
          %p3157 = pneg %p283
        $region78: #{tpu_custom_call.1} parent=75 // pred_check_branch
          %3159 = sbr.rel (%p3157) target = $region80
        $region79: #{tpu_custom_call.1} parent=75 // pred_region
          %s3160 = smul.u32 2, %s24
          %p3161 = scmp.lt.s32.totalorder %s3160, 7
          %s3162 = scalar_select %p3161, %s3160, 7
          %s3163 = smul.addr %s3162, 8
          %s3164 = scalar_lea.vmem %s11, %s3163
        $region80: #{tpu_custom_call.1} parent=75 // pred_fallthru
          _
      $region76: #{tpu_custom_call.1} parent=5 // pred_fallthru
        _
    $region6: #{tpu_custom_call.1} parent=1 // loop_footer
      %s22 = sadd.s32 1, %s18
    $region7: #{tpu_custom_call.1} parent=1 // loop_footer_branch
      %17 = sbr.rel target = $region3
    $region8: #{tpu_custom_call.1} parent=1 // loop_exit
      _
    %3165 = vsyncpa [#allocation3], 1
    %s3166 = scalar_lea.sflag [#allocation3], 1
    %3167 = vsyncpa %s3166, 1

</llo_original>
